<compile_context>
chip_gen: v7x
topology: tpu7x:2x2x1
jax: 0.10.0
libtpu: 0.0.40
codegen_flags: <defaults>
</compile_context>

<pallas_src>
import math
from functools import partial

import jax
import jax.numpy as jnp
from jax.experimental import pallas as pl
from jax.experimental.pallas import tpu as pltpu

# ---- hyperparameters consistent with the module constructor -----------------------
SOURCE_SIZE = 20          # source alphabet size (incl. start/stop/pad)
D_MODEL     = 32
D_OUT       = 16
D_FF        = 64
N_HEADS     = 4
MAX_SRC_LEN = 8
PAD_TOKEN   = 0
D_HEAD      = D_MODEL // N_HEADS
NEG_INF     = -1e9

VOCAB_PAD   = 32                        # one-hot width (>= SOURCE_SIZE)
D_OUT_PAD   = 128                       # lane-dense output width (sliced to D_OUT)
HEAD_W      = 2 * D_HEAD + D_MODEL      # per-head fused [Q | K | V@Wo] slab = 48 lanes
QKV_W       = N_HEADS * HEAD_W          # 192 lanes
DEFAULT_MAX_TB = 256                    # default batch-tile cap (tunable per call)


# ----------------------------- Pallas kernel ---------------------------------------
def _mhanet_kernel(tokc_ref, kbias_ref, wqkv_ref, rowb_ref, bo_ref,
                   w1_ref, b1_ref, w2_ref, b2_ref, out_ref, *, tb):
    """One batch tile: fused embed+PE+QKV, per-head attention, masked pool, FFN."""
    TB, L, D, DH = tb, MAX_SRC_LEN, D_MODEL, D_HEAD
    R = TB * L

    # ---- fused embedding gather + QKV / (V·Wo) projection (one MXU matmul) --------
    tokc = tokc_ref[...]                                            # (R, 1) int32
    col = jax.lax.broadcasted_iota(jnp.int32, (R, VOCAB_PAD), 1)    # lane iota
    onehot = jnp.where(col == tokc, 1.0, 0.0).astype(jnp.bfloat16)  # (R, VOCAB_PAD)
    qkv = jnp.dot(onehot, wqkv_ref[...],
                  preferred_element_type=jnp.float32)               # (R, QKV_W) f32
    # per-position row bias = PE @ W_fused + b_fused (precomputed in wrapper)
    qkv = qkv.reshape(TB, L, QKV_W) + rowb_ref[...]                 # (TB, L, QKV_W)
    qkvb = qkv.astype(jnp.bfloat16)

    # ---- key-padding bias, hoisted once (not re-broadcast inside the head loop) ---
    kbias = jnp.broadcast_to(kbias_ref[...][:, None, :], (TB, L, L))  # f32

    # ---- per-head attention; Wo folded into V', so heads accumulate directly ------
    attn = jnp.zeros((TB, L, D), jnp.float32)
    for h in range(N_HEADS):                                        # static unroll
        base = h * HEAD_W
        q_h = qkvb[:, :, base:base + DH]                            # (TB, L, DH)
        k_h = qkvb[:, :, base + DH:base + 2 * DH]                   # (TB, L, DH)
        v_h = qkvb[:, :, base + 2 * DH:base + HEAD_W]               # (TB, L, D)
        s = jnp.einsum('bqd,bkd->bqk', q_h, k_h,
                       preferred_element_type=jnp.float32) + kbias  # (TB, L, L)
        s = s - jnp.max(s, axis=-1, keepdims=True)                  # stable softmax
        e = jnp.exp(s)
        p = e * pl.reciprocal(jnp.sum(e, axis=-1, keepdims=True), approx=True)
        attn = attn + jnp.einsum('bqk,bkd->bqd', p.astype(jnp.bfloat16), v_h,
                                 preferred_element_type=jnp.float32)

    # ---- masked mean pool over non-pad positions + output-projection bias ---------
    vmask = jnp.where(tokc != PAD_TOKEN, 1.0, 0.0).reshape(TB, L, 1)
    denom = jnp.maximum(jnp.sum(vmask, axis=1), 1.0)                # (TB, 1)
    pooled = jnp.sum(attn * vmask, axis=1) / denom + bo_ref[...]    # (TB, D) f32

    # ---- feedforward head: Linear -> ReLU -> Linear (128-lane padded output) ------
    h1 = jnp.dot(pooled.astype(jnp.bfloat16), w1_ref[...],
                 preferred_element_type=jnp.float32) + b1_ref[...]
    h1 = jnp.maximum(h1, 0.0)
    out_ref[...] = jnp.dot(h1.astype(jnp.bfloat16), w2_ref[...],
                           preferred_element_type=jnp.float32) + b2_ref[...]


# ------------------------------- wrapper --------------------------------------------
def _sinusoidal_pe(seq_len: int, d_model: int) -> jnp.ndarray:
    pos = jnp.arange(seq_len, dtype=jnp.float32)[:, None]
    div = jnp.exp(jnp.arange(0, d_model, 2, dtype=jnp.float32)
                  * (-math.log(10000.0) / d_model))
    pe = jnp.zeros((seq_len, d_model), jnp.float32)
    pe = pe.at[:, 0::2].set(jnp.sin(pos * div))
    pe = pe.at[:, 1::2].set(jnp.cos(pos * div))
    return pe


def _round_up(n: int, m: int) -> int:
    return ((n + m - 1) // m) * m


def mhanet_forward(tokens: jnp.ndarray, params: dict,
                   batch_tile: int | None = None) -> jnp.ndarray:
    """tokens: (B, L) int -> (B, D_OUT) float32."""
    B, L = tokens.shape
    assert L == MAX_SRC_LEN

    # batch tile: sublane-aligned; large default cap (per-step footprint is tiny).
    if batch_tile is None:
        TB = min(DEFAULT_MAX_TB, _round_up(B, 8))
    else:
        TB = _round_up(min(batch_tile, _round_up(B, 8)), 8)
    B_pad = _round_up(B, TB)
    tok_p = tokens.astype(jnp.int32)
    if B_pad != B:
        tok_p = jnp.pad(tok_p, ((0, B_pad - B), (0, 0)), constant_values=PAD_TOKEN)

    # ---- fold embed table, PE, Q-scale and Wo into the fused projection (f32 host) --
    pe = _sinusoidal_pe(L, D_MODEL)
    scale = 1.0 / math.sqrt(D_HEAD)
    wcols, bcols = [], []
    for h in range(N_HEADS):                      # head-major [Q_h | K_h | V_h·Wo_h]
        sl = slice(h * D_HEAD, (h + 1) * D_HEAD)
        wcols += [params["wq"][:, sl] * scale,
                  params["wk"][:, sl],
                  params["wv"][:, sl] @ params["wo"][sl, :]]
        bcols += [params["bq"][:, sl] * scale,
                  params["bk"][:, sl],
                  params["bv"][:, sl] @ params["wo"][sl, :]]
    w_fused = jnp.concatenate(wcols, axis=1)                         # (D, QKV_W)
    b_fused = jnp.concatenate(bcols, axis=1)                         # (1, QKV_W)

    embed_pad = jnp.zeros((VOCAB_PAD, D_MODEL), jnp.float32)
    embed_pad = embed_pad.at[:SOURCE_SIZE].set(params["embed"])
    wqkv_eff = (embed_pad @ w_fused).astype(jnp.bfloat16)            # (VOCAB_PAD, QKV_W)
    rowbias = (pe @ w_fused + b_fused).astype(jnp.float32)           # (L, QKV_W)

    w1b = params["w1"].astype(jnp.bfloat16)
    w2p = jnp.zeros((D_FF, D_OUT_PAD), jnp.float32).at[:, :D_OUT].set(params["w2"])
    w2p = w2p.astype(jnp.bfloat16)
    b2p = jnp.zeros((1, D_OUT_PAD), jnp.float32).at[:, :D_OUT].set(params["b2"])

    # per-token inputs: column-layout tokens (sublane axis) + lane-layout key-pad bias
    tok_col = tok_p.reshape(B_pad * L, 1)
    kbias = jnp.where(tok_p == PAD_TOKEN, NEG_INF, 0.0).astype(jnp.float32)  # (B_pad, L)

    kernel = partial(_mhanet_kernel, tb=TB)
    out = pl.pallas_call(
        kernel,
        out_shape=jax.ShapeDtypeStruct((B_pad, D_OUT_PAD), jnp.float32),
        grid=(B_pad // TB,),
        in_specs=[
            pl.BlockSpec((TB * L, 1), lambda b: (b, 0)),     # tokens (col layout)
            pl.BlockSpec((TB, L), lambda b: (b, 0)),         # key-pad additive bias
            pl.BlockSpec(wqkv_eff.shape, lambda b: (0, 0)),  # fused embed+QKV weight
            pl.BlockSpec(rowbias.shape, lambda b: (0, 0)),   # PE row-bias
            pl.BlockSpec(params["bo"].shape, lambda b: (0, 0)),
            pl.BlockSpec(w1b.shape, lambda b: (0, 0)),
            pl.BlockSpec(params["b1"].shape, lambda b: (0, 0)),
            pl.BlockSpec(w2p.shape, lambda b: (0, 0)),
            pl.BlockSpec(b2p.shape, lambda b: (0, 0)),
        ],
        out_specs=pl.BlockSpec((TB, D_OUT_PAD), lambda b: (b, 0)),
        compiler_params=pltpu.CompilerParams(
            dimension_semantics=("parallel",),
            vmem_limit_bytes=32 * 1024 * 1024),
    )(tok_col, kbias, wqkv_eff, rowbias, params["bo"], w1b, params["b1"], w2p, b2p)
    return out[:B, :D_OUT]


# --------------------------- plain-JAX reference -------------------------------------
def mhanet_forward_ref(tokens: jnp.ndarray, params: dict) -> jnp.ndarray:
    B, L = tokens.shape
    emb = params["embed"][tokens]
    x = emb + _sinusoidal_pe(L, D_MODEL)[None]
    bias = jnp.where(tokens == PAD_TOKEN, NEG_INF, 0.0)[:, None, :]

    q = x @ params["wq"] + params["bq"]
    k = x @ params["wk"] + params["bk"]
    v = x @ params["wv"] + params["bv"]

    def split(t):  # (B, L, D) -> (B, H, L, Dh)
        return t.reshape(B, L, N_HEADS, D_HEAD).transpose(0, 2, 1, 3)

    qh, kh, vh = split(q), split(k), split(v)
    s = jnp.einsum("bhqd,bhkd->bhqk", qh, kh) / math.sqrt(D_HEAD)
    s = s + bias[:, None, :, :]
    p = jax.nn.softmax(s, axis=-1)
    attn = jnp.einsum("bhqk,bhkd->bhqd", p, vh)
    attn = attn.transpose(0, 2, 1, 3).reshape(B, L, D_MODEL)
    attn = attn @ params["wo"] + params["bo"]

    valid = (tokens != PAD_TOKEN).astype(jnp.float32)
    denom = jnp.maximum(valid.sum(-1, keepdims=True), 1.0)
    pooled = jnp.einsum("bl,bld->bd", valid, attn) / denom
    h1 = jnp.maximum(pooled @ params["w1"] + params["b1"], 0.0)
    return h1 @ params["w2"] + params["b2"]


# ---------------------------- parameter init -----------------------------------------
def _xavier(key, shape):
    fan_in, fan_out = shape[-2], shape[-1]
    a = math.sqrt(6.0 / (fan_in + fan_out))
    return jax.random.uniform(key, shape, jnp.float32, -a, a)


def init_params(key) -> dict:
    keys = jax.random.split(key, 8)
    embed = _xavier(keys[0], (SOURCE_SIZE, D_MODEL))
    embed = embed.at[PAD_TOKEN].set(0.0)   # padding_idx row zeroed (nn.Embedding)
    return {
        "embed": embed,
        "wq": _xavier(keys[1], (D_MODEL, D_MODEL)), "bq": jnp.zeros((1, D_MODEL), jnp.float32),
        "wk": _xavier(keys[2], (D_MODEL, D_MODEL)), "bk": jnp.zeros((1, D_MODEL), jnp.float32),
        "wv": _xavier(keys[3], (D_MODEL, D_MODEL)), "bv": jnp.zeros((1, D_MODEL), jnp.float32),
        "wo": _xavier(keys[4], (D_MODEL, D_MODEL)), "bo": jnp.zeros((1, D_MODEL), jnp.float32),
        "w1": _xavier(keys[5], (D_MODEL, D_FF)),    "b1": jnp.zeros((1, D_FF), jnp.float32),
        "w2": _xavier(keys[6], (D_FF, D_OUT)),      "b2": jnp.zeros((1, D_OUT), jnp.float32),
    }


# ------------------------------------ main --------------------------------------------
if __name__ == "__main__":
    key = jax.random.PRNGKey(0)
    pkey, tkey = jax.random.split(key)
    params = init_params(pkey)

    B = 2
    tokens = jax.random.randint(tkey, (B, MAX_SRC_LEN), 1, SOURCE_SIZE, dtype=jnp.int32)
    tokens = tokens.at[1, 5:].set(PAD_TOKEN)   # exercise the key-padding mask

    out = mhanet_forward(tokens, params)
    out = jax.block_until_ready(out)

    ref = mhanet_forward_ref(tokens, params)
    assert out.shape == (B, D_OUT)
    # tolerance covers bf16 MXU feeds (f32 accumulation) + approx EUP reciprocal
    assert jnp.allclose(out, ref, rtol=2e-2, atol=2e-2), (out, ref)

    print("KERNEL_OK")
</pallas_src>

<mosaic_0001>
module attributes {stable_mosaic.version = 11 : i64} {
  func.func @_mhanet_kernel(%arg0: i32, %arg1: memref<64x1xi32, #tpu.memory_space<vmem>>, %arg2: memref<8x8xf32, #tpu.memory_space<vmem>>, %arg3: memref<32x192xbf16, #tpu.memory_space<vmem>>, %arg4: memref<8x192xf32, #tpu.memory_space<vmem>>, %arg5: memref<1x32xf32, #tpu.memory_space<vmem>>, %arg6: memref<32x64xbf16, #tpu.memory_space<vmem>>, %arg7: memref<1x64xf32, #tpu.memory_space<vmem>>, %arg8: memref<64x128xbf16, #tpu.memory_space<vmem>>, %arg9: memref<1x128xf32, #tpu.memory_space<vmem>>, %arg10: memref<8x128xf32, #tpu.memory_space<vmem>>) attributes {dimension_semantics = [#tpu.dimension_semantics<parallel>], iteration_bounds = array<i64: 1>, scalar_prefetch = 0 : i64, scratch_operands = 0 : i64, tpu.core_type = #tpu.core_type<tc>, window_params = [{transform_indices = @transform_0, window_bounds = array<i64: 64, 1>}, {transform_indices = @transform_1, window_bounds = array<i64: 8, 8>}, {pipeline_mode = #tpu.pipeline_mode<synchronous>, transform_indices = @transform_2, window_bounds = array<i64: 32, 192>}, {pipeline_mode = #tpu.pipeline_mode<synchronous>, transform_indices = @transform_3, window_bounds = array<i64: 8, 192>}, {pipeline_mode = #tpu.pipeline_mode<synchronous>, transform_indices = @transform_4, window_bounds = array<i64: 1, 32>}, {pipeline_mode = #tpu.pipeline_mode<synchronous>, transform_indices = @transform_5, window_bounds = array<i64: 32, 64>}, {pipeline_mode = #tpu.pipeline_mode<synchronous>, transform_indices = @transform_6, window_bounds = array<i64: 1, 64>}, {pipeline_mode = #tpu.pipeline_mode<synchronous>, transform_indices = @transform_7, window_bounds = array<i64: 64, 128>}, {pipeline_mode = #tpu.pipeline_mode<synchronous>, transform_indices = @transform_8, window_bounds = array<i64: 1, 128>}, {transform_indices = @transform_9, window_bounds = array<i64: 8, 128>}]} {
    %c0 = arith.constant 0 : index
    %c0_0 = arith.constant 0 : index
    %0 = vector.load %arg1[%c0, %c0_0] : memref<64x1xi32, #tpu.memory_space<vmem>>, vector<64x1xi32>
    %1 = tpu.iota {dimensions = array<i32: 1>} : vector<64x32xi32>
    %2 = vector.broadcast %0 : vector<64x1xi32> to vector<64x32xi32>
    %3 = arith.cmpi eq, %1, %2 : vector<64x32xi32>
    %cst = arith.constant 1.000000e+00 : f32
    %cst_1 = arith.constant 0.000000e+00 : f32
    %4 = vector.broadcast %cst : f32 to vector<64x32xf32>
    %5 = vector.broadcast %cst_1 : f32 to vector<64x32xf32>
    %6 = arith.select %3, %4, %5 : vector<64x32xi1>, vector<64x32xf32>
    %7 = arith.truncf %6 : vector<64x32xf32> to vector<64x32xbf16>
    %c0_2 = arith.constant 0 : index
    %c0_3 = arith.constant 0 : index
    %8 = vector.load %arg3[%c0_2, %c0_3] : memref<32x192xbf16, #tpu.memory_space<vmem>>, vector<32x192xbf16>
    %cst_4 = arith.constant dense<0.000000e+00> : vector<64x192xf32>
    %9 = tpu.matmul %7, %8, %cst_4 {dimension_numbers = #tpu.dot_dimension_numbers<[1], [0], [0], [1], [0, 0, 1, 1], [], []>} : vector<64x32xbf16>, vector<32x192xbf16>, vector<64x192xf32> -> vector<64x192xf32>
    %10 = vector.shape_cast %9 : vector<64x192xf32> to vector<8x8x192xf32>
    %c0_5 = arith.constant 0 : index
    %c0_6 = arith.constant 0 : index
    %11 = vector.load %arg4[%c0_5, %c0_6] : memref<8x192xf32, #tpu.memory_space<vmem>>, vector<8x192xf32>
    %12 = vector.shape_cast %11 : vector<8x192xf32> to vector<1x8x192xf32>
    %13 = vector.broadcast %12 : vector<1x8x192xf32> to vector<8x8x192xf32>
    %14 = arith.addf %10, %13 : vector<8x8x192xf32>
    %15 = arith.truncf %14 : vector<8x8x192xf32> to vector<8x8x192xbf16>
    %c0_7 = arith.constant 0 : index
    %c0_8 = arith.constant 0 : index
    %16 = vector.load %arg2[%c0_7, %c0_8] : memref<8x8xf32, #tpu.memory_space<vmem>>, vector<8x8xf32>
    %17 = vector.shape_cast %16 : vector<8x8xf32> to vector<8x1x8xf32>
    %18 = vector.shape_cast %17 : vector<8x1x8xf32> to vector<8x1x8xf32>
    %19 = vector.broadcast %18 : vector<8x1x8xf32> to vector<8x8x8xf32>
    %cst_9 = arith.constant 0.000000e+00 : f32
    %20 = vector.broadcast %cst_9 : f32 to vector<8x8x32xf32>
    %21 = vector.extract_strided_slice %15 {offsets = [0, 0, 0], sizes = [8, 8, 8], strides = [1, 1, 1]} : vector<8x8x192xbf16> to vector<8x8x8xbf16>
    %22 = vector.extract_strided_slice %15 {offsets = [0, 0, 8], sizes = [8, 8, 8], strides = [1, 1, 1]} : vector<8x8x192xbf16> to vector<8x8x8xbf16>
    %23 = vector.extract_strided_slice %15 {offsets = [0, 0, 16], sizes = [8, 8, 32], strides = [1, 1, 1]} : vector<8x8x192xbf16> to vector<8x8x32xbf16>
    "tpu.trace_start"() <{level = 10 : i32, message = "bqd,bkd->bqk"}> : () -> ()
    %cst_10 = arith.constant dense<0.000000e+00> : vector<8x8x8xf32>
    %24 = tpu.matmul %21, %22, %cst_10 {dimension_numbers = #tpu.dot_dimension_numbers<[2], [2], [1], [1], [0, 0, 0, 1, 1, 1], [0], [0]>} : vector<8x8x8xbf16>, vector<8x8x8xbf16>, vector<8x8x8xf32> -> vector<8x8x8xf32>
    "tpu.trace_stop"() : () -> ()
    %25 = arith.addf %24, %19 : vector<8x8x8xf32>
    %cst_11 = arith.constant dense<0xFF800000> : vector<8x8xf32>
    %26 = vector.multi_reduction <maximumf>, %25, %cst_11 [2] : vector<8x8x8xf32> to vector<8x8xf32>
    %27 = vector.shape_cast %26 : vector<8x8xf32> to vector<8x8x1xf32>
    %28 = vector.broadcast %27 : vector<8x8x1xf32> to vector<8x8x8xf32>
    %29 = arith.subf %25, %28 : vector<8x8x8xf32>
    %30 = math.exp %29 : vector<8x8x8xf32>
    %cst_12 = arith.constant dense<0.000000e+00> : vector<8x8xf32>
    %31 = vector.multi_reduction <add>, %30, %cst_12 [2] : vector<8x8x8xf32> to vector<8x8xf32>
    %32 = vector.shape_cast %31 : vector<8x8xf32> to vector<8x8x1xf32>
    %33 = tpu.reciprocal %32 {approx = true} : vector<8x8x1xf32> -> vector<8x8x1xf32>
    %34 = vector.broadcast %33 : vector<8x8x1xf32> to vector<8x8x8xf32>
    %35 = arith.mulf %30, %34 : vector<8x8x8xf32>
    %36 = arith.truncf %35 : vector<8x8x8xf32> to vector<8x8x8xbf16>
    "tpu.trace_start"() <{level = 10 : i32, message = "bqk,bkd->bqd"}> : () -> ()
    %cst_13 = arith.constant dense<0.000000e+00> : vector<8x8x32xf32>
    %37 = tpu.matmul %36, %23, %cst_13 {dimension_numbers = #tpu.dot_dimension_numbers<[2], [1], [1], [2], [0, 0, 0, 1, 1, 2], [0], [0]>} : vector<8x8x8xbf16>, vector<8x8x32xbf16>, vector<8x8x32xf32> -> vector<8x8x32xf32>
    "tpu.trace_stop"() : () -> ()
    %38 = arith.addf %20, %37 : vector<8x8x32xf32>
    %39 = vector.extract_strided_slice %15 {offsets = [0, 0, 48], sizes = [8, 8, 8], strides = [1, 1, 1]} : vector<8x8x192xbf16> to vector<8x8x8xbf16>
    %40 = vector.extract_strided_slice %15 {offsets = [0, 0, 56], sizes = [8, 8, 8], strides = [1, 1, 1]} : vector<8x8x192xbf16> to vector<8x8x8xbf16>
    %41 = vector.extract_strided_slice %15 {offsets = [0, 0, 64], sizes = [8, 8, 32], strides = [1, 1, 1]} : vector<8x8x192xbf16> to vector<8x8x32xbf16>
    "tpu.trace_start"() <{level = 10 : i32, message = "bqd,bkd->bqk"}> : () -> ()
    %cst_14 = arith.constant dense<0.000000e+00> : vector<8x8x8xf32>
    %42 = tpu.matmul %39, %40, %cst_14 {dimension_numbers = #tpu.dot_dimension_numbers<[2], [2], [1], [1], [0, 0, 0, 1, 1, 1], [0], [0]>} : vector<8x8x8xbf16>, vector<8x8x8xbf16>, vector<8x8x8xf32> -> vector<8x8x8xf32>
    "tpu.trace_stop"() : () -> ()
    %43 = arith.addf %42, %19 : vector<8x8x8xf32>
    %cst_15 = arith.constant dense<0xFF800000> : vector<8x8xf32>
    %44 = vector.multi_reduction <maximumf>, %43, %cst_15 [2] : vector<8x8x8xf32> to vector<8x8xf32>
    %45 = vector.shape_cast %44 : vector<8x8xf32> to vector<8x8x1xf32>
    %46 = vector.broadcast %45 : vector<8x8x1xf32> to vector<8x8x8xf32>
    %47 = arith.subf %43, %46 : vector<8x8x8xf32>
    %48 = math.exp %47 : vector<8x8x8xf32>
    %cst_16 = arith.constant dense<0.000000e+00> : vector<8x8xf32>
    %49 = vector.multi_reduction <add>, %48, %cst_16 [2] : vector<8x8x8xf32> to vector<8x8xf32>
    %50 = vector.shape_cast %49 : vector<8x8xf32> to vector<8x8x1xf32>
    %51 = tpu.reciprocal %50 {approx = true} : vector<8x8x1xf32> -> vector<8x8x1xf32>
    %52 = vector.broadcast %51 : vector<8x8x1xf32> to vector<8x8x8xf32>
    %53 = arith.mulf %48, %52 : vector<8x8x8xf32>
    %54 = arith.truncf %53 : vector<8x8x8xf32> to vector<8x8x8xbf16>
    "tpu.trace_start"() <{level = 10 : i32, message = "bqk,bkd->bqd"}> : () -> ()
    %cst_17 = arith.constant dense<0.000000e+00> : vector<8x8x32xf32>
    %55 = tpu.matmul %54, %41, %cst_17 {dimension_numbers = #tpu.dot_dimension_numbers<[2], [1], [1], [2], [0, 0, 0, 1, 1, 2], [0], [0]>} : vector<8x8x8xbf16>, vector<8x8x32xbf16>, vector<8x8x32xf32> -> vector<8x8x32xf32>
    "tpu.trace_stop"() : () -> ()
    %56 = arith.addf %38, %55 : vector<8x8x32xf32>
    %57 = vector.extract_strided_slice %15 {offsets = [0, 0, 96], sizes = [8, 8, 8], strides = [1, 1, 1]} : vector<8x8x192xbf16> to vector<8x8x8xbf16>
    %58 = vector.extract_strided_slice %15 {offsets = [0, 0, 104], sizes = [8, 8, 8], strides = [1, 1, 1]} : vector<8x8x192xbf16> to vector<8x8x8xbf16>
    %59 = vector.extract_strided_slice %15 {offsets = [0, 0, 112], sizes = [8, 8, 32], strides = [1, 1, 1]} : vector<8x8x192xbf16> to vector<8x8x32xbf16>
    "tpu.trace_start"() <{level = 10 : i32, message = "bqd,bkd->bqk"}> : () -> ()
    %cst_18 = arith.constant dense<0.000000e+00> : vector<8x8x8xf32>
    %60 = tpu.matmul %57, %58, %cst_18 {dimension_numbers = #tpu.dot_dimension_numbers<[2], [2], [1], [1], [0, 0, 0, 1, 1, 1], [0], [0]>} : vector<8x8x8xbf16>, vector<8x8x8xbf16>, vector<8x8x8xf32> -> vector<8x8x8xf32>
    "tpu.trace_stop"() : () -> ()
    %61 = arith.addf %60, %19 : vector<8x8x8xf32>
    %cst_19 = arith.constant dense<0xFF800000> : vector<8x8xf32>
    %62 = vector.multi_reduction <maximumf>, %61, %cst_19 [2] : vector<8x8x8xf32> to vector<8x8xf32>
    %63 = vector.shape_cast %62 : vector<8x8xf32> to vector<8x8x1xf32>
    %64 = vector.broadcast %63 : vector<8x8x1xf32> to vector<8x8x8xf32>
    %65 = arith.subf %61, %64 : vector<8x8x8xf32>
    %66 = math.exp %65 : vector<8x8x8xf32>
    %cst_20 = arith.constant dense<0.000000e+00> : vector<8x8xf32>
    %67 = vector.multi_reduction <add>, %66, %cst_20 [2] : vector<8x8x8xf32> to vector<8x8xf32>
    %68 = vector.shape_cast %67 : vector<8x8xf32> to vector<8x8x1xf32>
    %69 = tpu.reciprocal %68 {approx = true} : vector<8x8x1xf32> -> vector<8x8x1xf32>
    %70 = vector.broadcast %69 : vector<8x8x1xf32> to vector<8x8x8xf32>
    %71 = arith.mulf %66, %70 : vector<8x8x8xf32>
    %72 = arith.truncf %71 : vector<8x8x8xf32> to vector<8x8x8xbf16>
    "tpu.trace_start"() <{level = 10 : i32, message = "bqk,bkd->bqd"}> : () -> ()
    %cst_21 = arith.constant dense<0.000000e+00> : vector<8x8x32xf32>
    %73 = tpu.matmul %72, %59, %cst_21 {dimension_numbers = #tpu.dot_dimension_numbers<[2], [1], [1], [2], [0, 0, 0, 1, 1, 2], [0], [0]>} : vector<8x8x8xbf16>, vector<8x8x32xbf16>, vector<8x8x32xf32> -> vector<8x8x32xf32>
    "tpu.trace_stop"() : () -> ()
    %74 = arith.addf %56, %73 : vector<8x8x32xf32>
    %75 = vector.extract_strided_slice %15 {offsets = [0, 0, 144], sizes = [8, 8, 8], strides = [1, 1, 1]} : vector<8x8x192xbf16> to vector<8x8x8xbf16>
    %76 = vector.extract_strided_slice %15 {offsets = [0, 0, 152], sizes = [8, 8, 8], strides = [1, 1, 1]} : vector<8x8x192xbf16> to vector<8x8x8xbf16>
    %77 = vector.extract_strided_slice %15 {offsets = [0, 0, 160], sizes = [8, 8, 32], strides = [1, 1, 1]} : vector<8x8x192xbf16> to vector<8x8x32xbf16>
    "tpu.trace_start"() <{level = 10 : i32, message = "bqd,bkd->bqk"}> : () -> ()
    %cst_22 = arith.constant dense<0.000000e+00> : vector<8x8x8xf32>
    %78 = tpu.matmul %75, %76, %cst_22 {dimension_numbers = #tpu.dot_dimension_numbers<[2], [2], [1], [1], [0, 0, 0, 1, 1, 1], [0], [0]>} : vector<8x8x8xbf16>, vector<8x8x8xbf16>, vector<8x8x8xf32> -> vector<8x8x8xf32>
    "tpu.trace_stop"() : () -> ()
    %79 = arith.addf %78, %19 : vector<8x8x8xf32>
    %cst_23 = arith.constant dense<0xFF800000> : vector<8x8xf32>
    %80 = vector.multi_reduction <maximumf>, %79, %cst_23 [2] : vector<8x8x8xf32> to vector<8x8xf32>
    %81 = vector.shape_cast %80 : vector<8x8xf32> to vector<8x8x1xf32>
    %82 = vector.broadcast %81 : vector<8x8x1xf32> to vector<8x8x8xf32>
    %83 = arith.subf %79, %82 : vector<8x8x8xf32>
    %84 = math.exp %83 : vector<8x8x8xf32>
    %cst_24 = arith.constant dense<0.000000e+00> : vector<8x8xf32>
    %85 = vector.multi_reduction <add>, %84, %cst_24 [2] : vector<8x8x8xf32> to vector<8x8xf32>
    %86 = vector.shape_cast %85 : vector<8x8xf32> to vector<8x8x1xf32>
    %87 = tpu.reciprocal %86 {approx = true} : vector<8x8x1xf32> -> vector<8x8x1xf32>
    %88 = vector.broadcast %87 : vector<8x8x1xf32> to vector<8x8x8xf32>
    %89 = arith.mulf %84, %88 : vector<8x8x8xf32>
    %90 = arith.truncf %89 : vector<8x8x8xf32> to vector<8x8x8xbf16>
    "tpu.trace_start"() <{level = 10 : i32, message = "bqk,bkd->bqd"}> : () -> ()
    %cst_25 = arith.constant dense<0.000000e+00> : vector<8x8x32xf32>
    %91 = tpu.matmul %90, %77, %cst_25 {dimension_numbers = #tpu.dot_dimension_numbers<[2], [1], [1], [2], [0, 0, 0, 1, 1, 2], [0], [0]>} : vector<8x8x8xbf16>, vector<8x8x32xbf16>, vector<8x8x32xf32> -> vector<8x8x32xf32>
    "tpu.trace_stop"() : () -> ()
    %92 = arith.addf %74, %91 : vector<8x8x32xf32>
    %c0_i32 = arith.constant 0 : i32
    %93 = vector.broadcast %c0_i32 : i32 to vector<64x1xi32>
    %94 = arith.cmpi ne, %0, %93 : vector<64x1xi32>
    %cst_26 = arith.constant 1.000000e+00 : f32
    %cst_27 = arith.constant 0.000000e+00 : f32
    %95 = vector.broadcast %cst_26 : f32 to vector<64x1xf32>
    %96 = vector.broadcast %cst_27 : f32 to vector<64x1xf32>
    %97 = arith.select %94, %95, %96 : vector<64x1xi1>, vector<64x1xf32>
    %98 = vector.shape_cast %97 : vector<64x1xf32> to vector<8x8x1xf32>
    %cst_28 = arith.constant dense<0.000000e+00> : vector<8x1xf32>
    %99 = vector.multi_reduction <add>, %98, %cst_28 [1] : vector<8x8x1xf32> to vector<8x1xf32>
    %cst_29 = arith.constant 1.000000e+00 : f32
    %100 = vector.broadcast %cst_29 : f32 to vector<8x1xf32>
    %101 = arith.maximumf %99, %100 : vector<8x1xf32>
    %102 = vector.broadcast %98 : vector<8x8x1xf32> to vector<8x8x32xf32>
    %103 = arith.mulf %92, %102 : vector<8x8x32xf32>
    %cst_30 = arith.constant dense<0.000000e+00> : vector<8x32xf32>
    %104 = vector.multi_reduction <add>, %103, %cst_30 [1] : vector<8x8x32xf32> to vector<8x32xf32>
    %105 = vector.broadcast %101 : vector<8x1xf32> to vector<8x32xf32>
    %106 = arith.divf %104, %105 : vector<8x32xf32>
    %c0_31 = arith.constant 0 : index
    %c0_32 = arith.constant 0 : index
    %107 = vector.load %arg5[%c0_31, %c0_32] : memref<1x32xf32, #tpu.memory_space<vmem>>, vector<1x32xf32>
    %108 = vector.broadcast %107 : vector<1x32xf32> to vector<8x32xf32>
    %109 = arith.addf %106, %108 : vector<8x32xf32>
    %110 = arith.truncf %109 : vector<8x32xf32> to vector<8x32xbf16>
    %c0_33 = arith.constant 0 : index
    %c0_34 = arith.constant 0 : index
    %111 = vector.load %arg6[%c0_33, %c0_34] : memref<32x64xbf16, #tpu.memory_space<vmem>>, vector<32x64xbf16>
    %cst_35 = arith.constant dense<0.000000e+00> : vector<8x64xf32>
    %112 = tpu.matmul %110, %111, %cst_35 {dimension_numbers = #tpu.dot_dimension_numbers<[1], [0], [0], [1], [0, 0, 1, 1], [], []>} : vector<8x32xbf16>, vector<32x64xbf16>, vector<8x64xf32> -> vector<8x64xf32>
    %c0_36 = arith.constant 0 : index
    %c0_37 = arith.constant 0 : index
    %113 = vector.load %arg7[%c0_36, %c0_37] : memref<1x64xf32, #tpu.memory_space<vmem>>, vector<1x64xf32>
    %114 = vector.broadcast %113 : vector<1x64xf32> to vector<8x64xf32>
    %115 = arith.addf %112, %114 : vector<8x64xf32>
    %cst_38 = arith.constant 0.000000e+00 : f32
    %116 = vector.broadcast %cst_38 : f32 to vector<8x64xf32>
    %117 = arith.maximumf %115, %116 : vector<8x64xf32>
    %118 = arith.truncf %117 : vector<8x64xf32> to vector<8x64xbf16>
    %c0_39 = arith.constant 0 : index
    %c0_40 = arith.constant 0 : index
    %119 = vector.load %arg8[%c0_39, %c0_40] : memref<64x128xbf16, #tpu.memory_space<vmem>>, vector<64x128xbf16>
    %cst_41 = arith.constant dense<0.000000e+00> : vector<8x128xf32>
    %120 = tpu.matmul %118, %119, %cst_41 {dimension_numbers = #tpu.dot_dimension_numbers<[1], [0], [0], [1], [0, 0, 1, 1], [], []>} : vector<8x64xbf16>, vector<64x128xbf16>, vector<8x128xf32> -> vector<8x128xf32>
    %c0_42 = arith.constant 0 : index
    %c0_43 = arith.constant 0 : index
    %121 = vector.load %arg9[%c0_42, %c0_43] : memref<1x128xf32, #tpu.memory_space<vmem>>, vector<1x128xf32>
    %122 = vector.broadcast %121 : vector<1x128xf32> to vector<8x128xf32>
    %123 = arith.addf %120, %122 : vector<8x128xf32>
    %c0_44 = arith.constant 0 : index
    %c0_45 = arith.constant 0 : index
    %124 = vector.load %arg10[%c0_44, %c0_45] : memref<8x128xf32, #tpu.memory_space<vmem>>, vector<8x128xf32>
    tpu.vector_store %arg10[%c0_44, %c0_45], %123 {strides = array<i32>} : memref<8x128xf32, #tpu.memory_space<vmem>>, vector<8x128xf32>,
    return
  }
  func.func @transform_0(%arg0: i32) -> (i32, i32) {
    %c0_i32 = arith.constant 0 : i32
    %c0_i32_0 = arith.constant 0 : i32
    return %arg0, %c0_i32 : i32, i32
  }
  func.func @transform_1(%arg0: i32) -> (i32, i32) {
    %c0_i32 = arith.constant 0 : i32
    %c0_i32_0 = arith.constant 0 : i32
    return %arg0, %c0_i32 : i32, i32
  }
  func.func @transform_2(%arg0: i32) -> (i32, i32) {
    %c0_i32 = arith.constant 0 : i32
    %c0_i32_0 = arith.constant 0 : i32
    %c0_i32_1 = arith.constant 0 : i32
    return %c0_i32, %c0_i32_0 : i32, i32
  }
  func.func @transform_3(%arg0: i32) -> (i32, i32) {
    %c0_i32 = arith.constant 0 : i32
    %c0_i32_0 = arith.constant 0 : i32
    %c0_i32_1 = arith.constant 0 : i32
    return %c0_i32, %c0_i32_0 : i32, i32
  }
  func.func @transform_4(%arg0: i32) -> (i32, i32) {
    %c0_i32 = arith.constant 0 : i32
    %c0_i32_0 = arith.constant 0 : i32
    %c0_i32_1 = arith.constant 0 : i32
    return %c0_i32, %c0_i32_0 : i32, i32
  }
  func.func @transform_5(%arg0: i32) -> (i32, i32) {
    %c0_i32 = arith.constant 0 : i32
    %c0_i32_0 = arith.constant 0 : i32
    %c0_i32_1 = arith.constant 0 : i32
    return %c0_i32, %c0_i32_0 : i32, i32
  }
  func.func @transform_6(%arg0: i32) -> (i32, i32) {
    %c0_i32 = arith.constant 0 : i32
    %c0_i32_0 = arith.constant 0 : i32
    %c0_i32_1 = arith.constant 0 : i32
    return %c0_i32, %c0_i32_0 : i32, i32
  }
  func.func @transform_7(%arg0: i32) -> (i32, i32) {
    %c0_i32 = arith.constant 0 : i32
    %c0_i32_0 = arith.constant 0 : i32
    %c0_i32_1 = arith.constant 0 : i32
    return %c0_i32, %c0_i32_0 : i32, i32
  }
  func.func @transform_8(%arg0: i32) -> (i32, i32) {
    %c0_i32 = arith.constant 0 : i32
    %c0_i32_0 = arith.constant 0 : i32
    %c0_i32_1 = arith.constant 0 : i32
    return %c0_i32, %c0_i32_0 : i32, i32
  }
  func.func @transform_9(%arg0: i32) -> (i32, i32) {
    %c0_i32 = arith.constant 0 : i32
    %c0_i32_0 = arith.constant 0 : i32
    return %arg0, %c0_i32 : i32, i32
  }
}

</mosaic_0001>

<llo_original>
// kernel: tpu_custom_call.1
$region0: #{tpu_custom_call.1}
  #allocation0 [shape = 'u32[]', space=smem, size = 0x4, offset = 0x4, fixed_abs, tag = 'smem constant byte address 0x4 - core index']
  #allocation1 [shape = 'u32[144,128]{1,0:T(1,128)}', space=vmem, size = 0x12000, scoped, tag = 'internal scratch']
  %s0 = inlined_call_operand.vmem [shape: s32[64,1], index: 0, kind: input, shape index: {}]
  %s1 = inlined_call_operand.hbm [shape: f32[8,8], index: 1, kind: input, shape index: {}]
  %s2 = inlined_call_operand.vmem [shape: bf16[32,192], index: 2, kind: input, shape index: {}]
  %s3 = inlined_call_operand.hbm [shape: f32[8,192], index: 3, kind: input, shape index: {}]
  %s4 = inlined_call_operand.hbm [shape: f32[1,32], index: 4, kind: input, shape index: {}]
  %s5 = inlined_call_operand.vmem [shape: bf16[32,64], index: 5, kind: input, shape index: {}]
  %s6 = inlined_call_operand.vmem [shape: f32[1,64], index: 6, kind: input, shape index: {}]
  %s7 = inlined_call_operand.vmem [shape: bf16[64,128], index: 7, kind: input, shape index: {}]
  %s8 = inlined_call_operand.vmem [shape: f32[1,128], index: 8, kind: input, shape index: {}]
  %s9 = inlined_call_operand.hbm [shape: f32[8,128], index: 9, kind: output, shape index: {}]
  %s10 = sld [smem:[#allocation0]]
  $region58: #{tpu_custom_call.1} parent=0
    _
  %s12 = ssub.s32 1, %s10
  %s13 = scalar_select 0, %s12, %s10
  $region1: #{tpu_custom_call.1} parent=0
    #allocation2 [shape = 'u8[4096]{0}', space=vmem, size = 0x1000, scoped, tag = 'input window, operand 1, single buffered']
    #allocation3 [shape = 's32[1]{0}', space=sflag, size = 0x4, scoped, tag = 'scoped memory for tpu_custom_call.1']
    #allocation4 [shape = 's32[1]{0}', space=sflag, size = 0x4, scoped, tag = 'scoped memory for tpu_custom_call.1']
    #allocation5 [shape = 'u8[8192]{0}', space=vmem, size = 0x2000, scoped, tag = 'input window, operand 3, single buffered']
    #allocation6 [shape = 's32[1]{0}', space=sflag, size = 0x4, scoped, tag = 'scoped memory for tpu_custom_call.1']
    #allocation7 [shape = 'u8[512]{0}', space=vmem, size = 0x400, scoped, tag = 'input window, operand 4, single buffered']
    #allocation8 [shape = 'u8[4096]{0}', space=vmem, size = 0x1000, scoped, tag = 'output window, operand 0, single buffered']
    %14 = vsyncpa [#allocation3], 0
    %15 = vsyncpa [#allocation6], 0
    %16 = vsyncpa [#allocation4], 0
    // Predicated region
    $region2: #{tpu_custom_call.1} parent=1 // pred_check
      _
    $region3: #{tpu_custom_call.1} parent=1 // pred_check_branch
      %18 = sbr.rel (0) target = $region5
    $region4: #{tpu_custom_call.1} parent=1 // pred_region
      _
    $region5: #{tpu_custom_call.1} parent=1 // pred_fallthru
      _
    // Predicated region
    $region6: #{tpu_custom_call.1} parent=1 // pred_check
      _
    $region7: #{tpu_custom_call.1} parent=1 // pred_check_branch
      %20 = sbr.rel (0) target = $region9
    $region8: #{tpu_custom_call.1} parent=1 // pred_region
      %s22 = ssub.s32 128, 128
      %23 = vsyncadd [#allocation3], %s22
      %s25 = sshll.u32 [#allocation2], 4
      %s26 = int_to_ptr.vmem [resolvable:$true] %s25
      %28 = dma.hbm_to_vmem [thread:$0]  %s1, 128, %s26, [#allocation3]
    $region9: #{tpu_custom_call.1} parent=1 // pred_fallthru
      _
    // Predicated region
    $region10: #{tpu_custom_call.1} parent=1 // pred_check
      _
    $region11: #{tpu_custom_call.1} parent=1 // pred_check_branch
      %30 = sbr.rel (0) target = $region13
    $region12: #{tpu_custom_call.1} parent=1 // pred_region
      _
    $region13: #{tpu_custom_call.1} parent=1 // pred_fallthru
      _
    // Predicated region
    $region14: #{tpu_custom_call.1} parent=1 // pred_check
      _
    $region15: #{tpu_custom_call.1} parent=1 // pred_check_branch
      %32 = sbr.rel (0) target = $region17
    $region16: #{tpu_custom_call.1} parent=1 // pred_region
      %s34 = ssub.s32 256, 256
      %35 = vsyncadd [#allocation6], %s34
      %s37 = sshll.u32 [#allocation5], 4
      %s38 = int_to_ptr.vmem [resolvable:$true] %s37
      %40 = dma.hbm_to_vmem [thread:$0]  %s3, 256, %s38, [#allocation6]
    $region17: #{tpu_custom_call.1} parent=1 // pred_fallthru
      _
    // Predicated region
    $region18: #{tpu_custom_call.1} parent=1 // pred_check
      _
    $region19: #{tpu_custom_call.1} parent=1 // pred_check_branch
      %42 = sbr.rel (0) target = $region21
    $region20: #{tpu_custom_call.1} parent=1 // pred_region
      %s44 = ssub.s32 16, 16
      %45 = vsyncadd [#allocation6], %s44
      %s47 = sshll.u32 [#allocation7], 4
      %s48 = int_to_ptr.vmem [resolvable:$true] %s47
      %50 = dma.hbm_to_vmem [thread:$0]  %s4, 16, %s48, [#allocation6]
    $region21: #{tpu_custom_call.1} parent=1 // pred_fallthru
      _
    // Predicated region
    $region22: #{tpu_custom_call.1} parent=1 // pred_check
      _
    $region23: #{tpu_custom_call.1} parent=1 // pred_check_branch
      %52 = sbr.rel (0) target = $region25
    $region24: #{tpu_custom_call.1} parent=1 // pred_region
      _
    $region25: #{tpu_custom_call.1} parent=1 // pred_fallthru
      _
    // Predicated region
    $region26: #{tpu_custom_call.1} parent=1 // pred_check
      _
    $region27: #{tpu_custom_call.1} parent=1 // pred_check_branch
      %54 = sbr.rel (0) target = $region29
    $region28: #{tpu_custom_call.1} parent=1 // pred_region
      _
    $region29: #{tpu_custom_call.1} parent=1 // pred_fallthru
      _
    // Predicated region
    $region30: #{tpu_custom_call.1} parent=1 // pred_check
      _
    $region31: #{tpu_custom_call.1} parent=1 // pred_check_branch
      %56 = sbr.rel (0) target = $region33
    $region32: #{tpu_custom_call.1} parent=1 // pred_region
      _
    $region33: #{tpu_custom_call.1} parent=1 // pred_fallthru
      _
    // Predicated region
    $region34: #{tpu_custom_call.1} parent=1 // pred_check
      _
    $region35: #{tpu_custom_call.1} parent=1 // pred_check_branch
      %58 = sbr.rel (0) target = $region37
    $region36: #{tpu_custom_call.1} parent=1 // pred_region
      _
    $region37: #{tpu_custom_call.1} parent=1 // pred_fallthru
      _
    // Predicated region
    $region38: #{tpu_custom_call.1} parent=1 // pred_check
      _
    $region39: #{tpu_custom_call.1} parent=1 // pred_check_branch
      %60 = sbr.rel (0) target = $region41
    $region40: #{tpu_custom_call.1} parent=1 // pred_region
      %61 = dma.done [#allocation3], 128
    $region41: #{tpu_custom_call.1} parent=1 // pred_fallthru
      _
    // Predicated region
    $region42: #{tpu_custom_call.1} parent=1 // pred_check
      _
    $region43: #{tpu_custom_call.1} parent=1 // pred_check_branch
      %63 = sbr.rel (0) target = $region45
    $region44: #{tpu_custom_call.1} parent=1 // pred_region
      %64 = dma.done [#allocation6], 256
    $region45: #{tpu_custom_call.1} parent=1 // pred_fallthru
      _
    // Predicated region
    $region46: #{tpu_custom_call.1} parent=1 // pred_check
      _
    $region47: #{tpu_custom_call.1} parent=1 // pred_check_branch
      %66 = sbr.rel (0) target = $region49
    $region48: #{tpu_custom_call.1} parent=1 // pred_region
      %67 = dma.done [#allocation6], 16
    $region49: #{tpu_custom_call.1} parent=1 // pred_fallthru
      _
    %v69 = vld [vmem:[%s0] sm:$0xff]
    %v70 = vld [vmem:[%s0 + $0x8] sm:$0xff]
    %v71 = vld [vmem:[%s0 + $0x10] sm:$0xff]
    %v72 = vld [vmem:[%s0 + $0x18] sm:$0xff]
    %v73 = vld [vmem:[%s0 + $0x20] sm:$0xff]
    %v74 = vld [vmem:[%s0 + $0x28] sm:$0xff]
    %v75 = vld [vmem:[%s0 + $0x30] sm:$0xff]
    %v76 = vld [vmem:[%s0 + $0x38] sm:$0xff]
    %v77 = vlaneseq
    %v78 = vand.u32 %v77, 127
    %79 = vset.pattern.permute.xlu0 0
    %80 = vperm.xlu0 %79, %v69
    %v81 = vpop.permute.xlu0 %80
    %82 = vset.pattern.permute.xlu0 0
    %83 = vperm.xlu0 %82, %v70
    %v84 = vpop.permute.xlu0 %83
    %85 = vset.pattern.permute.xlu0 0
    %86 = vperm.xlu0 %85, %v71
    %v87 = vpop.permute.xlu0 %86
    %88 = vset.pattern.permute.xlu0 0
    %89 = vperm.xlu0 %88, %v72
    %v90 = vpop.permute.xlu0 %89
    %91 = vset.pattern.permute.xlu0 0
    %92 = vperm.xlu0 %91, %v73
    %v93 = vpop.permute.xlu0 %92
    %94 = vset.pattern.permute.xlu0 0
    %95 = vperm.xlu0 %94, %v74
    %v96 = vpop.permute.xlu0 %95
    %97 = vset.pattern.permute.xlu0 0
    %98 = vperm.xlu0 %97, %v75
    %v99 = vpop.permute.xlu0 %98
    %100 = vset.pattern.permute.xlu0 0
    %101 = vperm.xlu0 %100, %v76
    %v102 = vpop.permute.xlu0 %101
    %vm103 = vcmp.eq.s32.totalorder %v78, %v81
    %vm104 = vcmp.eq.s32.totalorder %v78, %v84
    %vm105 = vcmp.eq.s32.totalorder %v78, %v87
    %vm106 = vcmp.eq.s32.totalorder %v78, %v90
    %vm107 = vcmp.eq.s32.totalorder %v78, %v93
    %vm108 = vcmp.eq.s32.totalorder %v78, %v96
    %vm109 = vcmp.eq.s32.totalorder %v78, %v99
    %vm110 = vcmp.eq.s32.totalorder %v78, %v102
    %v111 = vsel %vm103, 1.0, 0.0
    %v112 = vsel %vm104, 1.0, 0.0
    %v113 = vsel %vm105, 1.0, 0.0
    %v114 = vsel %vm106, 1.0, 0.0
    %v115 = vsel %vm107, 1.0, 0.0
    %v116 = vsel %vm108, 1.0, 0.0
    %v117 = vsel %vm109, 1.0, 0.0
    %v118 = vsel %vm110, 1.0, 0.0
    %v119 = vpack.c.bf16 %v112, %v111
    %v120 = vpack.c.bf16 %v114, %v113
    %v121 = vpack.c.bf16 %v116, %v115
    %v122 = vpack.c.bf16 %v118, %v117
    %v123 = vld [vmem:[%s2] sm:$0xff]
    %v124 = vld [vmem:[%s2 + $0x8] sm:$0xff]
    %v125 = vld [vmem:[%s2 + $0x10] sm:$0xff]
    %v126 = vld [vmem:[%s2 + $0x18] sm:$0xff]
    %v131 = vunpack.c.l.b16 %v123
    %v132 = vunpack.c.h.b16 %v123
    %v133 = vunpack.c.l.b16 %v124
    %v134 = vunpack.c.h.b16 %v124
    %v135 = vunpack.c.l.b16 %v125
    %v136 = vunpack.c.h.b16 %v125
    %v137 = vunpack.c.l.b16 %v126
    %v138 = vunpack.c.h.b16 %v126
    %v139 = vpack.c.b16 %v133, %v131
    %v140 = vpack.c.b16 %v134, %v132
    %v141 = vpack.c.b16 %v137, %v135
    %v142 = vpack.c.b16 %v138, %v136
    %vm147 = vcmask 261120
    %v149 = vsel %vm147, %v119, 0
    %v152 = vsel %vm147, %v120, 0
    %v155 = vsel %vm147, %v121, 0
    %v158 = vsel %vm147, %v122, 0
    %160 = vmatprep.subr.bf16.mxu0 %v140
    %161 = vmatpush1.bf16.msra.mxu0 %v139
    %162 = vmatprep.subr.bf16.mxu0 %v142
    %163 = vmatpush1.bf16.msra.mxu0 %v141
    %164 = vmatprep.subr.bf16.mxu0 0
    %165 = vmatpush1.bf16.msra.mxu0 0
    %166 = vmatprep.subr.bf16.mxu0 0
    %167 = vmatpush1.bf16.msra.mxu0 0
    %168 = vmatprep.subr.bf16.mxu0 0
    %169 = vmatpush1.bf16.msra.mxu0 0
    %170 = vmatprep.subr.bf16.mxu0 0
    %171 = vmatpush1.bf16.msra.mxu0 0
    %172 = vmatprep.subr.bf16.mxu0 0
    %173 = vmatpush1.bf16.msra.mxu0 0
    %174 = vmatprep.subr.bf16.mxu0 0
    %175 = vmatpush1.bf16.msra.mxu0 0
    %176 = vmatprep.subr.bf16.mxu0 0
    %177 = vmatpush1.bf16.msra.mxu0 0
    %178 = vmatprep.subr.bf16.mxu0 0
    %179 = vmatpush1.bf16.msra.mxu0 0
    %180 = vmatprep.subr.bf16.mxu0 0
    %181 = vmatpush1.bf16.msra.mxu0 0
    %182 = vmatprep.subr.bf16.mxu0 0
    %183 = vmatpush1.bf16.msra.mxu0 0
    %184 = vmatprep.subr.bf16.mxu0 0
    %185 = vmatpush1.bf16.msra.mxu0 0
    %186 = vmatprep.subr.bf16.mxu0 0
    %187 = vmatpush1.bf16.msra.mxu0 0
    %188 = vmatprep.subr.bf16.mxu0 0
    %189 = vmatpush1.bf16.msra.mxu0 0
    %190 = vmatprep.subr.bf16.mxu0 0
    %191 = vmatpush1.bf16.msra.mxu0 0
    %192 = vmatprep.mubr.bf16.mxu0 0
    %193 = vmatmul.mubr.bf16.gmra.mrb[0].mxu0 %v149
    %v194 = vpop.f32.mrb[0].mxu0
    %v195 = vadd.f32 0.0, %v194
    %v196 = vpop.f32.mrb[0].mxu0
    %v197 = vadd.f32 0.0, %v196
    %v198 = vpop.f32.mrb[0].mxu0
    %v199 = vadd.f32 0.0, %v198
    %v200 = vpop.f32.mrb[0].mxu0
    %v201 = vadd.f32 0.0, %v200
    %202 = vmatprep.mubr.bf16.mxu0 0
    %203 = vmatmul.mubr.bf16.gmra.mrb[0].mxu0 %v152
    %v204 = vpop.f32.mrb[0].mxu0
    %v205 = vadd.f32 0.0, %v204
    %v206 = vpop.f32.mrb[0].mxu0
    %v207 = vadd.f32 0.0, %v206
    %v208 = vpop.f32.mrb[0].mxu0
    %v209 = vadd.f32 0.0, %v208
    %v210 = vpop.f32.mrb[0].mxu0
    %v211 = vadd.f32 0.0, %v210
    %212 = vmatprep.mubr.bf16.mxu0 0
    %213 = vmatmul.mubr.bf16.gmra.mrb[0].mxu0 %v155
    %v214 = vpop.f32.mrb[0].mxu0
    %v215 = vadd.f32 0.0, %v214
    %v216 = vpop.f32.mrb[0].mxu0
    %v217 = vadd.f32 0.0, %v216
    %v218 = vpop.f32.mrb[0].mxu0
    %v219 = vadd.f32 0.0, %v218
    %v220 = vpop.f32.mrb[0].mxu0
    %v221 = vadd.f32 0.0, %v220
    %222 = vmatprep.mubr.bf16.mxu0 0
    %223 = vmatmul.mubr.bf16.gmra.mrb[0].mxu0 %v158
    %v224 = vpop.f32.mrb[0].mxu0
    %v225 = vadd.f32 0.0, %v224
    %v226 = vpop.f32.mrb[0].mxu0
    %v227 = vadd.f32 0.0, %v226
    %v228 = vpop.f32.mrb[0].mxu0
    %v229 = vadd.f32 0.0, %v228
    %v230 = vpop.f32.mrb[0].mxu0
    %v231 = vadd.f32 0.0, %v230
    %232 = vdwg.mxu0
    %v233 = vld [vmem:[#allocation5] sm:$0xff]
    %v234 = vld [vmem:[#allocation5 + $0x8] sm:$0xff]
    %v235 = vadd.f32 %v195, %v233
    %v236 = vadd.f32 %v197, %v234
    %v237 = vadd.f32 %v199, %v233
    %v238 = vadd.f32 %v201, %v234
    %v239 = vadd.f32 %v205, %v233
    %v240 = vadd.f32 %v207, %v234
    %v241 = vadd.f32 %v209, %v233
    %v242 = vadd.f32 %v211, %v234
    %v243 = vadd.f32 %v215, %v233
    %v244 = vadd.f32 %v217, %v234
    %v245 = vadd.f32 %v219, %v233
    %v246 = vadd.f32 %v221, %v234
    %v247 = vadd.f32 %v225, %v233
    %v248 = vadd.f32 %v227, %v234
    %v249 = vadd.f32 %v229, %v233
    %v250 = vadd.f32 %v231, %v234
    %v251 = vpack.c.bf16 %v235, %v235
    %v252 = vpack.c.bf16 %v236, %v236
    %v253 = vpack.c.bf16 %v237, %v237
    %v254 = vpack.c.bf16 %v238, %v238
    %v255 = vpack.c.bf16 %v239, %v239
    %v256 = vpack.c.bf16 %v240, %v240
    %v257 = vpack.c.bf16 %v241, %v241
    %v258 = vpack.c.bf16 %v242, %v242
    %v259 = vpack.c.bf16 %v243, %v243
    %v260 = vpack.c.bf16 %v244, %v244
    %v261 = vpack.c.bf16 %v245, %v245
    %v262 = vpack.c.bf16 %v246, %v246
    %v263 = vpack.c.bf16 %v247, %v247
    %v264 = vpack.c.bf16 %v248, %v248
    %v265 = vpack.c.bf16 %v249, %v249
    %v266 = vpack.c.bf16 %v250, %v250
    %v267 = vld [vmem:[#allocation2] sm:$0xff]
    %v269 = vcombine.high %v267, %v267
    %v271 = vunpack.c.l.s4 1966171168
    %v272 = vunpack.c.0.s8 %v271
    %v273 = vlaneseq
    %v274 = vshrl.u32 %v273, 7
    %v275 = vsub.s32 %v272, %v274
    %v276 = vrot.slane %v267, %v275
    %v278 = vunpack.c.l.s4 1966171168
    %v279 = vunpack.c.0.s8 %v278
    %v280 = vlaneseq
    %v281 = vshrl.u32 %v280, 7
    %v282 = vsub.s32 %v279, %v281
    %v283 = vrot.slane %v269, %v282
    %v284 = vcombine.high %v276, %v276
    %v285 = vcombine.high %v283, %v283
    %v287 = vunpack.c.l.s4 1966171168
    %v288 = vunpack.c.0.s8 %v287
    %v289 = vlaneseq
    %v290 = vshrl.u32 %v289, 7
    %v291 = vsub.s32 %v288, %v290
    %v292 = vrot.slane %v276, %v291
    %v294 = vunpack.c.l.s4 1966171168
    %v295 = vunpack.c.0.s8 %v294
    %v296 = vlaneseq
    %v297 = vshrl.u32 %v296, 7
    %v298 = vsub.s32 %v295, %v297
    %v299 = vrot.slane %v283, %v298
    %v301 = vunpack.c.l.s4 1966171168
    %v302 = vunpack.c.0.s8 %v301
    %v303 = vlaneseq
    %v304 = vshrl.u32 %v303, 7
    %v305 = vsub.s32 %v302, %v304
    %v306 = vrot.slane %v284, %v305
    %v308 = vunpack.c.l.s4 1966171168
    %v309 = vunpack.c.0.s8 %v308
    %v310 = vlaneseq
    %v311 = vshrl.u32 %v310, 7
    %v312 = vsub.s32 %v309, %v311
    %v313 = vrot.slane %v285, %v312
    %v314 = vcombine.high %v292, %v292
    %v315 = vcombine.high %v299, %v299
    %v316 = vcombine.high %v306, %v306
    %v317 = vcombine.high %v313, %v313
    %v318 = vlaneseq
    %v319 = vshrl.u32 %v318, 7
    %v320 = vsub.s32 0, %v319
    %v321 = vrot.slane %v292, %v320
    %v322 = vlaneseq
    %v323 = vshrl.u32 %v322, 7
    %v324 = vsub.s32 0, %v323
    %v325 = vrot.slane %v306, %v324
    %v326 = vlaneseq
    %v327 = vshrl.u32 %v326, 7
    %v328 = vsub.s32 0, %v327
    %v329 = vrot.slane %v314, %v328
    %v330 = vlaneseq
    %v331 = vshrl.u32 %v330, 7
    %v332 = vsub.s32 0, %v331
    %v333 = vrot.slane %v316, %v332
    %v334 = vlaneseq
    %v335 = vshrl.u32 %v334, 7
    %v336 = vsub.s32 0, %v335
    %v337 = vrot.slane %v299, %v336
    %v338 = vlaneseq
    %v339 = vshrl.u32 %v338, 7
    %v340 = vsub.s32 0, %v339
    %v341 = vrot.slane %v313, %v340
    %v342 = vlaneseq
    %v343 = vshrl.u32 %v342, 7
    %v344 = vsub.s32 0, %v343
    %v345 = vrot.slane %v315, %v344
    %v346 = vlaneseq
    %v347 = vshrl.u32 %v346, 7
    %v348 = vsub.s32 0, %v347
    %v349 = vrot.slane %v317, %v348
    %359 = vrot.lane.b32.xlu0 %v251, 120
    %v360 = vpop.permute.xlu0 %359
    %vm361 = vcmask 64512
    %v363 = vsel %vm361, %v251, 0
    %v366 = vsel %vm361, %v360, 0
    %368 = vmatprep.subr.bf16.mxu0 0
    %369 = vmatpush1.bf16.xpose.msra.mxu0 %v366
    %370 = vmatprep.subr.bf16.mxu0 0
    %371 = vmatpush1.bf16.xpose.msra.mxu0 0
    %372 = vmatprep.subr.bf16.mxu0 0
    %373 = vmatpush1.bf16.xpose.msra.mxu0 0
    %374 = vmatprep.subr.bf16.mxu0 0
    %375 = vmatpush1.bf16.xpose.msra.mxu0 0
    %376 = vmatprep.subr.bf16.mxu0 0
    %377 = vmatpush1.bf16.xpose.msra.mxu0 0
    %378 = vmatprep.subr.bf16.mxu0 0
    %379 = vmatpush1.bf16.xpose.msra.mxu0 0
    %380 = vmatprep.subr.bf16.mxu0 0
    %381 = vmatpush1.bf16.xpose.msra.mxu0 0
    %382 = vmatprep.subr.bf16.mxu0 0
    %383 = vmatpush1.bf16.xpose.msra.mxu0 0
    %384 = vmatprep.subr.bf16.mxu0 0
    %385 = vmatpush1.bf16.xpose.msra.mxu0 0
    %386 = vmatprep.subr.bf16.mxu0 0
    %387 = vmatpush1.bf16.xpose.msra.mxu0 0
    %388 = vmatprep.subr.bf16.mxu0 0
    %389 = vmatpush1.bf16.xpose.msra.mxu0 0
    %390 = vmatprep.subr.bf16.mxu0 0
    %391 = vmatpush1.bf16.xpose.msra.mxu0 0
    %392 = vmatprep.subr.bf16.mxu0 0
    %393 = vmatpush1.bf16.xpose.msra.mxu0 0
    %394 = vmatprep.subr.bf16.mxu0 0
    %395 = vmatpush1.bf16.xpose.msra.mxu0 0
    %396 = vmatprep.subr.bf16.mxu0 0
    %397 = vmatpush1.bf16.xpose.msra.mxu0 0
    %398 = vmatprep.subr.bf16.mxu0 0
    %399 = vmatpush1.bf16.xpose.msra.mxu0 0
    %400 = vmatprep.mubr.bf16.mxu0 0
    %401 = vmatmul.mubr.bf16.gmra.mrb[0].mxu0 %v363
    %v402 = vpop.f32.mrb[0].mxu0
    %v403 = vadd.f32 %v321, %v402
    %v404 = vpop.f32.mrb[0].mxu0
    %v405 = vpop.f32.mrb[0].mxu0
    %v406 = vpop.f32.mrb[0].mxu0
    %407 = vdwg.mxu0
    %409 = vrot.lane.b32.xlu0 %v253, 120
    %v410 = vpop.permute.xlu0 %409
    %v412 = vsel %vm361, %v253, 0
    %v415 = vsel %vm361, %v410, 0
    %417 = vmatprep.subr.bf16.mxu0 0
    %418 = vmatpush1.bf16.xpose.msra.mxu0 %v415
    %419 = vmatprep.subr.bf16.mxu0 0
    %420 = vmatpush1.bf16.xpose.msra.mxu0 0
    %421 = vmatprep.subr.bf16.mxu0 0
    %422 = vmatpush1.bf16.xpose.msra.mxu0 0
    %423 = vmatprep.subr.bf16.mxu0 0
    %424 = vmatpush1.bf16.xpose.msra.mxu0 0
    %425 = vmatprep.subr.bf16.mxu0 0
    %426 = vmatpush1.bf16.xpose.msra.mxu0 0
    %427 = vmatprep.subr.bf16.mxu0 0
    %428 = vmatpush1.bf16.xpose.msra.mxu0 0
    %429 = vmatprep.subr.bf16.mxu0 0
    %430 = vmatpush1.bf16.xpose.msra.mxu0 0
    %431 = vmatprep.subr.bf16.mxu0 0
    %432 = vmatpush1.bf16.xpose.msra.mxu0 0
    %433 = vmatprep.subr.bf16.mxu0 0
    %434 = vmatpush1.bf16.xpose.msra.mxu0 0
    %435 = vmatprep.subr.bf16.mxu0 0
    %436 = vmatpush1.bf16.xpose.msra.mxu0 0
    %437 = vmatprep.subr.bf16.mxu0 0
    %438 = vmatpush1.bf16.xpose.msra.mxu0 0
    %439 = vmatprep.subr.bf16.mxu0 0
    %440 = vmatpush1.bf16.xpose.msra.mxu0 0
    %441 = vmatprep.subr.bf16.mxu0 0
    %442 = vmatpush1.bf16.xpose.msra.mxu0 0
    %443 = vmatprep.subr.bf16.mxu0 0
    %444 = vmatpush1.bf16.xpose.msra.mxu0 0
    %445 = vmatprep.subr.bf16.mxu0 0
    %446 = vmatpush1.bf16.xpose.msra.mxu0 0
    %447 = vmatprep.subr.bf16.mxu0 0
    %448 = vmatpush1.bf16.xpose.msra.mxu0 0
    %449 = vmatprep.mubr.bf16.mxu0 0
    %450 = vmatmul.mubr.bf16.gmra.mrb[0].mxu0 %v412
    %v451 = vpop.f32.mrb[0].mxu0
    %v452 = vadd.f32 %v325, %v451
    %v453 = vpop.f32.mrb[0].mxu0
    %v454 = vpop.f32.mrb[0].mxu0
    %v455 = vpop.f32.mrb[0].mxu0
    %456 = vdwg.mxu0
    %458 = vrot.lane.b32.xlu0 %v255, 120
    %v459 = vpop.permute.xlu0 %458
    %v461 = vsel %vm361, %v255, 0
    %v464 = vsel %vm361, %v459, 0
    %466 = vmatprep.subr.bf16.mxu0 0
    %467 = vmatpush1.bf16.xpose.msra.mxu0 %v464
    %468 = vmatprep.subr.bf16.mxu0 0
    %469 = vmatpush1.bf16.xpose.msra.mxu0 0
    %470 = vmatprep.subr.bf16.mxu0 0
    %471 = vmatpush1.bf16.xpose.msra.mxu0 0
    %472 = vmatprep.subr.bf16.mxu0 0
    %473 = vmatpush1.bf16.xpose.msra.mxu0 0
    %474 = vmatprep.subr.bf16.mxu0 0
    %475 = vmatpush1.bf16.xpose.msra.mxu0 0
    %476 = vmatprep.subr.bf16.mxu0 0
    %477 = vmatpush1.bf16.xpose.msra.mxu0 0
    %478 = vmatprep.subr.bf16.mxu0 0
    %479 = vmatpush1.bf16.xpose.msra.mxu0 0
    %480 = vmatprep.subr.bf16.mxu0 0
    %481 = vmatpush1.bf16.xpose.msra.mxu0 0
    %482 = vmatprep.subr.bf16.mxu0 0
    %483 = vmatpush1.bf16.xpose.msra.mxu0 0
    %484 = vmatprep.subr.bf16.mxu0 0
    %485 = vmatpush1.bf16.xpose.msra.mxu0 0
    %486 = vmatprep.subr.bf16.mxu0 0
    %487 = vmatpush1.bf16.xpose.msra.mxu0 0
    %488 = vmatprep.subr.bf16.mxu0 0
    %489 = vmatpush1.bf16.xpose.msra.mxu0 0
    %490 = vmatprep.subr.bf16.mxu0 0
    %491 = vmatpush1.bf16.xpose.msra.mxu0 0
    %492 = vmatprep.subr.bf16.mxu0 0
    %493 = vmatpush1.bf16.xpose.msra.mxu0 0
    %494 = vmatprep.subr.bf16.mxu0 0
    %495 = vmatpush1.bf16.xpose.msra.mxu0 0
    %496 = vmatprep.subr.bf16.mxu0 0
    %497 = vmatpush1.bf16.xpose.msra.mxu0 0
    %498 = vmatprep.mubr.bf16.mxu0 0
    %499 = vmatmul.mubr.bf16.gmra.mrb[0].mxu0 %v461
    %v500 = vpop.f32.mrb[0].mxu0
    %v501 = vadd.f32 %v329, %v500
    %v502 = vpop.f32.mrb[0].mxu0
    %v503 = vpop.f32.mrb[0].mxu0
    %v504 = vpop.f32.mrb[0].mxu0
    %505 = vdwg.mxu0
    %507 = vrot.lane.b32.xlu0 %v257, 120
    %v508 = vpop.permute.xlu0 %507
    %v510 = vsel %vm361, %v257, 0
    %v513 = vsel %vm361, %v508, 0
    %515 = vmatprep.subr.bf16.mxu0 0
    %516 = vmatpush1.bf16.xpose.msra.mxu0 %v513
    %517 = vmatprep.subr.bf16.mxu0 0
    %518 = vmatpush1.bf16.xpose.msra.mxu0 0
    %519 = vmatprep.subr.bf16.mxu0 0
    %520 = vmatpush1.bf16.xpose.msra.mxu0 0
    %521 = vmatprep.subr.bf16.mxu0 0
    %522 = vmatpush1.bf16.xpose.msra.mxu0 0
    %523 = vmatprep.subr.bf16.mxu0 0
    %524 = vmatpush1.bf16.xpose.msra.mxu0 0
    %525 = vmatprep.subr.bf16.mxu0 0
    %526 = vmatpush1.bf16.xpose.msra.mxu0 0
    %527 = vmatprep.subr.bf16.mxu0 0
    %528 = vmatpush1.bf16.xpose.msra.mxu0 0
    %529 = vmatprep.subr.bf16.mxu0 0
    %530 = vmatpush1.bf16.xpose.msra.mxu0 0
    %531 = vmatprep.subr.bf16.mxu0 0
    %532 = vmatpush1.bf16.xpose.msra.mxu0 0
    %533 = vmatprep.subr.bf16.mxu0 0
    %534 = vmatpush1.bf16.xpose.msra.mxu0 0
    %535 = vmatprep.subr.bf16.mxu0 0
    %536 = vmatpush1.bf16.xpose.msra.mxu0 0
    %537 = vmatprep.subr.bf16.mxu0 0
    %538 = vmatpush1.bf16.xpose.msra.mxu0 0
    %539 = vmatprep.subr.bf16.mxu0 0
    %540 = vmatpush1.bf16.xpose.msra.mxu0 0
    %541 = vmatprep.subr.bf16.mxu0 0
    %542 = vmatpush1.bf16.xpose.msra.mxu0 0
    %543 = vmatprep.subr.bf16.mxu0 0
    %544 = vmatpush1.bf16.xpose.msra.mxu0 0
    %545 = vmatprep.subr.bf16.mxu0 0
    %546 = vmatpush1.bf16.xpose.msra.mxu0 0
    %547 = vmatprep.mubr.bf16.mxu0 0
    %548 = vmatmul.mubr.bf16.gmra.mrb[0].mxu0 %v510
    %v549 = vpop.f32.mrb[0].mxu0
    %v550 = vadd.f32 %v333, %v549
    %v551 = vpop.f32.mrb[0].mxu0
    %v552 = vpop.f32.mrb[0].mxu0
    %v553 = vpop.f32.mrb[0].mxu0
    %554 = vdwg.mxu0
    %556 = vrot.lane.b32.xlu0 %v259, 120
    %v557 = vpop.permute.xlu0 %556
    %v559 = vsel %vm361, %v259, 0
    %v562 = vsel %vm361, %v557, 0
    %564 = vmatprep.subr.bf16.mxu0 0
    %565 = vmatpush1.bf16.xpose.msra.mxu0 %v562
    %566 = vmatprep.subr.bf16.mxu0 0
    %567 = vmatpush1.bf16.xpose.msra.mxu0 0
    %568 = vmatprep.subr.bf16.mxu0 0
    %569 = vmatpush1.bf16.xpose.msra.mxu0 0
    %570 = vmatprep.subr.bf16.mxu0 0
    %571 = vmatpush1.bf16.xpose.msra.mxu0 0
    %572 = vmatprep.subr.bf16.mxu0 0
    %573 = vmatpush1.bf16.xpose.msra.mxu0 0
    %574 = vmatprep.subr.bf16.mxu0 0
    %575 = vmatpush1.bf16.xpose.msra.mxu0 0
    %576 = vmatprep.subr.bf16.mxu0 0
    %577 = vmatpush1.bf16.xpose.msra.mxu0 0
    %578 = vmatprep.subr.bf16.mxu0 0
    %579 = vmatpush1.bf16.xpose.msra.mxu0 0
    %580 = vmatprep.subr.bf16.mxu0 0
    %581 = vmatpush1.bf16.xpose.msra.mxu0 0
    %582 = vmatprep.subr.bf16.mxu0 0
    %583 = vmatpush1.bf16.xpose.msra.mxu0 0
    %584 = vmatprep.subr.bf16.mxu0 0
    %585 = vmatpush1.bf16.xpose.msra.mxu0 0
    %586 = vmatprep.subr.bf16.mxu0 0
    %587 = vmatpush1.bf16.xpose.msra.mxu0 0
    %588 = vmatprep.subr.bf16.mxu0 0
    %589 = vmatpush1.bf16.xpose.msra.mxu0 0
    %590 = vmatprep.subr.bf16.mxu0 0
    %591 = vmatpush1.bf16.xpose.msra.mxu0 0
    %592 = vmatprep.subr.bf16.mxu0 0
    %593 = vmatpush1.bf16.xpose.msra.mxu0 0
    %594 = vmatprep.subr.bf16.mxu0 0
    %595 = vmatpush1.bf16.xpose.msra.mxu0 0
    %596 = vmatprep.mubr.bf16.mxu0 0
    %597 = vmatmul.mubr.bf16.gmra.mrb[0].mxu0 %v559
    %v598 = vpop.f32.mrb[0].mxu0
    %v599 = vadd.f32 %v337, %v598
    %v600 = vpop.f32.mrb[0].mxu0
    %v601 = vpop.f32.mrb[0].mxu0
    %v602 = vpop.f32.mrb[0].mxu0
    %603 = vdwg.mxu0
    %605 = vrot.lane.b32.xlu0 %v261, 120
    %v606 = vpop.permute.xlu0 %605
    %v608 = vsel %vm361, %v261, 0
    %v611 = vsel %vm361, %v606, 0
    %613 = vmatprep.subr.bf16.mxu0 0
    %614 = vmatpush1.bf16.xpose.msra.mxu0 %v611
    %615 = vmatprep.subr.bf16.mxu0 0
    %616 = vmatpush1.bf16.xpose.msra.mxu0 0
    %617 = vmatprep.subr.bf16.mxu0 0
    %618 = vmatpush1.bf16.xpose.msra.mxu0 0
    %619 = vmatprep.subr.bf16.mxu0 0
    %620 = vmatpush1.bf16.xpose.msra.mxu0 0
    %621 = vmatprep.subr.bf16.mxu0 0
    %622 = vmatpush1.bf16.xpose.msra.mxu0 0
    %623 = vmatprep.subr.bf16.mxu0 0
    %624 = vmatpush1.bf16.xpose.msra.mxu0 0
    %625 = vmatprep.subr.bf16.mxu0 0
    %626 = vmatpush1.bf16.xpose.msra.mxu0 0
    %627 = vmatprep.subr.bf16.mxu0 0
    %628 = vmatpush1.bf16.xpose.msra.mxu0 0
    %629 = vmatprep.subr.bf16.mxu0 0
    %630 = vmatpush1.bf16.xpose.msra.mxu0 0
    %631 = vmatprep.subr.bf16.mxu0 0
    %632 = vmatpush1.bf16.xpose.msra.mxu0 0
    %633 = vmatprep.subr.bf16.mxu0 0
    %634 = vmatpush1.bf16.xpose.msra.mxu0 0
    %635 = vmatprep.subr.bf16.mxu0 0
    %636 = vmatpush1.bf16.xpose.msra.mxu0 0
    %637 = vmatprep.subr.bf16.mxu0 0
    %638 = vmatpush1.bf16.xpose.msra.mxu0 0
    %639 = vmatprep.subr.bf16.mxu0 0
    %640 = vmatpush1.bf16.xpose.msra.mxu0 0
    %641 = vmatprep.subr.bf16.mxu0 0
    %642 = vmatpush1.bf16.xpose.msra.mxu0 0
    %643 = vmatprep.subr.bf16.mxu0 0
    %644 = vmatpush1.bf16.xpose.msra.mxu0 0
    %645 = vmatprep.mubr.bf16.mxu0 0
    %646 = vmatmul.mubr.bf16.gmra.mrb[0].mxu0 %v608
    %v647 = vpop.f32.mrb[0].mxu0
    %v648 = vadd.f32 %v341, %v647
    %v649 = vpop.f32.mrb[0].mxu0
    %v650 = vpop.f32.mrb[0].mxu0
    %v651 = vpop.f32.mrb[0].mxu0
    %652 = vdwg.mxu0
    %654 = vrot.lane.b32.xlu0 %v263, 120
    %v655 = vpop.permute.xlu0 %654
    %v657 = vsel %vm361, %v263, 0
    %v660 = vsel %vm361, %v655, 0
    %662 = vmatprep.subr.bf16.mxu0 0
    %663 = vmatpush1.bf16.xpose.msra.mxu0 %v660
    %664 = vmatprep.subr.bf16.mxu0 0
    %665 = vmatpush1.bf16.xpose.msra.mxu0 0
    %666 = vmatprep.subr.bf16.mxu0 0
    %667 = vmatpush1.bf16.xpose.msra.mxu0 0
    %668 = vmatprep.subr.bf16.mxu0 0
    %669 = vmatpush1.bf16.xpose.msra.mxu0 0
    %670 = vmatprep.subr.bf16.mxu0 0
    %671 = vmatpush1.bf16.xpose.msra.mxu0 0
    %672 = vmatprep.subr.bf16.mxu0 0
    %673 = vmatpush1.bf16.xpose.msra.mxu0 0
    %674 = vmatprep.subr.bf16.mxu0 0
    %675 = vmatpush1.bf16.xpose.msra.mxu0 0
    %676 = vmatprep.subr.bf16.mxu0 0
    %677 = vmatpush1.bf16.xpose.msra.mxu0 0
    %678 = vmatprep.subr.bf16.mxu0 0
    %679 = vmatpush1.bf16.xpose.msra.mxu0 0
    %680 = vmatprep.subr.bf16.mxu0 0
    %681 = vmatpush1.bf16.xpose.msra.mxu0 0
    %682 = vmatprep.subr.bf16.mxu0 0
    %683 = vmatpush1.bf16.xpose.msra.mxu0 0
    %684 = vmatprep.subr.bf16.mxu0 0
    %685 = vmatpush1.bf16.xpose.msra.mxu0 0
    %686 = vmatprep.subr.bf16.mxu0 0
    %687 = vmatpush1.bf16.xpose.msra.mxu0 0
    %688 = vmatprep.subr.bf16.mxu0 0
    %689 = vmatpush1.bf16.xpose.msra.mxu0 0
    %690 = vmatprep.subr.bf16.mxu0 0
    %691 = vmatpush1.bf16.xpose.msra.mxu0 0
    %692 = vmatprep.subr.bf16.mxu0 0
    %693 = vmatpush1.bf16.xpose.msra.mxu0 0
    %694 = vmatprep.mubr.bf16.mxu0 0
    %695 = vmatmul.mubr.bf16.gmra.mrb[0].mxu0 %v657
    %v696 = vpop.f32.mrb[0].mxu0
    %v697 = vadd.f32 %v345, %v696
    %v698 = vpop.f32.mrb[0].mxu0
    %v699 = vpop.f32.mrb[0].mxu0
    %v700 = vpop.f32.mrb[0].mxu0
    %701 = vdwg.mxu0
    %703 = vrot.lane.b32.xlu0 %v265, 120
    %v704 = vpop.permute.xlu0 %703
    %v706 = vsel %vm361, %v265, 0
    %v709 = vsel %vm361, %v704, 0
    %711 = vmatprep.subr.bf16.mxu0 0
    %712 = vmatpush1.bf16.xpose.msra.mxu0 %v709
    %713 = vmatprep.subr.bf16.mxu0 0
    %714 = vmatpush1.bf16.xpose.msra.mxu0 0
    %715 = vmatprep.subr.bf16.mxu0 0
    %716 = vmatpush1.bf16.xpose.msra.mxu0 0
    %717 = vmatprep.subr.bf16.mxu0 0
    %718 = vmatpush1.bf16.xpose.msra.mxu0 0
    %719 = vmatprep.subr.bf16.mxu0 0
    %720 = vmatpush1.bf16.xpose.msra.mxu0 0
    %721 = vmatprep.subr.bf16.mxu0 0
    %722 = vmatpush1.bf16.xpose.msra.mxu0 0
    %723 = vmatprep.subr.bf16.mxu0 0
    %724 = vmatpush1.bf16.xpose.msra.mxu0 0
    %725 = vmatprep.subr.bf16.mxu0 0
    %726 = vmatpush1.bf16.xpose.msra.mxu0 0
    %727 = vmatprep.subr.bf16.mxu0 0
    %728 = vmatpush1.bf16.xpose.msra.mxu0 0
    %729 = vmatprep.subr.bf16.mxu0 0
    %730 = vmatpush1.bf16.xpose.msra.mxu0 0
    %731 = vmatprep.subr.bf16.mxu0 0
    %732 = vmatpush1.bf16.xpose.msra.mxu0 0
    %733 = vmatprep.subr.bf16.mxu0 0
    %734 = vmatpush1.bf16.xpose.msra.mxu0 0
    %735 = vmatprep.subr.bf16.mxu0 0
    %736 = vmatpush1.bf16.xpose.msra.mxu0 0
    %737 = vmatprep.subr.bf16.mxu0 0
    %738 = vmatpush1.bf16.xpose.msra.mxu0 0
    %739 = vmatprep.subr.bf16.mxu0 0
    %740 = vmatpush1.bf16.xpose.msra.mxu0 0
    %741 = vmatprep.subr.bf16.mxu0 0
    %742 = vmatpush1.bf16.xpose.msra.mxu0 0
    %743 = vmatprep.mubr.bf16.mxu0 0
    %744 = vmatmul.mubr.bf16.gmra.mrb[0].mxu0 %v706
    %v745 = vpop.f32.mrb[0].mxu0
    %v746 = vadd.f32 %v349, %v745
    %v747 = vpop.f32.mrb[0].mxu0
    %v748 = vpop.f32.mrb[0].mxu0
    %v749 = vpop.f32.mrb[0].mxu0
    %750 = vdwg.mxu0
    %v751 = vsel %vm361, %v403, -inf
    %752 = vmax.xlane.f32.xlu0 %v751
    %v753 = vpop.xlane.xlu0 %752
    %v754 = vsel %vm361, %v452, -inf
    %755 = vmax.xlane.f32.xlu0 %v754
    %v756 = vpop.xlane.xlu0 %755
    %v757 = vsel %vm361, %v501, -inf
    %758 = vmax.xlane.f32.xlu0 %v757
    %v759 = vpop.xlane.xlu0 %758
    %v760 = vsel %vm361, %v550, -inf
    %761 = vmax.xlane.f32.xlu0 %v760
    %v762 = vpop.xlane.xlu0 %761
    %v763 = vsel %vm361, %v599, -inf
    %764 = vmax.xlane.f32.xlu0 %v763
    %v765 = vpop.xlane.xlu0 %764
    %v766 = vsel %vm361, %v648, -inf
    %767 = vmax.xlane.f32.xlu0 %v766
    %v768 = vpop.xlane.xlu0 %767
    %v769 = vsel %vm361, %v697, -inf
    %770 = vmax.xlane.f32.xlu0 %v769
    %v771 = vpop.xlane.xlu0 %770
    %v772 = vsel %vm361, %v746, -inf
    %773 = vmax.xlane.f32.xlu0 %v772
    %v774 = vpop.xlane.xlu0 %773
    %v775 = vsub.f32 %v403, %v753
    %v776 = vsub.f32 %v452, %v756
    %v777 = vsub.f32 %v501, %v759
    %v778 = vsub.f32 %v550, %v762
    %v779 = vsub.f32 %v599, %v765
    %v780 = vsub.f32 %v648, %v768
    %v781 = vsub.f32 %v697, %v771
    %v782 = vsub.f32 %v746, %v774
    %v783 = vmul.f32 %v775, 1.442695
    %v784 = vpow.pop %v783
    %v785 = vmul.f32 %v776, 1.442695
    %v786 = vpow.pop %v785
    %v787 = vmul.f32 %v777, 1.442695
    %v788 = vpow.pop %v787
    %v789 = vmul.f32 %v778, 1.442695
    %v790 = vpow.pop %v789
    %v791 = vmul.f32 %v779, 1.442695
    %v792 = vpow.pop %v791
    %v793 = vmul.f32 %v780, 1.442695
    %v794 = vpow.pop %v793
    %v795 = vmul.f32 %v781, 1.442695
    %v796 = vpow.pop %v795
    %v797 = vmul.f32 %v782, 1.442695
    %v798 = vpow.pop %v797
    %v799 = vsel %vm361, %v784, 0.0
    %800 = vadd.xlane.f32.xlu0 %v799
    %v801 = vpop.xlane.xlu0 %800
    %v802 = vsel %vm361, %v786, 0.0
    %803 = vadd.xlane.f32.xlu0 %v802
    %v804 = vpop.xlane.xlu0 %803
    %v805 = vsel %vm361, %v788, 0.0
    %806 = vadd.xlane.f32.xlu0 %v805
    %v807 = vpop.xlane.xlu0 %806
    %v808 = vsel %vm361, %v790, 0.0
    %809 = vadd.xlane.f32.xlu0 %v808
    %v810 = vpop.xlane.xlu0 %809
    %v811 = vsel %vm361, %v792, 0.0
    %812 = vadd.xlane.f32.xlu0 %v811
    %v813 = vpop.xlane.xlu0 %812
    %v814 = vsel %vm361, %v794, 0.0
    %815 = vadd.xlane.f32.xlu0 %v814
    %v816 = vpop.xlane.xlu0 %815
    %v817 = vsel %vm361, %v796, 0.0
    %818 = vadd.xlane.f32.xlu0 %v817
    %v819 = vpop.xlane.xlu0 %818
    %v820 = vsel %vm361, %v798, 0.0
    %821 = vadd.xlane.f32.xlu0 %v820
    %v822 = vpop.xlane.xlu0 %821
    %v823 = vrcp.pop %v801
    %v824 = vrcp.pop %v804
    %v825 = vrcp.pop %v807
    %v826 = vrcp.pop %v810
    %v827 = vrcp.pop %v813
    %v828 = vrcp.pop %v816
    %v829 = vrcp.pop %v819
    %v830 = vrcp.pop %v822
    %v831 = vmul.f32 %v784, %v823
    %v832 = vmul.f32 %v786, %v824
    %v833 = vmul.f32 %v788, %v825
    %v834 = vmul.f32 %v790, %v826
    %v835 = vmul.f32 %v792, %v827
    %v836 = vmul.f32 %v794, %v828
    %v837 = vmul.f32 %v796, %v829
    %v838 = vmul.f32 %v798, %v830
    %v839 = vpack.c.bf16 %v831, %v831
    %v840 = vpack.c.bf16 %v832, %v832
    %v841 = vpack.c.bf16 %v833, %v833
    %v842 = vpack.c.bf16 %v834, %v834
    %v843 = vpack.c.bf16 %v835, %v835
    %v844 = vpack.c.bf16 %v836, %v836
    %v845 = vpack.c.bf16 %v837, %v837
    %v846 = vpack.c.bf16 %v838, %v838
    %847 = vrot.lane.b32.xlu0 %v251, 80
    %v848 = vpop.permute.xlu0 %847
    %849 = vrot.lane.b32.xlu0 %v251, 72
    %v850 = vpop.permute.xlu0 %849
    %v852 = vsel %vm361, %v848, 0
    %v855 = vsel %vm361, %v850, 0
    %857 = vmatprep.subr.bf16.mxu0 0
    %858 = vmatpush1.bf16.xpose.msra.mxu0 %v855
    %859 = vmatprep.subr.bf16.mxu0 0
    %860 = vmatpush1.bf16.xpose.msra.mxu0 0
    %861 = vmatprep.subr.bf16.mxu0 0
    %862 = vmatpush1.bf16.xpose.msra.mxu0 0
    %863 = vmatprep.subr.bf16.mxu0 0
    %864 = vmatpush1.bf16.xpose.msra.mxu0 0
    %865 = vmatprep.subr.bf16.mxu0 0
    %866 = vmatpush1.bf16.xpose.msra.mxu0 0
    %867 = vmatprep.subr.bf16.mxu0 0
    %868 = vmatpush1.bf16.xpose.msra.mxu0 0
    %869 = vmatprep.subr.bf16.mxu0 0
    %870 = vmatpush1.bf16.xpose.msra.mxu0 0
    %871 = vmatprep.subr.bf16.mxu0 0
    %872 = vmatpush1.bf16.xpose.msra.mxu0 0
    %873 = vmatprep.subr.bf16.mxu0 0
    %874 = vmatpush1.bf16.xpose.msra.mxu0 0
    %875 = vmatprep.subr.bf16.mxu0 0
    %876 = vmatpush1.bf16.xpose.msra.mxu0 0
    %877 = vmatprep.subr.bf16.mxu0 0
    %878 = vmatpush1.bf16.xpose.msra.mxu0 0
    %879 = vmatprep.subr.bf16.mxu0 0
    %880 = vmatpush1.bf16.xpose.msra.mxu0 0
    %881 = vmatprep.subr.bf16.mxu0 0
    %882 = vmatpush1.bf16.xpose.msra.mxu0 0
    %883 = vmatprep.subr.bf16.mxu0 0
    %884 = vmatpush1.bf16.xpose.msra.mxu0 0
    %885 = vmatprep.subr.bf16.mxu0 0
    %886 = vmatpush1.bf16.xpose.msra.mxu0 0
    %887 = vmatprep.subr.bf16.mxu0 0
    %888 = vmatpush1.bf16.xpose.msra.mxu0 0
    %889 = vmatprep.mubr.bf16.mxu0 0
    %890 = vmatmul.mubr.bf16.gmra.mrb[0].mxu0 %v852
    %v891 = vpop.f32.mrb[0].mxu0
    %v892 = vadd.f32 %v321, %v891
    %v893 = vpop.f32.mrb[0].mxu0
    %v894 = vpop.f32.mrb[0].mxu0
    %v895 = vpop.f32.mrb[0].mxu0
    %896 = vdwg.mxu0
    %897 = vrot.lane.b32.xlu0 %v253, 80
    %v898 = vpop.permute.xlu0 %897
    %899 = vrot.lane.b32.xlu0 %v253, 72
    %v900 = vpop.permute.xlu0 %899
    %v902 = vsel %vm361, %v898, 0
    %v905 = vsel %vm361, %v900, 0
    %907 = vmatprep.subr.bf16.mxu0 0
    %908 = vmatpush1.bf16.xpose.msra.mxu0 %v905
    %909 = vmatprep.subr.bf16.mxu0 0
    %910 = vmatpush1.bf16.xpose.msra.mxu0 0
    %911 = vmatprep.subr.bf16.mxu0 0
    %912 = vmatpush1.bf16.xpose.msra.mxu0 0
    %913 = vmatprep.subr.bf16.mxu0 0
    %914 = vmatpush1.bf16.xpose.msra.mxu0 0
    %915 = vmatprep.subr.bf16.mxu0 0
    %916 = vmatpush1.bf16.xpose.msra.mxu0 0
    %917 = vmatprep.subr.bf16.mxu0 0
    %918 = vmatpush1.bf16.xpose.msra.mxu0 0
    %919 = vmatprep.subr.bf16.mxu0 0
    %920 = vmatpush1.bf16.xpose.msra.mxu0 0
    %921 = vmatprep.subr.bf16.mxu0 0
    %922 = vmatpush1.bf16.xpose.msra.mxu0 0
    %923 = vmatprep.subr.bf16.mxu0 0
    %924 = vmatpush1.bf16.xpose.msra.mxu0 0
    %925 = vmatprep.subr.bf16.mxu0 0
    %926 = vmatpush1.bf16.xpose.msra.mxu0 0
    %927 = vmatprep.subr.bf16.mxu0 0
    %928 = vmatpush1.bf16.xpose.msra.mxu0 0
    %929 = vmatprep.subr.bf16.mxu0 0
    %930 = vmatpush1.bf16.xpose.msra.mxu0 0
    %931 = vmatprep.subr.bf16.mxu0 0
    %932 = vmatpush1.bf16.xpose.msra.mxu0 0
    %933 = vmatprep.subr.bf16.mxu0 0
    %934 = vmatpush1.bf16.xpose.msra.mxu0 0
    %935 = vmatprep.subr.bf16.mxu0 0
    %936 = vmatpush1.bf16.xpose.msra.mxu0 0
    %937 = vmatprep.subr.bf16.mxu0 0
    %938 = vmatpush1.bf16.xpose.msra.mxu0 0
    %939 = vmatprep.mubr.bf16.mxu0 0
    %940 = vmatmul.mubr.bf16.gmra.mrb[0].mxu0 %v902
    %v941 = vpop.f32.mrb[0].mxu0
    %v942 = vadd.f32 %v325, %v941
    %v943 = vpop.f32.mrb[0].mxu0
    %v944 = vpop.f32.mrb[0].mxu0
    %v945 = vpop.f32.mrb[0].mxu0
    %946 = vdwg.mxu0
    %947 = vrot.lane.b32.xlu0 %v255, 80
    %v948 = vpop.permute.xlu0 %947
    %949 = vrot.lane.b32.xlu0 %v255, 72
    %v950 = vpop.permute.xlu0 %949
    %v952 = vsel %vm361, %v948, 0
    %v955 = vsel %vm361, %v950, 0
    %957 = vmatprep.subr.bf16.mxu0 0
    %958 = vmatpush1.bf16.xpose.msra.mxu0 %v955
    %959 = vmatprep.subr.bf16.mxu0 0
    %960 = vmatpush1.bf16.xpose.msra.mxu0 0
    %961 = vmatprep.subr.bf16.mxu0 0
    %962 = vmatpush1.bf16.xpose.msra.mxu0 0
    %963 = vmatprep.subr.bf16.mxu0 0
    %964 = vmatpush1.bf16.xpose.msra.mxu0 0
    %965 = vmatprep.subr.bf16.mxu0 0
    %966 = vmatpush1.bf16.xpose.msra.mxu0 0
    %967 = vmatprep.subr.bf16.mxu0 0
    %968 = vmatpush1.bf16.xpose.msra.mxu0 0
    %969 = vmatprep.subr.bf16.mxu0 0
    %970 = vmatpush1.bf16.xpose.msra.mxu0 0
    %971 = vmatprep.subr.bf16.mxu0 0
    %972 = vmatpush1.bf16.xpose.msra.mxu0 0
    %973 = vmatprep.subr.bf16.mxu0 0
    %974 = vmatpush1.bf16.xpose.msra.mxu0 0
    %975 = vmatprep.subr.bf16.mxu0 0
    %976 = vmatpush1.bf16.xpose.msra.mxu0 0
    %977 = vmatprep.subr.bf16.mxu0 0
    %978 = vmatpush1.bf16.xpose.msra.mxu0 0
    %979 = vmatprep.subr.bf16.mxu0 0
    %980 = vmatpush1.bf16.xpose.msra.mxu0 0
    %981 = vmatprep.subr.bf16.mxu0 0
    %982 = vmatpush1.bf16.xpose.msra.mxu0 0
    %983 = vmatprep.subr.bf16.mxu0 0
    %984 = vmatpush1.bf16.xpose.msra.mxu0 0
    %985 = vmatprep.subr.bf16.mxu0 0
    %986 = vmatpush1.bf16.xpose.msra.mxu0 0
    %987 = vmatprep.subr.bf16.mxu0 0
    %988 = vmatpush1.bf16.xpose.msra.mxu0 0
    %989 = vmatprep.mubr.bf16.mxu0 0
    %990 = vmatmul.mubr.bf16.gmra.mrb[0].mxu0 %v952
    %v991 = vpop.f32.mrb[0].mxu0
    %v992 = vadd.f32 %v329, %v991
    %v993 = vpop.f32.mrb[0].mxu0
    %v994 = vpop.f32.mrb[0].mxu0
    %v995 = vpop.f32.mrb[0].mxu0
    %996 = vdwg.mxu0
    %997 = vrot.lane.b32.xlu0 %v257, 80
    %v998 = vpop.permute.xlu0 %997
    %999 = vrot.lane.b32.xlu0 %v257, 72
    %v1000 = vpop.permute.xlu0 %999
    %v1002 = vsel %vm361, %v998, 0
    %v1005 = vsel %vm361, %v1000, 0
    %1007 = vmatprep.subr.bf16.mxu0 0
    %1008 = vmatpush1.bf16.xpose.msra.mxu0 %v1005
    %1009 = vmatprep.subr.bf16.mxu0 0
    %1010 = vmatpush1.bf16.xpose.msra.mxu0 0
    %1011 = vmatprep.subr.bf16.mxu0 0
    %1012 = vmatpush1.bf16.xpose.msra.mxu0 0
    %1013 = vmatprep.subr.bf16.mxu0 0
    %1014 = vmatpush1.bf16.xpose.msra.mxu0 0
    %1015 = vmatprep.subr.bf16.mxu0 0
    %1016 = vmatpush1.bf16.xpose.msra.mxu0 0
    %1017 = vmatprep.subr.bf16.mxu0 0
    %1018 = vmatpush1.bf16.xpose.msra.mxu0 0
    %1019 = vmatprep.subr.bf16.mxu0 0
    %1020 = vmatpush1.bf16.xpose.msra.mxu0 0
    %1021 = vmatprep.subr.bf16.mxu0 0
    %1022 = vmatpush1.bf16.xpose.msra.mxu0 0
    %1023 = vmatprep.subr.bf16.mxu0 0
    %1024 = vmatpush1.bf16.xpose.msra.mxu0 0
    %1025 = vmatprep.subr.bf16.mxu0 0
    %1026 = vmatpush1.bf16.xpose.msra.mxu0 0
    %1027 = vmatprep.subr.bf16.mxu0 0
    %1028 = vmatpush1.bf16.xpose.msra.mxu0 0
    %1029 = vmatprep.subr.bf16.mxu0 0
    %1030 = vmatpush1.bf16.xpose.msra.mxu0 0
    %1031 = vmatprep.subr.bf16.mxu0 0
    %1032 = vmatpush1.bf16.xpose.msra.mxu0 0
    %1033 = vmatprep.subr.bf16.mxu0 0
    %1034 = vmatpush1.bf16.xpose.msra.mxu0 0
    %1035 = vmatprep.subr.bf16.mxu0 0
    %1036 = vmatpush1.bf16.xpose.msra.mxu0 0
    %1037 = vmatprep.subr.bf16.mxu0 0
    %1038 = vmatpush1.bf16.xpose.msra.mxu0 0
    %1039 = vmatprep.mubr.bf16.mxu0 0
    %1040 = vmatmul.mubr.bf16.gmra.mrb[0].mxu0 %v1002
    %v1041 = vpop.f32.mrb[0].mxu0
    %v1042 = vadd.f32 %v333, %v1041
    %v1043 = vpop.f32.mrb[0].mxu0
    %v1044 = vpop.f32.mrb[0].mxu0
    %v1045 = vpop.f32.mrb[0].mxu0
    %1046 = vdwg.mxu0
    %1047 = vrot.lane.b32.xlu0 %v259, 80
    %v1048 = vpop.permute.xlu0 %1047
    %1049 = vrot.lane.b32.xlu0 %v259, 72
    %v1050 = vpop.permute.xlu0 %1049
    %v1052 = vsel %vm361, %v1048, 0
    %v1055 = vsel %vm361, %v1050, 0
    %1057 = vmatprep.subr.bf16.mxu0 0
    %1058 = vmatpush1.bf16.xpose.msra.mxu0 %v1055
    %1059 = vmatprep.subr.bf16.mxu0 0
    %1060 = vmatpush1.bf16.xpose.msra.mxu0 0
    %1061 = vmatprep.subr.bf16.mxu0 0
    %1062 = vmatpush1.bf16.xpose.msra.mxu0 0
    %1063 = vmatprep.subr.bf16.mxu0 0
    %1064 = vmatpush1.bf16.xpose.msra.mxu0 0
    %1065 = vmatprep.subr.bf16.mxu0 0
    %1066 = vmatpush1.bf16.xpose.msra.mxu0 0
    %1067 = vmatprep.subr.bf16.mxu0 0
    %1068 = vmatpush1.bf16.xpose.msra.mxu0 0
    %1069 = vmatprep.subr.bf16.mxu0 0
    %1070 = vmatpush1.bf16.xpose.msra.mxu0 0
    %1071 = vmatprep.subr.bf16.mxu0 0
    %1072 = vmatpush1.bf16.xpose.msra.mxu0 0
    %1073 = vmatprep.subr.bf16.mxu0 0
    %1074 = vmatpush1.bf16.xpose.msra.mxu0 0
    %1075 = vmatprep.subr.bf16.mxu0 0
    %1076 = vmatpush1.bf16.xpose.msra.mxu0 0
    %1077 = vmatprep.subr.bf16.mxu0 0
    %1078 = vmatpush1.bf16.xpose.msra.mxu0 0
    %1079 = vmatprep.subr.bf16.mxu0 0
    %1080 = vmatpush1.bf16.xpose.msra.mxu0 0
    %1081 = vmatprep.subr.bf16.mxu0 0
    %1082 = vmatpush1.bf16.xpose.msra.mxu0 0
    %1083 = vmatprep.subr.bf16.mxu0 0
    %1084 = vmatpush1.bf16.xpose.msra.mxu0 0
    %1085 = vmatprep.subr.bf16.mxu0 0
    %1086 = vmatpush1.bf16.xpose.msra.mxu0 0
    %1087 = vmatprep.subr.bf16.mxu0 0
    %1088 = vmatpush1.bf16.xpose.msra.mxu0 0
    %1089 = vmatprep.mubr.bf16.mxu0 0
    %1090 = vmatmul.mubr.bf16.gmra.mrb[0].mxu0 %v1052
    %v1091 = vpop.f32.mrb[0].mxu0
    %v1092 = vadd.f32 %v337, %v1091
    %v1093 = vpop.f32.mrb[0].mxu0
    %v1094 = vpop.f32.mrb[0].mxu0
    %v1095 = vpop.f32.mrb[0].mxu0
    %1096 = vdwg.mxu0
    %1097 = vrot.lane.b32.xlu0 %v261, 80
    %v1098 = vpop.permute.xlu0 %1097
    %1099 = vrot.lane.b32.xlu0 %v261, 72
    %v1100 = vpop.permute.xlu0 %1099
    %v1102 = vsel %vm361, %v1098, 0
    %v1105 = vsel %vm361, %v1100, 0
    %1107 = vmatprep.subr.bf16.mxu0 0
    %1108 = vmatpush1.bf16.xpose.msra.mxu0 %v1105
    %1109 = vmatprep.subr.bf16.mxu0 0
    %1110 = vmatpush1.bf16.xpose.msra.mxu0 0
    %1111 = vmatprep.subr.bf16.mxu0 0
    %1112 = vmatpush1.bf16.xpose.msra.mxu0 0
    %1113 = vmatprep.subr.bf16.mxu0 0
    %1114 = vmatpush1.bf16.xpose.msra.mxu0 0
    %1115 = vmatprep.subr.bf16.mxu0 0
    %1116 = vmatpush1.bf16.xpose.msra.mxu0 0
    %1117 = vmatprep.subr.bf16.mxu0 0
    %1118 = vmatpush1.bf16.xpose.msra.mxu0 0
    %1119 = vmatprep.subr.bf16.mxu0 0
    %1120 = vmatpush1.bf16.xpose.msra.mxu0 0
    %1121 = vmatprep.subr.bf16.mxu0 0
    %1122 = vmatpush1.bf16.xpose.msra.mxu0 0
    %1123 = vmatprep.subr.bf16.mxu0 0
    %1124 = vmatpush1.bf16.xpose.msra.mxu0 0
    %1125 = vmatprep.subr.bf16.mxu0 0
    %1126 = vmatpush1.bf16.xpose.msra.mxu0 0
    %1127 = vmatprep.subr.bf16.mxu0 0
    %1128 = vmatpush1.bf16.xpose.msra.mxu0 0
    %1129 = vmatprep.subr.bf16.mxu0 0
    %1130 = vmatpush1.bf16.xpose.msra.mxu0 0
    %1131 = vmatprep.subr.bf16.mxu0 0
    %1132 = vmatpush1.bf16.xpose.msra.mxu0 0
    %1133 = vmatprep.subr.bf16.mxu0 0
    %1134 = vmatpush1.bf16.xpose.msra.mxu0 0
    %1135 = vmatprep.subr.bf16.mxu0 0
    %1136 = vmatpush1.bf16.xpose.msra.mxu0 0
    %1137 = vmatprep.subr.bf16.mxu0 0
    %1138 = vmatpush1.bf16.xpose.msra.mxu0 0
    %1139 = vmatprep.mubr.bf16.mxu0 0
    %1140 = vmatmul.mubr.bf16.gmra.mrb[0].mxu0 %v1102
    %v1141 = vpop.f32.mrb[0].mxu0
    %v1142 = vadd.f32 %v341, %v1141
    %v1143 = vpop.f32.mrb[0].mxu0
    %v1144 = vpop.f32.mrb[0].mxu0
    %v1145 = vpop.f32.mrb[0].mxu0
    %1146 = vdwg.mxu0
    %1147 = vrot.lane.b32.xlu0 %v263, 80
    %v1148 = vpop.permute.xlu0 %1147
    %1149 = vrot.lane.b32.xlu0 %v263, 72
    %v1150 = vpop.permute.xlu0 %1149
    %v1152 = vsel %vm361, %v1148, 0
    %v1155 = vsel %vm361, %v1150, 0
    %1157 = vmatprep.subr.bf16.mxu0 0
    %1158 = vmatpush1.bf16.xpose.msra.mxu0 %v1155
    %1159 = vmatprep.subr.bf16.mxu0 0
    %1160 = vmatpush1.bf16.xpose.msra.mxu0 0
    %1161 = vmatprep.subr.bf16.mxu0 0
    %1162 = vmatpush1.bf16.xpose.msra.mxu0 0
    %1163 = vmatprep.subr.bf16.mxu0 0
    %1164 = vmatpush1.bf16.xpose.msra.mxu0 0
    %1165 = vmatprep.subr.bf16.mxu0 0
    %1166 = vmatpush1.bf16.xpose.msra.mxu0 0
    %1167 = vmatprep.subr.bf16.mxu0 0
    %1168 = vmatpush1.bf16.xpose.msra.mxu0 0
    %1169 = vmatprep.subr.bf16.mxu0 0
    %1170 = vmatpush1.bf16.xpose.msra.mxu0 0
    %1171 = vmatprep.subr.bf16.mxu0 0
    %1172 = vmatpush1.bf16.xpose.msra.mxu0 0
    %1173 = vmatprep.subr.bf16.mxu0 0
    %1174 = vmatpush1.bf16.xpose.msra.mxu0 0
    %1175 = vmatprep.subr.bf16.mxu0 0
    %1176 = vmatpush1.bf16.xpose.msra.mxu0 0
    %1177 = vmatprep.subr.bf16.mxu0 0
    %1178 = vmatpush1.bf16.xpose.msra.mxu0 0
    %1179 = vmatprep.subr.bf16.mxu0 0
    %1180 = vmatpush1.bf16.xpose.msra.mxu0 0
    %1181 = vmatprep.subr.bf16.mxu0 0
    %1182 = vmatpush1.bf16.xpose.msra.mxu0 0
    %1183 = vmatprep.subr.bf16.mxu0 0
    %1184 = vmatpush1.bf16.xpose.msra.mxu0 0
    %1185 = vmatprep.subr.bf16.mxu0 0
    %1186 = vmatpush1.bf16.xpose.msra.mxu0 0
    %1187 = vmatprep.subr.bf16.mxu0 0
    %1188 = vmatpush1.bf16.xpose.msra.mxu0 0
    %1189 = vmatprep.mubr.bf16.mxu0 0
    %1190 = vmatmul.mubr.bf16.gmra.mrb[0].mxu0 %v1152
    %v1191 = vpop.f32.mrb[0].mxu0
    %v1192 = vadd.f32 %v345, %v1191
    %v1193 = vpop.f32.mrb[0].mxu0
    %v1194 = vpop.f32.mrb[0].mxu0
    %v1195 = vpop.f32.mrb[0].mxu0
    %1196 = vdwg.mxu0
    %1197 = vrot.lane.b32.xlu0 %v265, 80
    %v1198 = vpop.permute.xlu0 %1197
    %1199 = vrot.lane.b32.xlu0 %v265, 72
    %v1200 = vpop.permute.xlu0 %1199
    %v1202 = vsel %vm361, %v1198, 0
    %v1205 = vsel %vm361, %v1200, 0
    %1207 = vmatprep.subr.bf16.mxu0 0
    %1208 = vmatpush1.bf16.xpose.msra.mxu0 %v1205
    %1209 = vmatprep.subr.bf16.mxu0 0
    %1210 = vmatpush1.bf16.xpose.msra.mxu0 0
    %1211 = vmatprep.subr.bf16.mxu0 0
    %1212 = vmatpush1.bf16.xpose.msra.mxu0 0
    %1213 = vmatprep.subr.bf16.mxu0 0
    %1214 = vmatpush1.bf16.xpose.msra.mxu0 0
    %1215 = vmatprep.subr.bf16.mxu0 0
    %1216 = vmatpush1.bf16.xpose.msra.mxu0 0
    %1217 = vmatprep.subr.bf16.mxu0 0
    %1218 = vmatpush1.bf16.xpose.msra.mxu0 0
    %1219 = vmatprep.subr.bf16.mxu0 0
    %1220 = vmatpush1.bf16.xpose.msra.mxu0 0
    %1221 = vmatprep.subr.bf16.mxu0 0
    %1222 = vmatpush1.bf16.xpose.msra.mxu0 0
    %1223 = vmatprep.subr.bf16.mxu0 0
    %1224 = vmatpush1.bf16.xpose.msra.mxu0 0
    %1225 = vmatprep.subr.bf16.mxu0 0
    %1226 = vmatpush1.bf16.xpose.msra.mxu0 0
    %1227 = vmatprep.subr.bf16.mxu0 0
    %1228 = vmatpush1.bf16.xpose.msra.mxu0 0
    %1229 = vmatprep.subr.bf16.mxu0 0
    %1230 = vmatpush1.bf16.xpose.msra.mxu0 0
    %1231 = vmatprep.subr.bf16.mxu0 0
    %1232 = vmatpush1.bf16.xpose.msra.mxu0 0
    %1233 = vmatprep.subr.bf16.mxu0 0
    %1234 = vmatpush1.bf16.xpose.msra.mxu0 0
    %1235 = vmatprep.subr.bf16.mxu0 0
    %1236 = vmatpush1.bf16.xpose.msra.mxu0 0
    %1237 = vmatprep.subr.bf16.mxu0 0
    %1238 = vmatpush1.bf16.xpose.msra.mxu0 0
    %1239 = vmatprep.mubr.bf16.mxu0 0
    %1240 = vmatmul.mubr.bf16.gmra.mrb[0].mxu0 %v1202
    %v1241 = vpop.f32.mrb[0].mxu0
    %v1242 = vadd.f32 %v349, %v1241
    %v1243 = vpop.f32.mrb[0].mxu0
    %v1244 = vpop.f32.mrb[0].mxu0
    %v1245 = vpop.f32.mrb[0].mxu0
    %1246 = vdwg.mxu0
    %v1247 = vsel %vm361, %v892, -inf
    %1248 = vmax.xlane.f32.xlu0 %v1247
    %v1249 = vpop.xlane.xlu0 %1248
    %v1250 = vsel %vm361, %v942, -inf
    %1251 = vmax.xlane.f32.xlu0 %v1250
    %v1252 = vpop.xlane.xlu0 %1251
    %v1253 = vsel %vm361, %v992, -inf
    %1254 = vmax.xlane.f32.xlu0 %v1253
    %v1255 = vpop.xlane.xlu0 %1254
    %v1256 = vsel %vm361, %v1042, -inf
    %1257 = vmax.xlane.f32.xlu0 %v1256
    %v1258 = vpop.xlane.xlu0 %1257
    %v1259 = vsel %vm361, %v1092, -inf
    %1260 = vmax.xlane.f32.xlu0 %v1259
    %v1261 = vpop.xlane.xlu0 %1260
    %v1262 = vsel %vm361, %v1142, -inf
    %1263 = vmax.xlane.f32.xlu0 %v1262
    %v1264 = vpop.xlane.xlu0 %1263
    %v1265 = vsel %vm361, %v1192, -inf
    %1266 = vmax.xlane.f32.xlu0 %v1265
    %v1267 = vpop.xlane.xlu0 %1266
    %v1268 = vsel %vm361, %v1242, -inf
    %1269 = vmax.xlane.f32.xlu0 %v1268
    %v1270 = vpop.xlane.xlu0 %1269
    %v1271 = vsub.f32 %v892, %v1249
    %v1272 = vsub.f32 %v942, %v1252
    %v1273 = vsub.f32 %v992, %v1255
    %v1274 = vsub.f32 %v1042, %v1258
    %v1275 = vsub.f32 %v1092, %v1261
    %v1276 = vsub.f32 %v1142, %v1264
    %v1277 = vsub.f32 %v1192, %v1267
    %v1278 = vsub.f32 %v1242, %v1270
    %v1279 = vmul.f32 %v1271, 1.442695
    %v1280 = vpow.pop %v1279
    %v1281 = vmul.f32 %v1272, 1.442695
    %v1282 = vpow.pop %v1281
    %v1283 = vmul.f32 %v1273, 1.442695
    %v1284 = vpow.pop %v1283
    %v1285 = vmul.f32 %v1274, 1.442695
    %v1286 = vpow.pop %v1285
    %v1287 = vmul.f32 %v1275, 1.442695
    %v1288 = vpow.pop %v1287
    %v1289 = vmul.f32 %v1276, 1.442695
    %v1290 = vpow.pop %v1289
    %v1291 = vmul.f32 %v1277, 1.442695
    %v1292 = vpow.pop %v1291
    %v1293 = vmul.f32 %v1278, 1.442695
    %v1294 = vpow.pop %v1293
    %v1295 = vsel %vm361, %v1280, 0.0
    %1296 = vadd.xlane.f32.xlu0 %v1295
    %v1297 = vpop.xlane.xlu0 %1296
    %v1298 = vsel %vm361, %v1282, 0.0
    %1299 = vadd.xlane.f32.xlu0 %v1298
    %v1300 = vpop.xlane.xlu0 %1299
    %v1301 = vsel %vm361, %v1284, 0.0
    %1302 = vadd.xlane.f32.xlu0 %v1301
    %v1303 = vpop.xlane.xlu0 %1302
    %v1304 = vsel %vm361, %v1286, 0.0
    %1305 = vadd.xlane.f32.xlu0 %v1304
    %v1306 = vpop.xlane.xlu0 %1305
    %v1307 = vsel %vm361, %v1288, 0.0
    %1308 = vadd.xlane.f32.xlu0 %v1307
    %v1309 = vpop.xlane.xlu0 %1308
    %v1310 = vsel %vm361, %v1290, 0.0
    %1311 = vadd.xlane.f32.xlu0 %v1310
    %v1312 = vpop.xlane.xlu0 %1311
    %v1313 = vsel %vm361, %v1292, 0.0
    %1314 = vadd.xlane.f32.xlu0 %v1313
    %v1315 = vpop.xlane.xlu0 %1314
    %v1316 = vsel %vm361, %v1294, 0.0
    %1317 = vadd.xlane.f32.xlu0 %v1316
    %v1318 = vpop.xlane.xlu0 %1317
    %v1319 = vrcp.pop %v1297
    %v1320 = vrcp.pop %v1300
    %v1321 = vrcp.pop %v1303
    %v1322 = vrcp.pop %v1306
    %v1323 = vrcp.pop %v1309
    %v1324 = vrcp.pop %v1312
    %v1325 = vrcp.pop %v1315
    %v1326 = vrcp.pop %v1318
    %v1327 = vmul.f32 %v1280, %v1319
    %v1328 = vmul.f32 %v1282, %v1320
    %v1329 = vmul.f32 %v1284, %v1321
    %v1330 = vmul.f32 %v1286, %v1322
    %v1331 = vmul.f32 %v1288, %v1323
    %v1332 = vmul.f32 %v1290, %v1324
    %v1333 = vmul.f32 %v1292, %v1325
    %v1334 = vmul.f32 %v1294, %v1326
    %v1335 = vpack.c.bf16 %v1327, %v1327
    %v1336 = vpack.c.bf16 %v1328, %v1328
    %v1337 = vpack.c.bf16 %v1329, %v1329
    %v1338 = vpack.c.bf16 %v1330, %v1330
    %v1339 = vpack.c.bf16 %v1331, %v1331
    %v1340 = vpack.c.bf16 %v1332, %v1332
    %v1341 = vpack.c.bf16 %v1333, %v1333
    %v1342 = vpack.c.bf16 %v1334, %v1334
    %1343 = vrot.lane.b32.xlu0 %v251, 64
    %v1344 = vpop.permute.xlu0 %1343
    %v1346 = vsel %vm361, %v1335, 0
    %vm1348 = vcmask 1043456
    %v1350 = vsel %vm1348, %v1344, 0
    %1352 = vmatprep.subr.bf16.mxu0 0
    %1353 = vmatpush1.bf16.msra.mxu0 %v1350
    %1354 = vmatprep.subr.bf16.mxu0 0
    %1355 = vmatpush1.bf16.msra.mxu0 0
    %1356 = vmatprep.subr.bf16.mxu0 0
    %1357 = vmatpush1.bf16.msra.mxu0 0
    %1358 = vmatprep.subr.bf16.mxu0 0
    %1359 = vmatpush1.bf16.msra.mxu0 0
    %1360 = vmatprep.subr.bf16.mxu0 0
    %1361 = vmatpush1.bf16.msra.mxu0 0
    %1362 = vmatprep.subr.bf16.mxu0 0
    %1363 = vmatpush1.bf16.msra.mxu0 0
    %1364 = vmatprep.subr.bf16.mxu0 0
    %1365 = vmatpush1.bf16.msra.mxu0 0
    %1366 = vmatprep.subr.bf16.mxu0 0
    %1367 = vmatpush1.bf16.msra.mxu0 0
    %1368 = vmatprep.subr.bf16.mxu0 0
    %1369 = vmatpush1.bf16.msra.mxu0 0
    %1370 = vmatprep.subr.bf16.mxu0 0
    %1371 = vmatpush1.bf16.msra.mxu0 0
    %1372 = vmatprep.subr.bf16.mxu0 0
    %1373 = vmatpush1.bf16.msra.mxu0 0
    %1374 = vmatprep.subr.bf16.mxu0 0
    %1375 = vmatpush1.bf16.msra.mxu0 0
    %1376 = vmatprep.subr.bf16.mxu0 0
    %1377 = vmatpush1.bf16.msra.mxu0 0
    %1378 = vmatprep.subr.bf16.mxu0 0
    %1379 = vmatpush1.bf16.msra.mxu0 0
    %1380 = vmatprep.subr.bf16.mxu0 0
    %1381 = vmatpush1.bf16.msra.mxu0 0
    %1382 = vmatprep.subr.bf16.mxu0 0
    %1383 = vmatpush1.bf16.msra.mxu0 0
    %1384 = vmatprep.mubr.bf16.mxu0 0
    %1385 = vmatmul.mubr.bf16.gmra.mrb[0].mxu0 %v1346
    %v1386 = vpop.f32.mrb[0].mxu0
    %v1387 = vadd.f32 0.0, %v1386
    %v1388 = vpop.f32.mrb[0].mxu0
    %v1389 = vpop.f32.mrb[0].mxu0
    %v1390 = vpop.f32.mrb[0].mxu0
    %1391 = vdwg.mxu0
    %1392 = vrot.lane.b32.xlu0 %v253, 64
    %v1393 = vpop.permute.xlu0 %1392
    %v1395 = vsel %vm361, %v1336, 0
    %v1398 = vsel %vm1348, %v1393, 0
    %1400 = vmatprep.subr.bf16.mxu0 0
    %1401 = vmatpush1.bf16.msra.mxu0 %v1398
    %1402 = vmatprep.subr.bf16.mxu0 0
    %1403 = vmatpush1.bf16.msra.mxu0 0
    %1404 = vmatprep.subr.bf16.mxu0 0
    %1405 = vmatpush1.bf16.msra.mxu0 0
    %1406 = vmatprep.subr.bf16.mxu0 0
    %1407 = vmatpush1.bf16.msra.mxu0 0
    %1408 = vmatprep.subr.bf16.mxu0 0
    %1409 = vmatpush1.bf16.msra.mxu0 0
    %1410 = vmatprep.subr.bf16.mxu0 0
    %1411 = vmatpush1.bf16.msra.mxu0 0
    %1412 = vmatprep.subr.bf16.mxu0 0
    %1413 = vmatpush1.bf16.msra.mxu0 0
    %1414 = vmatprep.subr.bf16.mxu0 0
    %1415 = vmatpush1.bf16.msra.mxu0 0
    %1416 = vmatprep.subr.bf16.mxu0 0
    %1417 = vmatpush1.bf16.msra.mxu0 0
    %1418 = vmatprep.subr.bf16.mxu0 0
    %1419 = vmatpush1.bf16.msra.mxu0 0
    %1420 = vmatprep.subr.bf16.mxu0 0
    %1421 = vmatpush1.bf16.msra.mxu0 0
    %1422 = vmatprep.subr.bf16.mxu0 0
    %1423 = vmatpush1.bf16.msra.mxu0 0
    %1424 = vmatprep.subr.bf16.mxu0 0
    %1425 = vmatpush1.bf16.msra.mxu0 0
    %1426 = vmatprep.subr.bf16.mxu0 0
    %1427 = vmatpush1.bf16.msra.mxu0 0
    %1428 = vmatprep.subr.bf16.mxu0 0
    %1429 = vmatpush1.bf16.msra.mxu0 0
    %1430 = vmatprep.subr.bf16.mxu0 0
    %1431 = vmatpush1.bf16.msra.mxu0 0
    %1432 = vmatprep.mubr.bf16.mxu0 0
    %1433 = vmatmul.mubr.bf16.gmra.mrb[0].mxu0 %v1395
    %v1434 = vpop.f32.mrb[0].mxu0
    %v1435 = vadd.f32 0.0, %v1434
    %v1436 = vpop.f32.mrb[0].mxu0
    %v1437 = vpop.f32.mrb[0].mxu0
    %v1438 = vpop.f32.mrb[0].mxu0
    %1439 = vdwg.mxu0
    %1440 = vrot.lane.b32.xlu0 %v255, 64
    %v1441 = vpop.permute.xlu0 %1440
    %v1443 = vsel %vm361, %v1337, 0
    %v1446 = vsel %vm1348, %v1441, 0
    %1448 = vmatprep.subr.bf16.mxu0 0
    %1449 = vmatpush1.bf16.msra.mxu0 %v1446
    %1450 = vmatprep.subr.bf16.mxu0 0
    %1451 = vmatpush1.bf16.msra.mxu0 0
    %1452 = vmatprep.subr.bf16.mxu0 0
    %1453 = vmatpush1.bf16.msra.mxu0 0
    %1454 = vmatprep.subr.bf16.mxu0 0
    %1455 = vmatpush1.bf16.msra.mxu0 0
    %1456 = vmatprep.subr.bf16.mxu0 0
    %1457 = vmatpush1.bf16.msra.mxu0 0
    %1458 = vmatprep.subr.bf16.mxu0 0
    %1459 = vmatpush1.bf16.msra.mxu0 0
    %1460 = vmatprep.subr.bf16.mxu0 0
    %1461 = vmatpush1.bf16.msra.mxu0 0
    %1462 = vmatprep.subr.bf16.mxu0 0
    %1463 = vmatpush1.bf16.msra.mxu0 0
    %1464 = vmatprep.subr.bf16.mxu0 0
    %1465 = vmatpush1.bf16.msra.mxu0 0
    %1466 = vmatprep.subr.bf16.mxu0 0
    %1467 = vmatpush1.bf16.msra.mxu0 0
    %1468 = vmatprep.subr.bf16.mxu0 0
    %1469 = vmatpush1.bf16.msra.mxu0 0
    %1470 = vmatprep.subr.bf16.mxu0 0
    %1471 = vmatpush1.bf16.msra.mxu0 0
    %1472 = vmatprep.subr.bf16.mxu0 0
    %1473 = vmatpush1.bf16.msra.mxu0 0
    %1474 = vmatprep.subr.bf16.mxu0 0
    %1475 = vmatpush1.bf16.msra.mxu0 0
    %1476 = vmatprep.subr.bf16.mxu0 0
    %1477 = vmatpush1.bf16.msra.mxu0 0
    %1478 = vmatprep.subr.bf16.mxu0 0
    %1479 = vmatpush1.bf16.msra.mxu0 0
    %1480 = vmatprep.mubr.bf16.mxu0 0
    %1481 = vmatmul.mubr.bf16.gmra.mrb[0].mxu0 %v1443
    %v1482 = vpop.f32.mrb[0].mxu0
    %v1483 = vadd.f32 0.0, %v1482
    %v1484 = vpop.f32.mrb[0].mxu0
    %v1485 = vpop.f32.mrb[0].mxu0
    %v1486 = vpop.f32.mrb[0].mxu0
    %1487 = vdwg.mxu0
    %1488 = vrot.lane.b32.xlu0 %v257, 64
    %v1489 = vpop.permute.xlu0 %1488
    %v1491 = vsel %vm361, %v1338, 0
    %v1494 = vsel %vm1348, %v1489, 0
    %1496 = vmatprep.subr.bf16.mxu0 0
    %1497 = vmatpush1.bf16.msra.mxu0 %v1494
    %1498 = vmatprep.subr.bf16.mxu0 0
    %1499 = vmatpush1.bf16.msra.mxu0 0
    %1500 = vmatprep.subr.bf16.mxu0 0
    %1501 = vmatpush1.bf16.msra.mxu0 0
    %1502 = vmatprep.subr.bf16.mxu0 0
    %1503 = vmatpush1.bf16.msra.mxu0 0
    %1504 = vmatprep.subr.bf16.mxu0 0
    %1505 = vmatpush1.bf16.msra.mxu0 0
    %1506 = vmatprep.subr.bf16.mxu0 0
    %1507 = vmatpush1.bf16.msra.mxu0 0
    %1508 = vmatprep.subr.bf16.mxu0 0
    %1509 = vmatpush1.bf16.msra.mxu0 0
    %1510 = vmatprep.subr.bf16.mxu0 0
    %1511 = vmatpush1.bf16.msra.mxu0 0
    %1512 = vmatprep.subr.bf16.mxu0 0
    %1513 = vmatpush1.bf16.msra.mxu0 0
    %1514 = vmatprep.subr.bf16.mxu0 0
    %1515 = vmatpush1.bf16.msra.mxu0 0
    %1516 = vmatprep.subr.bf16.mxu0 0
    %1517 = vmatpush1.bf16.msra.mxu0 0
    %1518 = vmatprep.subr.bf16.mxu0 0
    %1519 = vmatpush1.bf16.msra.mxu0 0
    %1520 = vmatprep.subr.bf16.mxu0 0
    %1521 = vmatpush1.bf16.msra.mxu0 0
    %1522 = vmatprep.subr.bf16.mxu0 0
    %1523 = vmatpush1.bf16.msra.mxu0 0
    %1524 = vmatprep.subr.bf16.mxu0 0
    %1525 = vmatpush1.bf16.msra.mxu0 0
    %1526 = vmatprep.subr.bf16.mxu0 0
    %1527 = vmatpush1.bf16.msra.mxu0 0
    %1528 = vmatprep.mubr.bf16.mxu0 0
    %1529 = vmatmul.mubr.bf16.gmra.mrb[0].mxu0 %v1491
    %v1530 = vpop.f32.mrb[0].mxu0
    %v1531 = vadd.f32 0.0, %v1530
    %v1532 = vpop.f32.mrb[0].mxu0
    %v1533 = vpop.f32.mrb[0].mxu0
    %v1534 = vpop.f32.mrb[0].mxu0
    %1535 = vdwg.mxu0
    %1536 = vrot.lane.b32.xlu0 %v259, 64
    %v1537 = vpop.permute.xlu0 %1536
    %v1539 = vsel %vm361, %v1339, 0
    %v1542 = vsel %vm1348, %v1537, 0
    %1544 = vmatprep.subr.bf16.mxu0 0
    %1545 = vmatpush1.bf16.msra.mxu0 %v1542
    %1546 = vmatprep.subr.bf16.mxu0 0
    %1547 = vmatpush1.bf16.msra.mxu0 0
    %1548 = vmatprep.subr.bf16.mxu0 0
    %1549 = vmatpush1.bf16.msra.mxu0 0
    %1550 = vmatprep.subr.bf16.mxu0 0
    %1551 = vmatpush1.bf16.msra.mxu0 0
    %1552 = vmatprep.subr.bf16.mxu0 0
    %1553 = vmatpush1.bf16.msra.mxu0 0
    %1554 = vmatprep.subr.bf16.mxu0 0
    %1555 = vmatpush1.bf16.msra.mxu0 0
    %1556 = vmatprep.subr.bf16.mxu0 0
    %1557 = vmatpush1.bf16.msra.mxu0 0
    %1558 = vmatprep.subr.bf16.mxu0 0
    %1559 = vmatpush1.bf16.msra.mxu0 0
    %1560 = vmatprep.subr.bf16.mxu0 0
    %1561 = vmatpush1.bf16.msra.mxu0 0
    %1562 = vmatprep.subr.bf16.mxu0 0
    %1563 = vmatpush1.bf16.msra.mxu0 0
    %1564 = vmatprep.subr.bf16.mxu0 0
    %1565 = vmatpush1.bf16.msra.mxu0 0
    %1566 = vmatprep.subr.bf16.mxu0 0
    %1567 = vmatpush1.bf16.msra.mxu0 0
    %1568 = vmatprep.subr.bf16.mxu0 0
    %1569 = vmatpush1.bf16.msra.mxu0 0
    %1570 = vmatprep.subr.bf16.mxu0 0
    %1571 = vmatpush1.bf16.msra.mxu0 0
    %1572 = vmatprep.subr.bf16.mxu0 0
    %1573 = vmatpush1.bf16.msra.mxu0 0
    %1574 = vmatprep.subr.bf16.mxu0 0
    %1575 = vmatpush1.bf16.msra.mxu0 0
    %1576 = vmatprep.mubr.bf16.mxu0 0
    %1577 = vmatmul.mubr.bf16.gmra.mrb[0].mxu0 %v1539
    %v1578 = vpop.f32.mrb[0].mxu0
    %v1579 = vadd.f32 0.0, %v1578
    %v1580 = vpop.f32.mrb[0].mxu0
    %v1581 = vpop.f32.mrb[0].mxu0
    %v1582 = vpop.f32.mrb[0].mxu0
    %1583 = vdwg.mxu0
    %1584 = vrot.lane.b32.xlu0 %v261, 64
    %v1585 = vpop.permute.xlu0 %1584
    %v1587 = vsel %vm361, %v1340, 0
    %v1590 = vsel %vm1348, %v1585, 0
    %1592 = vmatprep.subr.bf16.mxu0 0
    %1593 = vmatpush1.bf16.msra.mxu0 %v1590
    %1594 = vmatprep.subr.bf16.mxu0 0
    %1595 = vmatpush1.bf16.msra.mxu0 0
    %1596 = vmatprep.subr.bf16.mxu0 0
    %1597 = vmatpush1.bf16.msra.mxu0 0
    %1598 = vmatprep.subr.bf16.mxu0 0
    %1599 = vmatpush1.bf16.msra.mxu0 0
    %1600 = vmatprep.subr.bf16.mxu0 0
    %1601 = vmatpush1.bf16.msra.mxu0 0
    %1602 = vmatprep.subr.bf16.mxu0 0
    %1603 = vmatpush1.bf16.msra.mxu0 0
    %1604 = vmatprep.subr.bf16.mxu0 0
    %1605 = vmatpush1.bf16.msra.mxu0 0
    %1606 = vmatprep.subr.bf16.mxu0 0
    %1607 = vmatpush1.bf16.msra.mxu0 0
    %1608 = vmatprep.subr.bf16.mxu0 0
    %1609 = vmatpush1.bf16.msra.mxu0 0
    %1610 = vmatprep.subr.bf16.mxu0 0
    %1611 = vmatpush1.bf16.msra.mxu0 0
    %1612 = vmatprep.subr.bf16.mxu0 0
    %1613 = vmatpush1.bf16.msra.mxu0 0
    %1614 = vmatprep.subr.bf16.mxu0 0
    %1615 = vmatpush1.bf16.msra.mxu0 0
    %1616 = vmatprep.subr.bf16.mxu0 0
    %1617 = vmatpush1.bf16.msra.mxu0 0
    %1618 = vmatprep.subr.bf16.mxu0 0
    %1619 = vmatpush1.bf16.msra.mxu0 0
    %1620 = vmatprep.subr.bf16.mxu0 0
    %1621 = vmatpush1.bf16.msra.mxu0 0
    %1622 = vmatprep.subr.bf16.mxu0 0
    %1623 = vmatpush1.bf16.msra.mxu0 0
    %1624 = vmatprep.mubr.bf16.mxu0 0
    %1625 = vmatmul.mubr.bf16.gmra.mrb[0].mxu0 %v1587
    %v1626 = vpop.f32.mrb[0].mxu0
    %v1627 = vadd.f32 0.0, %v1626
    %v1628 = vpop.f32.mrb[0].mxu0
    %v1629 = vpop.f32.mrb[0].mxu0
    %v1630 = vpop.f32.mrb[0].mxu0
    %1631 = vdwg.mxu0
    %1632 = vrot.lane.b32.xlu0 %v263, 64
    %v1633 = vpop.permute.xlu0 %1632
    %v1635 = vsel %vm361, %v1341, 0
    %v1638 = vsel %vm1348, %v1633, 0
    %1640 = vmatprep.subr.bf16.mxu0 0
    %1641 = vmatpush1.bf16.msra.mxu0 %v1638
    %1642 = vmatprep.subr.bf16.mxu0 0
    %1643 = vmatpush1.bf16.msra.mxu0 0
    %1644 = vmatprep.subr.bf16.mxu0 0
    %1645 = vmatpush1.bf16.msra.mxu0 0
    %1646 = vmatprep.subr.bf16.mxu0 0
    %1647 = vmatpush1.bf16.msra.mxu0 0
    %1648 = vmatprep.subr.bf16.mxu0 0
    %1649 = vmatpush1.bf16.msra.mxu0 0
    %1650 = vmatprep.subr.bf16.mxu0 0
    %1651 = vmatpush1.bf16.msra.mxu0 0
    %1652 = vmatprep.subr.bf16.mxu0 0
    %1653 = vmatpush1.bf16.msra.mxu0 0
    %1654 = vmatprep.subr.bf16.mxu0 0
    %1655 = vmatpush1.bf16.msra.mxu0 0
    %1656 = vmatprep.subr.bf16.mxu0 0
    %1657 = vmatpush1.bf16.msra.mxu0 0
    %1658 = vmatprep.subr.bf16.mxu0 0
    %1659 = vmatpush1.bf16.msra.mxu0 0
    %1660 = vmatprep.subr.bf16.mxu0 0
    %1661 = vmatpush1.bf16.msra.mxu0 0
    %1662 = vmatprep.subr.bf16.mxu0 0
    %1663 = vmatpush1.bf16.msra.mxu0 0
    %1664 = vmatprep.subr.bf16.mxu0 0
    %1665 = vmatpush1.bf16.msra.mxu0 0
    %1666 = vmatprep.subr.bf16.mxu0 0
    %1667 = vmatpush1.bf16.msra.mxu0 0
    %1668 = vmatprep.subr.bf16.mxu0 0
    %1669 = vmatpush1.bf16.msra.mxu0 0
    %1670 = vmatprep.subr.bf16.mxu0 0
    %1671 = vmatpush1.bf16.msra.mxu0 0
    %1672 = vmatprep.mubr.bf16.mxu0 0
    %1673 = vmatmul.mubr.bf16.gmra.mrb[0].mxu0 %v1635
    %v1674 = vpop.f32.mrb[0].mxu0
    %v1675 = vadd.f32 0.0, %v1674
    %v1676 = vpop.f32.mrb[0].mxu0
    %v1677 = vpop.f32.mrb[0].mxu0
    %v1678 = vpop.f32.mrb[0].mxu0
    %1679 = vdwg.mxu0
    %1680 = vrot.lane.b32.xlu0 %v265, 64
    %v1681 = vpop.permute.xlu0 %1680
    %v1683 = vsel %vm361, %v1342, 0
    %v1686 = vsel %vm1348, %v1681, 0
    %1688 = vmatprep.subr.bf16.mxu0 0
    %1689 = vmatpush1.bf16.msra.mxu0 %v1686
    %1690 = vmatprep.subr.bf16.mxu0 0
    %1691 = vmatpush1.bf16.msra.mxu0 0
    %1692 = vmatprep.subr.bf16.mxu0 0
    %1693 = vmatpush1.bf16.msra.mxu0 0
    %1694 = vmatprep.subr.bf16.mxu0 0
    %1695 = vmatpush1.bf16.msra.mxu0 0
    %1696 = vmatprep.subr.bf16.mxu0 0
    %1697 = vmatpush1.bf16.msra.mxu0 0
    %1698 = vmatprep.subr.bf16.mxu0 0
    %1699 = vmatpush1.bf16.msra.mxu0 0
    %1700 = vmatprep.subr.bf16.mxu0 0
    %1701 = vmatpush1.bf16.msra.mxu0 0
    %1702 = vmatprep.subr.bf16.mxu0 0
    %1703 = vmatpush1.bf16.msra.mxu0 0
    %1704 = vmatprep.subr.bf16.mxu0 0
    %1705 = vmatpush1.bf16.msra.mxu0 0
    %1706 = vmatprep.subr.bf16.mxu0 0
    %1707 = vmatpush1.bf16.msra.mxu0 0
    %1708 = vmatprep.subr.bf16.mxu0 0
    %1709 = vmatpush1.bf16.msra.mxu0 0
    %1710 = vmatprep.subr.bf16.mxu0 0
    %1711 = vmatpush1.bf16.msra.mxu0 0
    %1712 = vmatprep.subr.bf16.mxu0 0
    %1713 = vmatpush1.bf16.msra.mxu0 0
    %1714 = vmatprep.subr.bf16.mxu0 0
    %1715 = vmatpush1.bf16.msra.mxu0 0
    %1716 = vmatprep.subr.bf16.mxu0 0
    %1717 = vmatpush1.bf16.msra.mxu0 0
    %1718 = vmatprep.subr.bf16.mxu0 0
    %1719 = vmatpush1.bf16.msra.mxu0 0
    %1720 = vmatprep.mubr.bf16.mxu0 0
    %1721 = vmatmul.mubr.bf16.gmra.mrb[0].mxu0 %v1683
    %v1722 = vpop.f32.mrb[0].mxu0
    %v1723 = vadd.f32 0.0, %v1722
    %v1724 = vpop.f32.mrb[0].mxu0
    %v1725 = vpop.f32.mrb[0].mxu0
    %v1726 = vpop.f32.mrb[0].mxu0
    %1727 = vdwg.mxu0
    %1728 = vrot.lane.b32.xlu0 %v251, 112
    %v1729 = vpop.permute.xlu0 %1728
    %v1731 = vsel %vm361, %v839, 0
    %v1734 = vsel %vm1348, %v1729, 0
    %1736 = vmatprep.subr.bf16.mxu0 0
    %1737 = vmatpush1.bf16.msra.mxu0 %v1734
    %1738 = vmatprep.subr.bf16.mxu0 0
    %1739 = vmatpush1.bf16.msra.mxu0 0
    %1740 = vmatprep.subr.bf16.mxu0 0
    %1741 = vmatpush1.bf16.msra.mxu0 0
    %1742 = vmatprep.subr.bf16.mxu0 0
    %1743 = vmatpush1.bf16.msra.mxu0 0
    %1744 = vmatprep.subr.bf16.mxu0 0
    %1745 = vmatpush1.bf16.msra.mxu0 0
    %1746 = vmatprep.subr.bf16.mxu0 0
    %1747 = vmatpush1.bf16.msra.mxu0 0
    %1748 = vmatprep.subr.bf16.mxu0 0
    %1749 = vmatpush1.bf16.msra.mxu0 0
    %1750 = vmatprep.subr.bf16.mxu0 0
    %1751 = vmatpush1.bf16.msra.mxu0 0
    %1752 = vmatprep.subr.bf16.mxu0 0
    %1753 = vmatpush1.bf16.msra.mxu0 0
    %1754 = vmatprep.subr.bf16.mxu0 0
    %1755 = vmatpush1.bf16.msra.mxu0 0
    %1756 = vmatprep.subr.bf16.mxu0 0
    %1757 = vmatpush1.bf16.msra.mxu0 0
    %1758 = vmatprep.subr.bf16.mxu0 0
    %1759 = vmatpush1.bf16.msra.mxu0 0
    %1760 = vmatprep.subr.bf16.mxu0 0
    %1761 = vmatpush1.bf16.msra.mxu0 0
    %1762 = vmatprep.subr.bf16.mxu0 0
    %1763 = vmatpush1.bf16.msra.mxu0 0
    %1764 = vmatprep.subr.bf16.mxu0 0
    %1765 = vmatpush1.bf16.msra.mxu0 0
    %1766 = vmatprep.subr.bf16.mxu0 0
    %1767 = vmatpush1.bf16.msra.mxu0 0
    %1768 = vmatprep.mubr.bf16.mxu0 0
    %1769 = vmatmul.mubr.bf16.gmra.mrb[0].mxu0 %v1731
    %v1770 = vpop.f32.mrb[0].mxu0
    %v1771 = vadd.f32 %v1387, %v1770
    %v1772 = vpop.f32.mrb[0].mxu0
    %v1773 = vpop.f32.mrb[0].mxu0
    %v1774 = vpop.f32.mrb[0].mxu0
    %1775 = vdwg.mxu0
    %1776 = vrot.lane.b32.xlu0 %v253, 112
    %v1777 = vpop.permute.xlu0 %1776
    %v1779 = vsel %vm361, %v840, 0
    %v1782 = vsel %vm1348, %v1777, 0
    %1784 = vmatprep.subr.bf16.mxu0 0
    %1785 = vmatpush1.bf16.msra.mxu0 %v1782
    %1786 = vmatprep.subr.bf16.mxu0 0
    %1787 = vmatpush1.bf16.msra.mxu0 0
    %1788 = vmatprep.subr.bf16.mxu0 0
    %1789 = vmatpush1.bf16.msra.mxu0 0
    %1790 = vmatprep.subr.bf16.mxu0 0
    %1791 = vmatpush1.bf16.msra.mxu0 0
    %1792 = vmatprep.subr.bf16.mxu0 0
    %1793 = vmatpush1.bf16.msra.mxu0 0
    %1794 = vmatprep.subr.bf16.mxu0 0
    %1795 = vmatpush1.bf16.msra.mxu0 0
    %1796 = vmatprep.subr.bf16.mxu0 0
    %1797 = vmatpush1.bf16.msra.mxu0 0
    %1798 = vmatprep.subr.bf16.mxu0 0
    %1799 = vmatpush1.bf16.msra.mxu0 0
    %1800 = vmatprep.subr.bf16.mxu0 0
    %1801 = vmatpush1.bf16.msra.mxu0 0
    %1802 = vmatprep.subr.bf16.mxu0 0
    %1803 = vmatpush1.bf16.msra.mxu0 0
    %1804 = vmatprep.subr.bf16.mxu0 0
    %1805 = vmatpush1.bf16.msra.mxu0 0
    %1806 = vmatprep.subr.bf16.mxu0 0
    %1807 = vmatpush1.bf16.msra.mxu0 0
    %1808 = vmatprep.subr.bf16.mxu0 0
    %1809 = vmatpush1.bf16.msra.mxu0 0
    %1810 = vmatprep.subr.bf16.mxu0 0
    %1811 = vmatpush1.bf16.msra.mxu0 0
    %1812 = vmatprep.subr.bf16.mxu0 0
    %1813 = vmatpush1.bf16.msra.mxu0 0
    %1814 = vmatprep.subr.bf16.mxu0 0
    %1815 = vmatpush1.bf16.msra.mxu0 0
    %1816 = vmatprep.mubr.bf16.mxu0 0
    %1817 = vmatmul.mubr.bf16.gmra.mrb[0].mxu0 %v1779
    %v1818 = vpop.f32.mrb[0].mxu0
    %v1819 = vadd.f32 %v1435, %v1818
    %v1820 = vpop.f32.mrb[0].mxu0
    %v1821 = vpop.f32.mrb[0].mxu0
    %v1822 = vpop.f32.mrb[0].mxu0
    %1823 = vdwg.mxu0
    %1824 = vrot.lane.b32.xlu0 %v255, 112
    %v1825 = vpop.permute.xlu0 %1824
    %v1827 = vsel %vm361, %v841, 0
    %v1830 = vsel %vm1348, %v1825, 0
    %1832 = vmatprep.subr.bf16.mxu0 0
    %1833 = vmatpush1.bf16.msra.mxu0 %v1830
    %1834 = vmatprep.subr.bf16.mxu0 0
    %1835 = vmatpush1.bf16.msra.mxu0 0
    %1836 = vmatprep.subr.bf16.mxu0 0
    %1837 = vmatpush1.bf16.msra.mxu0 0
    %1838 = vmatprep.subr.bf16.mxu0 0
    %1839 = vmatpush1.bf16.msra.mxu0 0
    %1840 = vmatprep.subr.bf16.mxu0 0
    %1841 = vmatpush1.bf16.msra.mxu0 0
    %1842 = vmatprep.subr.bf16.mxu0 0
    %1843 = vmatpush1.bf16.msra.mxu0 0
    %1844 = vmatprep.subr.bf16.mxu0 0
    %1845 = vmatpush1.bf16.msra.mxu0 0
    %1846 = vmatprep.subr.bf16.mxu0 0
    %1847 = vmatpush1.bf16.msra.mxu0 0
    %1848 = vmatprep.subr.bf16.mxu0 0
    %1849 = vmatpush1.bf16.msra.mxu0 0
    %1850 = vmatprep.subr.bf16.mxu0 0
    %1851 = vmatpush1.bf16.msra.mxu0 0
    %1852 = vmatprep.subr.bf16.mxu0 0
    %1853 = vmatpush1.bf16.msra.mxu0 0
    %1854 = vmatprep.subr.bf16.mxu0 0
    %1855 = vmatpush1.bf16.msra.mxu0 0
    %1856 = vmatprep.subr.bf16.mxu0 0
    %1857 = vmatpush1.bf16.msra.mxu0 0
    %1858 = vmatprep.subr.bf16.mxu0 0
    %1859 = vmatpush1.bf16.msra.mxu0 0
    %1860 = vmatprep.subr.bf16.mxu0 0
    %1861 = vmatpush1.bf16.msra.mxu0 0
    %1862 = vmatprep.subr.bf16.mxu0 0
    %1863 = vmatpush1.bf16.msra.mxu0 0
    %1864 = vmatprep.mubr.bf16.mxu0 0
    %1865 = vmatmul.mubr.bf16.gmra.mrb[0].mxu0 %v1827
    %v1866 = vpop.f32.mrb[0].mxu0
    %v1867 = vadd.f32 %v1483, %v1866
    %v1868 = vpop.f32.mrb[0].mxu0
    %v1869 = vpop.f32.mrb[0].mxu0
    %v1870 = vpop.f32.mrb[0].mxu0
    %1871 = vdwg.mxu0
    %1872 = vrot.lane.b32.xlu0 %v257, 112
    %v1873 = vpop.permute.xlu0 %1872
    %v1875 = vsel %vm361, %v842, 0
    %v1878 = vsel %vm1348, %v1873, 0
    %1880 = vmatprep.subr.bf16.mxu0 0
    %1881 = vmatpush1.bf16.msra.mxu0 %v1878
    %1882 = vmatprep.subr.bf16.mxu0 0
    %1883 = vmatpush1.bf16.msra.mxu0 0
    %1884 = vmatprep.subr.bf16.mxu0 0
    %1885 = vmatpush1.bf16.msra.mxu0 0
    %1886 = vmatprep.subr.bf16.mxu0 0
    %1887 = vmatpush1.bf16.msra.mxu0 0
    %1888 = vmatprep.subr.bf16.mxu0 0
    %1889 = vmatpush1.bf16.msra.mxu0 0
    %1890 = vmatprep.subr.bf16.mxu0 0
    %1891 = vmatpush1.bf16.msra.mxu0 0
    %1892 = vmatprep.subr.bf16.mxu0 0
    %1893 = vmatpush1.bf16.msra.mxu0 0
    %1894 = vmatprep.subr.bf16.mxu0 0
    %1895 = vmatpush1.bf16.msra.mxu0 0
    %1896 = vmatprep.subr.bf16.mxu0 0
    %1897 = vmatpush1.bf16.msra.mxu0 0
    %1898 = vmatprep.subr.bf16.mxu0 0
    %1899 = vmatpush1.bf16.msra.mxu0 0
    %1900 = vmatprep.subr.bf16.mxu0 0
    %1901 = vmatpush1.bf16.msra.mxu0 0
    %1902 = vmatprep.subr.bf16.mxu0 0
    %1903 = vmatpush1.bf16.msra.mxu0 0
    %1904 = vmatprep.subr.bf16.mxu0 0
    %1905 = vmatpush1.bf16.msra.mxu0 0
    %1906 = vmatprep.subr.bf16.mxu0 0
    %1907 = vmatpush1.bf16.msra.mxu0 0
    %1908 = vmatprep.subr.bf16.mxu0 0
    %1909 = vmatpush1.bf16.msra.mxu0 0
    %1910 = vmatprep.subr.bf16.mxu0 0
    %1911 = vmatpush1.bf16.msra.mxu0 0
    %1912 = vmatprep.mubr.bf16.mxu0 0
    %1913 = vmatmul.mubr.bf16.gmra.mrb[0].mxu0 %v1875
    %v1914 = vpop.f32.mrb[0].mxu0
    %v1915 = vadd.f32 %v1531, %v1914
    %v1916 = vpop.f32.mrb[0].mxu0
    %v1917 = vpop.f32.mrb[0].mxu0
    %v1918 = vpop.f32.mrb[0].mxu0
    %1919 = vdwg.mxu0
    %1920 = vrot.lane.b32.xlu0 %v259, 112
    %v1921 = vpop.permute.xlu0 %1920
    %v1923 = vsel %vm361, %v843, 0
    %v1926 = vsel %vm1348, %v1921, 0
    %1928 = vmatprep.subr.bf16.mxu0 0
    %1929 = vmatpush1.bf16.msra.mxu0 %v1926
    %1930 = vmatprep.subr.bf16.mxu0 0
    %1931 = vmatpush1.bf16.msra.mxu0 0
    %1932 = vmatprep.subr.bf16.mxu0 0
    %1933 = vmatpush1.bf16.msra.mxu0 0
    %1934 = vmatprep.subr.bf16.mxu0 0
    %1935 = vmatpush1.bf16.msra.mxu0 0
    %1936 = vmatprep.subr.bf16.mxu0 0
    %1937 = vmatpush1.bf16.msra.mxu0 0
    %1938 = vmatprep.subr.bf16.mxu0 0
    %1939 = vmatpush1.bf16.msra.mxu0 0
    %1940 = vmatprep.subr.bf16.mxu0 0
    %1941 = vmatpush1.bf16.msra.mxu0 0
    %1942 = vmatprep.subr.bf16.mxu0 0
    %1943 = vmatpush1.bf16.msra.mxu0 0
    %1944 = vmatprep.subr.bf16.mxu0 0
    %1945 = vmatpush1.bf16.msra.mxu0 0
    %1946 = vmatprep.subr.bf16.mxu0 0
    %1947 = vmatpush1.bf16.msra.mxu0 0
    %1948 = vmatprep.subr.bf16.mxu0 0
    %1949 = vmatpush1.bf16.msra.mxu0 0
    %1950 = vmatprep.subr.bf16.mxu0 0
    %1951 = vmatpush1.bf16.msra.mxu0 0
    %1952 = vmatprep.subr.bf16.mxu0 0
    %1953 = vmatpush1.bf16.msra.mxu0 0
    %1954 = vmatprep.subr.bf16.mxu0 0
    %1955 = vmatpush1.bf16.msra.mxu0 0
    %1956 = vmatprep.subr.bf16.mxu0 0
    %1957 = vmatpush1.bf16.msra.mxu0 0
    %1958 = vmatprep.subr.bf16.mxu0 0
    %1959 = vmatpush1.bf16.msra.mxu0 0
    %1960 = vmatprep.mubr.bf16.mxu0 0
    %1961 = vmatmul.mubr.bf16.gmra.mrb[0].mxu0 %v1923
    %v1962 = vpop.f32.mrb[0].mxu0
    %v1963 = vadd.f32 %v1579, %v1962
    %v1964 = vpop.f32.mrb[0].mxu0
    %v1965 = vpop.f32.mrb[0].mxu0
    %v1966 = vpop.f32.mrb[0].mxu0
    %1967 = vdwg.mxu0
    %1968 = vrot.lane.b32.xlu0 %v261, 112
    %v1969 = vpop.permute.xlu0 %1968
    %v1971 = vsel %vm361, %v844, 0
    %v1974 = vsel %vm1348, %v1969, 0
    %1976 = vmatprep.subr.bf16.mxu0 0
    %1977 = vmatpush1.bf16.msra.mxu0 %v1974
    %1978 = vmatprep.subr.bf16.mxu0 0
    %1979 = vmatpush1.bf16.msra.mxu0 0
    %1980 = vmatprep.subr.bf16.mxu0 0
    %1981 = vmatpush1.bf16.msra.mxu0 0
    %1982 = vmatprep.subr.bf16.mxu0 0
    %1983 = vmatpush1.bf16.msra.mxu0 0
    %1984 = vmatprep.subr.bf16.mxu0 0
    %1985 = vmatpush1.bf16.msra.mxu0 0
    %1986 = vmatprep.subr.bf16.mxu0 0
    %1987 = vmatpush1.bf16.msra.mxu0 0
    %1988 = vmatprep.subr.bf16.mxu0 0
    %1989 = vmatpush1.bf16.msra.mxu0 0
    %1990 = vmatprep.subr.bf16.mxu0 0
    %1991 = vmatpush1.bf16.msra.mxu0 0
    %1992 = vmatprep.subr.bf16.mxu0 0
    %1993 = vmatpush1.bf16.msra.mxu0 0
    %1994 = vmatprep.subr.bf16.mxu0 0
    %1995 = vmatpush1.bf16.msra.mxu0 0
    %1996 = vmatprep.subr.bf16.mxu0 0
    %1997 = vmatpush1.bf16.msra.mxu0 0
    %1998 = vmatprep.subr.bf16.mxu0 0
    %1999 = vmatpush1.bf16.msra.mxu0 0
    %2000 = vmatprep.subr.bf16.mxu0 0
    %2001 = vmatpush1.bf16.msra.mxu0 0
    %2002 = vmatprep.subr.bf16.mxu0 0
    %2003 = vmatpush1.bf16.msra.mxu0 0
    %2004 = vmatprep.subr.bf16.mxu0 0
    %2005 = vmatpush1.bf16.msra.mxu0 0
    %2006 = vmatprep.subr.bf16.mxu0 0
    %2007 = vmatpush1.bf16.msra.mxu0 0
    %2008 = vmatprep.mubr.bf16.mxu0 0
    %2009 = vmatmul.mubr.bf16.gmra.mrb[0].mxu0 %v1971
    %v2010 = vpop.f32.mrb[0].mxu0
    %v2011 = vadd.f32 %v1627, %v2010
    %v2012 = vpop.f32.mrb[0].mxu0
    %v2013 = vpop.f32.mrb[0].mxu0
    %v2014 = vpop.f32.mrb[0].mxu0
    %2015 = vdwg.mxu0
    %2016 = vrot.lane.b32.xlu0 %v263, 112
    %v2017 = vpop.permute.xlu0 %2016
    %v2019 = vsel %vm361, %v845, 0
    %v2022 = vsel %vm1348, %v2017, 0
    %2024 = vmatprep.subr.bf16.mxu0 0
    %2025 = vmatpush1.bf16.msra.mxu0 %v2022
    %2026 = vmatprep.subr.bf16.mxu0 0
    %2027 = vmatpush1.bf16.msra.mxu0 0
    %2028 = vmatprep.subr.bf16.mxu0 0
    %2029 = vmatpush1.bf16.msra.mxu0 0
    %2030 = vmatprep.subr.bf16.mxu0 0
    %2031 = vmatpush1.bf16.msra.mxu0 0
    %2032 = vmatprep.subr.bf16.mxu0 0
    %2033 = vmatpush1.bf16.msra.mxu0 0
    %2034 = vmatprep.subr.bf16.mxu0 0
    %2035 = vmatpush1.bf16.msra.mxu0 0
    %2036 = vmatprep.subr.bf16.mxu0 0
    %2037 = vmatpush1.bf16.msra.mxu0 0
    %2038 = vmatprep.subr.bf16.mxu0 0
    %2039 = vmatpush1.bf16.msra.mxu0 0
    %2040 = vmatprep.subr.bf16.mxu0 0
    %2041 = vmatpush1.bf16.msra.mxu0 0
    %2042 = vmatprep.subr.bf16.mxu0 0
    %2043 = vmatpush1.bf16.msra.mxu0 0
    %2044 = vmatprep.subr.bf16.mxu0 0
    %2045 = vmatpush1.bf16.msra.mxu0 0
    %2046 = vmatprep.subr.bf16.mxu0 0
    %2047 = vmatpush1.bf16.msra.mxu0 0
    %2048 = vmatprep.subr.bf16.mxu0 0
    %2049 = vmatpush1.bf16.msra.mxu0 0
    %2050 = vmatprep.subr.bf16.mxu0 0
    %2051 = vmatpush1.bf16.msra.mxu0 0
    %2052 = vmatprep.subr.bf16.mxu0 0
    %2053 = vmatpush1.bf16.msra.mxu0 0
    %2054 = vmatprep.subr.bf16.mxu0 0
    %2055 = vmatpush1.bf16.msra.mxu0 0
    %2056 = vmatprep.mubr.bf16.mxu0 0
    %2057 = vmatmul.mubr.bf16.gmra.mrb[0].mxu0 %v2019
    %v2058 = vpop.f32.mrb[0].mxu0
    %v2059 = vadd.f32 %v1675, %v2058
    %v2060 = vpop.f32.mrb[0].mxu0
    %v2061 = vpop.f32.mrb[0].mxu0
    %v2062 = vpop.f32.mrb[0].mxu0
    %2063 = vdwg.mxu0
    %2064 = vrot.lane.b32.xlu0 %v265, 112
    %v2065 = vpop.permute.xlu0 %2064
    %v2067 = vsel %vm361, %v846, 0
    %v2070 = vsel %vm1348, %v2065, 0
    %2072 = vmatprep.subr.bf16.mxu0 0
    %2073 = vmatpush1.bf16.msra.mxu0 %v2070
    %2074 = vmatprep.subr.bf16.mxu0 0
    %2075 = vmatpush1.bf16.msra.mxu0 0
    %2076 = vmatprep.subr.bf16.mxu0 0
    %2077 = vmatpush1.bf16.msra.mxu0 0
    %2078 = vmatprep.subr.bf16.mxu0 0
    %2079 = vmatpush1.bf16.msra.mxu0 0
    %2080 = vmatprep.subr.bf16.mxu0 0
    %2081 = vmatpush1.bf16.msra.mxu0 0
    %2082 = vmatprep.subr.bf16.mxu0 0
    %2083 = vmatpush1.bf16.msra.mxu0 0
    %2084 = vmatprep.subr.bf16.mxu0 0
    %2085 = vmatpush1.bf16.msra.mxu0 0
    %2086 = vmatprep.subr.bf16.mxu0 0
    %2087 = vmatpush1.bf16.msra.mxu0 0
    %2088 = vmatprep.subr.bf16.mxu0 0
    %2089 = vmatpush1.bf16.msra.mxu0 0
    %2090 = vmatprep.subr.bf16.mxu0 0
    %2091 = vmatpush1.bf16.msra.mxu0 0
    %2092 = vmatprep.subr.bf16.mxu0 0
    %2093 = vmatpush1.bf16.msra.mxu0 0
    %2094 = vmatprep.subr.bf16.mxu0 0
    %2095 = vmatpush1.bf16.msra.mxu0 0
    %2096 = vmatprep.subr.bf16.mxu0 0
    %2097 = vmatpush1.bf16.msra.mxu0 0
    %2098 = vmatprep.subr.bf16.mxu0 0
    %2099 = vmatpush1.bf16.msra.mxu0 0
    %2100 = vmatprep.subr.bf16.mxu0 0
    %2101 = vmatpush1.bf16.msra.mxu0 0
    %2102 = vmatprep.subr.bf16.mxu0 0
    %2103 = vmatpush1.bf16.msra.mxu0 0
    %2104 = vmatprep.mubr.bf16.mxu0 0
    %2105 = vmatmul.mubr.bf16.gmra.mrb[0].mxu0 %v2067
    %v2106 = vpop.f32.mrb[0].mxu0
    %v2107 = vadd.f32 %v1723, %v2106
    %v2108 = vpop.f32.mrb[0].mxu0
    %v2109 = vpop.f32.mrb[0].mxu0
    %v2110 = vpop.f32.mrb[0].mxu0
    %2111 = vdwg.mxu0
    %2112 = vrot.lane.b32.xlu0 %v251, 32
    %v2113 = vpop.permute.xlu0 %2112
    %2114 = vrot.lane.b32.xlu0 %v251, 24
    %v2115 = vpop.permute.xlu0 %2114
    %v2117 = vsel %vm361, %v2113, 0
    %v2120 = vsel %vm361, %v2115, 0
    %2122 = vmatprep.subr.bf16.mxu0 0
    %2123 = vmatpush1.bf16.xpose.msra.mxu0 %v2120
    %2124 = vmatprep.subr.bf16.mxu0 0
    %2125 = vmatpush1.bf16.xpose.msra.mxu0 0
    %2126 = vmatprep.subr.bf16.mxu0 0
    %2127 = vmatpush1.bf16.xpose.msra.mxu0 0
    %2128 = vmatprep.subr.bf16.mxu0 0
    %2129 = vmatpush1.bf16.xpose.msra.mxu0 0
    %2130 = vmatprep.subr.bf16.mxu0 0
    %2131 = vmatpush1.bf16.xpose.msra.mxu0 0
    %2132 = vmatprep.subr.bf16.mxu0 0
    %2133 = vmatpush1.bf16.xpose.msra.mxu0 0
    %2134 = vmatprep.subr.bf16.mxu0 0
    %2135 = vmatpush1.bf16.xpose.msra.mxu0 0
    %2136 = vmatprep.subr.bf16.mxu0 0
    %2137 = vmatpush1.bf16.xpose.msra.mxu0 0
    %2138 = vmatprep.subr.bf16.mxu0 0
    %2139 = vmatpush1.bf16.xpose.msra.mxu0 0
    %2140 = vmatprep.subr.bf16.mxu0 0
    %2141 = vmatpush1.bf16.xpose.msra.mxu0 0
    %2142 = vmatprep.subr.bf16.mxu0 0
    %2143 = vmatpush1.bf16.xpose.msra.mxu0 0
    %2144 = vmatprep.subr.bf16.mxu0 0
    %2145 = vmatpush1.bf16.xpose.msra.mxu0 0
    %2146 = vmatprep.subr.bf16.mxu0 0
    %2147 = vmatpush1.bf16.xpose.msra.mxu0 0
    %2148 = vmatprep.subr.bf16.mxu0 0
    %2149 = vmatpush1.bf16.xpose.msra.mxu0 0
    %2150 = vmatprep.subr.bf16.mxu0 0
    %2151 = vmatpush1.bf16.xpose.msra.mxu0 0
    %2152 = vmatprep.subr.bf16.mxu0 0
    %2153 = vmatpush1.bf16.xpose.msra.mxu0 0
    %2154 = vmatprep.mubr.bf16.mxu0 0
    %2155 = vmatmul.mubr.bf16.gmra.mrb[0].mxu0 %v2117
    %v2156 = vpop.f32.mrb[0].mxu0
    %v2157 = vadd.f32 %v321, %v2156
    %v2158 = vpop.f32.mrb[0].mxu0
    %v2159 = vpop.f32.mrb[0].mxu0
    %v2160 = vpop.f32.mrb[0].mxu0
    %2161 = vdwg.mxu0
    %2162 = vrot.lane.b32.xlu0 %v253, 32
    %v2163 = vpop.permute.xlu0 %2162
    %2164 = vrot.lane.b32.xlu0 %v253, 24
    %v2165 = vpop.permute.xlu0 %2164
    %v2167 = vsel %vm361, %v2163, 0
    %v2170 = vsel %vm361, %v2165, 0
    %2172 = vmatprep.subr.bf16.mxu0 0
    %2173 = vmatpush1.bf16.xpose.msra.mxu0 %v2170
    %2174 = vmatprep.subr.bf16.mxu0 0
    %2175 = vmatpush1.bf16.xpose.msra.mxu0 0
    %2176 = vmatprep.subr.bf16.mxu0 0
    %2177 = vmatpush1.bf16.xpose.msra.mxu0 0
    %2178 = vmatprep.subr.bf16.mxu0 0
    %2179 = vmatpush1.bf16.xpose.msra.mxu0 0
    %2180 = vmatprep.subr.bf16.mxu0 0
    %2181 = vmatpush1.bf16.xpose.msra.mxu0 0
    %2182 = vmatprep.subr.bf16.mxu0 0
    %2183 = vmatpush1.bf16.xpose.msra.mxu0 0
    %2184 = vmatprep.subr.bf16.mxu0 0
    %2185 = vmatpush1.bf16.xpose.msra.mxu0 0
    %2186 = vmatprep.subr.bf16.mxu0 0
    %2187 = vmatpush1.bf16.xpose.msra.mxu0 0
    %2188 = vmatprep.subr.bf16.mxu0 0
    %2189 = vmatpush1.bf16.xpose.msra.mxu0 0
    %2190 = vmatprep.subr.bf16.mxu0 0
    %2191 = vmatpush1.bf16.xpose.msra.mxu0 0
    %2192 = vmatprep.subr.bf16.mxu0 0
    %2193 = vmatpush1.bf16.xpose.msra.mxu0 0
    %2194 = vmatprep.subr.bf16.mxu0 0
    %2195 = vmatpush1.bf16.xpose.msra.mxu0 0
    %2196 = vmatprep.subr.bf16.mxu0 0
    %2197 = vmatpush1.bf16.xpose.msra.mxu0 0
    %2198 = vmatprep.subr.bf16.mxu0 0
    %2199 = vmatpush1.bf16.xpose.msra.mxu0 0
    %2200 = vmatprep.subr.bf16.mxu0 0
    %2201 = vmatpush1.bf16.xpose.msra.mxu0 0
    %2202 = vmatprep.subr.bf16.mxu0 0
    %2203 = vmatpush1.bf16.xpose.msra.mxu0 0
    %2204 = vmatprep.mubr.bf16.mxu0 0
    %2205 = vmatmul.mubr.bf16.gmra.mrb[0].mxu0 %v2167
    %v2206 = vpop.f32.mrb[0].mxu0
    %v2207 = vadd.f32 %v325, %v2206
    %v2208 = vpop.f32.mrb[0].mxu0
    %v2209 = vpop.f32.mrb[0].mxu0
    %v2210 = vpop.f32.mrb[0].mxu0
    %2211 = vdwg.mxu0
    %2212 = vrot.lane.b32.xlu0 %v255, 32
    %v2213 = vpop.permute.xlu0 %2212
    %2214 = vrot.lane.b32.xlu0 %v255, 24
    %v2215 = vpop.permute.xlu0 %2214
    %v2217 = vsel %vm361, %v2213, 0
    %v2220 = vsel %vm361, %v2215, 0
    %2222 = vmatprep.subr.bf16.mxu0 0
    %2223 = vmatpush1.bf16.xpose.msra.mxu0 %v2220
    %2224 = vmatprep.subr.bf16.mxu0 0
    %2225 = vmatpush1.bf16.xpose.msra.mxu0 0
    %2226 = vmatprep.subr.bf16.mxu0 0
    %2227 = vmatpush1.bf16.xpose.msra.mxu0 0
    %2228 = vmatprep.subr.bf16.mxu0 0
    %2229 = vmatpush1.bf16.xpose.msra.mxu0 0
    %2230 = vmatprep.subr.bf16.mxu0 0
    %2231 = vmatpush1.bf16.xpose.msra.mxu0 0
    %2232 = vmatprep.subr.bf16.mxu0 0
    %2233 = vmatpush1.bf16.xpose.msra.mxu0 0
    %2234 = vmatprep.subr.bf16.mxu0 0
    %2235 = vmatpush1.bf16.xpose.msra.mxu0 0
    %2236 = vmatprep.subr.bf16.mxu0 0
    %2237 = vmatpush1.bf16.xpose.msra.mxu0 0
    %2238 = vmatprep.subr.bf16.mxu0 0
    %2239 = vmatpush1.bf16.xpose.msra.mxu0 0
    %2240 = vmatprep.subr.bf16.mxu0 0
    %2241 = vmatpush1.bf16.xpose.msra.mxu0 0
    %2242 = vmatprep.subr.bf16.mxu0 0
    %2243 = vmatpush1.bf16.xpose.msra.mxu0 0
    %2244 = vmatprep.subr.bf16.mxu0 0
    %2245 = vmatpush1.bf16.xpose.msra.mxu0 0
    %2246 = vmatprep.subr.bf16.mxu0 0
    %2247 = vmatpush1.bf16.xpose.msra.mxu0 0
    %2248 = vmatprep.subr.bf16.mxu0 0
    %2249 = vmatpush1.bf16.xpose.msra.mxu0 0
    %2250 = vmatprep.subr.bf16.mxu0 0
    %2251 = vmatpush1.bf16.xpose.msra.mxu0 0
    %2252 = vmatprep.subr.bf16.mxu0 0
    %2253 = vmatpush1.bf16.xpose.msra.mxu0 0
    %2254 = vmatprep.mubr.bf16.mxu0 0
    %2255 = vmatmul.mubr.bf16.gmra.mrb[0].mxu0 %v2217
    %v2256 = vpop.f32.mrb[0].mxu0
    %v2257 = vadd.f32 %v329, %v2256
    %v2258 = vpop.f32.mrb[0].mxu0
    %v2259 = vpop.f32.mrb[0].mxu0
    %v2260 = vpop.f32.mrb[0].mxu0
    %2261 = vdwg.mxu0
    %2262 = vrot.lane.b32.xlu0 %v257, 32
    %v2263 = vpop.permute.xlu0 %2262
    %2264 = vrot.lane.b32.xlu0 %v257, 24
    %v2265 = vpop.permute.xlu0 %2264
    %v2267 = vsel %vm361, %v2263, 0
    %v2270 = vsel %vm361, %v2265, 0
    %2272 = vmatprep.subr.bf16.mxu0 0
    %2273 = vmatpush1.bf16.xpose.msra.mxu0 %v2270
    %2274 = vmatprep.subr.bf16.mxu0 0
    %2275 = vmatpush1.bf16.xpose.msra.mxu0 0
    %2276 = vmatprep.subr.bf16.mxu0 0
    %2277 = vmatpush1.bf16.xpose.msra.mxu0 0
    %2278 = vmatprep.subr.bf16.mxu0 0
    %2279 = vmatpush1.bf16.xpose.msra.mxu0 0
    %2280 = vmatprep.subr.bf16.mxu0 0
    %2281 = vmatpush1.bf16.xpose.msra.mxu0 0
    %2282 = vmatprep.subr.bf16.mxu0 0
    %2283 = vmatpush1.bf16.xpose.msra.mxu0 0
    %2284 = vmatprep.subr.bf16.mxu0 0
    %2285 = vmatpush1.bf16.xpose.msra.mxu0 0
    %2286 = vmatprep.subr.bf16.mxu0 0
    %2287 = vmatpush1.bf16.xpose.msra.mxu0 0
    %2288 = vmatprep.subr.bf16.mxu0 0
    %2289 = vmatpush1.bf16.xpose.msra.mxu0 0
    %2290 = vmatprep.subr.bf16.mxu0 0
    %2291 = vmatpush1.bf16.xpose.msra.mxu0 0
    %2292 = vmatprep.subr.bf16.mxu0 0
    %2293 = vmatpush1.bf16.xpose.msra.mxu0 0
    %2294 = vmatprep.subr.bf16.mxu0 0
    %2295 = vmatpush1.bf16.xpose.msra.mxu0 0
    %2296 = vmatprep.subr.bf16.mxu0 0
    %2297 = vmatpush1.bf16.xpose.msra.mxu0 0
    %2298 = vmatprep.subr.bf16.mxu0 0
    %2299 = vmatpush1.bf16.xpose.msra.mxu0 0
    %2300 = vmatprep.subr.bf16.mxu0 0
    %2301 = vmatpush1.bf16.xpose.msra.mxu0 0
    %2302 = vmatprep.subr.bf16.mxu0 0
    %2303 = vmatpush1.bf16.xpose.msra.mxu0 0
    %2304 = vmatprep.mubr.bf16.mxu0 0
    %2305 = vmatmul.mubr.bf16.gmra.mrb[0].mxu0 %v2267
    %v2306 = vpop.f32.mrb[0].mxu0
    %v2307 = vadd.f32 %v333, %v2306
    %v2308 = vpop.f32.mrb[0].mxu0
    %v2309 = vpop.f32.mrb[0].mxu0
    %v2310 = vpop.f32.mrb[0].mxu0
    %2311 = vdwg.mxu0
    %2312 = vrot.lane.b32.xlu0 %v259, 32
    %v2313 = vpop.permute.xlu0 %2312
    %2314 = vrot.lane.b32.xlu0 %v259, 24
    %v2315 = vpop.permute.xlu0 %2314
    %v2317 = vsel %vm361, %v2313, 0
    %v2320 = vsel %vm361, %v2315, 0
    %2322 = vmatprep.subr.bf16.mxu0 0
    %2323 = vmatpush1.bf16.xpose.msra.mxu0 %v2320
    %2324 = vmatprep.subr.bf16.mxu0 0
    %2325 = vmatpush1.bf16.xpose.msra.mxu0 0
    %2326 = vmatprep.subr.bf16.mxu0 0
    %2327 = vmatpush1.bf16.xpose.msra.mxu0 0
    %2328 = vmatprep.subr.bf16.mxu0 0
    %2329 = vmatpush1.bf16.xpose.msra.mxu0 0
    %2330 = vmatprep.subr.bf16.mxu0 0
    %2331 = vmatpush1.bf16.xpose.msra.mxu0 0
    %2332 = vmatprep.subr.bf16.mxu0 0
    %2333 = vmatpush1.bf16.xpose.msra.mxu0 0
    %2334 = vmatprep.subr.bf16.mxu0 0
    %2335 = vmatpush1.bf16.xpose.msra.mxu0 0
    %2336 = vmatprep.subr.bf16.mxu0 0
    %2337 = vmatpush1.bf16.xpose.msra.mxu0 0
    %2338 = vmatprep.subr.bf16.mxu0 0
    %2339 = vmatpush1.bf16.xpose.msra.mxu0 0
    %2340 = vmatprep.subr.bf16.mxu0 0
    %2341 = vmatpush1.bf16.xpose.msra.mxu0 0
    %2342 = vmatprep.subr.bf16.mxu0 0
    %2343 = vmatpush1.bf16.xpose.msra.mxu0 0
    %2344 = vmatprep.subr.bf16.mxu0 0
    %2345 = vmatpush1.bf16.xpose.msra.mxu0 0
    %2346 = vmatprep.subr.bf16.mxu0 0
    %2347 = vmatpush1.bf16.xpose.msra.mxu0 0
    %2348 = vmatprep.subr.bf16.mxu0 0
    %2349 = vmatpush1.bf16.xpose.msra.mxu0 0
    %2350 = vmatprep.subr.bf16.mxu0 0
    %2351 = vmatpush1.bf16.xpose.msra.mxu0 0
    %2352 = vmatprep.subr.bf16.mxu0 0
    %2353 = vmatpush1.bf16.xpose.msra.mxu0 0
    %2354 = vmatprep.mubr.bf16.mxu0 0
    %2355 = vmatmul.mubr.bf16.gmra.mrb[0].mxu0 %v2317
    %v2356 = vpop.f32.mrb[0].mxu0
    %v2357 = vadd.f32 %v337, %v2356
    %v2358 = vpop.f32.mrb[0].mxu0
    %v2359 = vpop.f32.mrb[0].mxu0
    %v2360 = vpop.f32.mrb[0].mxu0
    %2361 = vdwg.mxu0
    %2362 = vrot.lane.b32.xlu0 %v261, 32
    %v2363 = vpop.permute.xlu0 %2362
    %2364 = vrot.lane.b32.xlu0 %v261, 24
    %v2365 = vpop.permute.xlu0 %2364
    %v2367 = vsel %vm361, %v2363, 0
    %v2370 = vsel %vm361, %v2365, 0
    %2372 = vmatprep.subr.bf16.mxu0 0
    %2373 = vmatpush1.bf16.xpose.msra.mxu0 %v2370
    %2374 = vmatprep.subr.bf16.mxu0 0
    %2375 = vmatpush1.bf16.xpose.msra.mxu0 0
    %2376 = vmatprep.subr.bf16.mxu0 0
    %2377 = vmatpush1.bf16.xpose.msra.mxu0 0
    %2378 = vmatprep.subr.bf16.mxu0 0
    %2379 = vmatpush1.bf16.xpose.msra.mxu0 0
    %2380 = vmatprep.subr.bf16.mxu0 0
    %2381 = vmatpush1.bf16.xpose.msra.mxu0 0
    %2382 = vmatprep.subr.bf16.mxu0 0
    %2383 = vmatpush1.bf16.xpose.msra.mxu0 0
    %2384 = vmatprep.subr.bf16.mxu0 0
    %2385 = vmatpush1.bf16.xpose.msra.mxu0 0
    %2386 = vmatprep.subr.bf16.mxu0 0
    %2387 = vmatpush1.bf16.xpose.msra.mxu0 0
    %2388 = vmatprep.subr.bf16.mxu0 0
    %2389 = vmatpush1.bf16.xpose.msra.mxu0 0
    %2390 = vmatprep.subr.bf16.mxu0 0
    %2391 = vmatpush1.bf16.xpose.msra.mxu0 0
    %2392 = vmatprep.subr.bf16.mxu0 0
    %2393 = vmatpush1.bf16.xpose.msra.mxu0 0
    %2394 = vmatprep.subr.bf16.mxu0 0
    %2395 = vmatpush1.bf16.xpose.msra.mxu0 0
    %2396 = vmatprep.subr.bf16.mxu0 0
    %2397 = vmatpush1.bf16.xpose.msra.mxu0 0
    %2398 = vmatprep.subr.bf16.mxu0 0
    %2399 = vmatpush1.bf16.xpose.msra.mxu0 0
    %2400 = vmatprep.subr.bf16.mxu0 0
    %2401 = vmatpush1.bf16.xpose.msra.mxu0 0
    %2402 = vmatprep.subr.bf16.mxu0 0
    %2403 = vmatpush1.bf16.xpose.msra.mxu0 0
    %2404 = vmatprep.mubr.bf16.mxu0 0
    %2405 = vmatmul.mubr.bf16.gmra.mrb[0].mxu0 %v2367
    %v2406 = vpop.f32.mrb[0].mxu0
    %v2407 = vadd.f32 %v341, %v2406
    %v2408 = vpop.f32.mrb[0].mxu0
    %v2409 = vpop.f32.mrb[0].mxu0
    %v2410 = vpop.f32.mrb[0].mxu0
    %2411 = vdwg.mxu0
    %2412 = vrot.lane.b32.xlu0 %v263, 32
    %v2413 = vpop.permute.xlu0 %2412
    %2414 = vrot.lane.b32.xlu0 %v263, 24
    %v2415 = vpop.permute.xlu0 %2414
    %v2417 = vsel %vm361, %v2413, 0
    %v2420 = vsel %vm361, %v2415, 0
    %2422 = vmatprep.subr.bf16.mxu0 0
    %2423 = vmatpush1.bf16.xpose.msra.mxu0 %v2420
    %2424 = vmatprep.subr.bf16.mxu0 0
    %2425 = vmatpush1.bf16.xpose.msra.mxu0 0
    %2426 = vmatprep.subr.bf16.mxu0 0
    %2427 = vmatpush1.bf16.xpose.msra.mxu0 0
    %2428 = vmatprep.subr.bf16.mxu0 0
    %2429 = vmatpush1.bf16.xpose.msra.mxu0 0
    %2430 = vmatprep.subr.bf16.mxu0 0
    %2431 = vmatpush1.bf16.xpose.msra.mxu0 0
    %2432 = vmatprep.subr.bf16.mxu0 0
    %2433 = vmatpush1.bf16.xpose.msra.mxu0 0
    %2434 = vmatprep.subr.bf16.mxu0 0
    %2435 = vmatpush1.bf16.xpose.msra.mxu0 0
    %2436 = vmatprep.subr.bf16.mxu0 0
    %2437 = vmatpush1.bf16.xpose.msra.mxu0 0
    %2438 = vmatprep.subr.bf16.mxu0 0
    %2439 = vmatpush1.bf16.xpose.msra.mxu0 0
    %2440 = vmatprep.subr.bf16.mxu0 0
    %2441 = vmatpush1.bf16.xpose.msra.mxu0 0
    %2442 = vmatprep.subr.bf16.mxu0 0
    %2443 = vmatpush1.bf16.xpose.msra.mxu0 0
    %2444 = vmatprep.subr.bf16.mxu0 0
    %2445 = vmatpush1.bf16.xpose.msra.mxu0 0
    %2446 = vmatprep.subr.bf16.mxu0 0
    %2447 = vmatpush1.bf16.xpose.msra.mxu0 0
    %2448 = vmatprep.subr.bf16.mxu0 0
    %2449 = vmatpush1.bf16.xpose.msra.mxu0 0
    %2450 = vmatprep.subr.bf16.mxu0 0
    %2451 = vmatpush1.bf16.xpose.msra.mxu0 0
    %2452 = vmatprep.subr.bf16.mxu0 0
    %2453 = vmatpush1.bf16.xpose.msra.mxu0 0
    %2454 = vmatprep.mubr.bf16.mxu0 0
    %2455 = vmatmul.mubr.bf16.gmra.mrb[0].mxu0 %v2417
    %v2456 = vpop.f32.mrb[0].mxu0
    %v2457 = vadd.f32 %v345, %v2456
    %v2458 = vpop.f32.mrb[0].mxu0
    %v2459 = vpop.f32.mrb[0].mxu0
    %v2460 = vpop.f32.mrb[0].mxu0
    %2461 = vdwg.mxu0
    %2462 = vrot.lane.b32.xlu0 %v265, 32
    %v2463 = vpop.permute.xlu0 %2462
    %2464 = vrot.lane.b32.xlu0 %v265, 24
    %v2465 = vpop.permute.xlu0 %2464
    %v2467 = vsel %vm361, %v2463, 0
    %v2470 = vsel %vm361, %v2465, 0
    %2472 = vmatprep.subr.bf16.mxu0 0
    %2473 = vmatpush1.bf16.xpose.msra.mxu0 %v2470
    %2474 = vmatprep.subr.bf16.mxu0 0
    %2475 = vmatpush1.bf16.xpose.msra.mxu0 0
    %2476 = vmatprep.subr.bf16.mxu0 0
    %2477 = vmatpush1.bf16.xpose.msra.mxu0 0
    %2478 = vmatprep.subr.bf16.mxu0 0
    %2479 = vmatpush1.bf16.xpose.msra.mxu0 0
    %2480 = vmatprep.subr.bf16.mxu0 0
    %2481 = vmatpush1.bf16.xpose.msra.mxu0 0
    %2482 = vmatprep.subr.bf16.mxu0 0
    %2483 = vmatpush1.bf16.xpose.msra.mxu0 0
    %2484 = vmatprep.subr.bf16.mxu0 0
    %2485 = vmatpush1.bf16.xpose.msra.mxu0 0
    %2486 = vmatprep.subr.bf16.mxu0 0
    %2487 = vmatpush1.bf16.xpose.msra.mxu0 0
    %2488 = vmatprep.subr.bf16.mxu0 0
    %2489 = vmatpush1.bf16.xpose.msra.mxu0 0
    %2490 = vmatprep.subr.bf16.mxu0 0
    %2491 = vmatpush1.bf16.xpose.msra.mxu0 0
    %2492 = vmatprep.subr.bf16.mxu0 0
    %2493 = vmatpush1.bf16.xpose.msra.mxu0 0
    %2494 = vmatprep.subr.bf16.mxu0 0
    %2495 = vmatpush1.bf16.xpose.msra.mxu0 0
    %2496 = vmatprep.subr.bf16.mxu0 0
    %2497 = vmatpush1.bf16.xpose.msra.mxu0 0
    %2498 = vmatprep.subr.bf16.mxu0 0
    %2499 = vmatpush1.bf16.xpose.msra.mxu0 0
    %2500 = vmatprep.subr.bf16.mxu0 0
    %2501 = vmatpush1.bf16.xpose.msra.mxu0 0
    %2502 = vmatprep.subr.bf16.mxu0 0
    %2503 = vmatpush1.bf16.xpose.msra.mxu0 0
    %2504 = vmatprep.mubr.bf16.mxu0 0
    %2505 = vmatmul.mubr.bf16.gmra.mrb[0].mxu0 %v2467
    %v2506 = vpop.f32.mrb[0].mxu0
    %v2507 = vadd.f32 %v349, %v2506
    %v2508 = vpop.f32.mrb[0].mxu0
    %v2509 = vpop.f32.mrb[0].mxu0
    %v2510 = vpop.f32.mrb[0].mxu0
    %2511 = vdwg.mxu0
    %v2512 = vsel %vm361, %v2157, -inf
    %2513 = vmax.xlane.f32.xlu0 %v2512
    %v2514 = vpop.xlane.xlu0 %2513
    %v2515 = vsel %vm361, %v2207, -inf
    %2516 = vmax.xlane.f32.xlu0 %v2515
    %v2517 = vpop.xlane.xlu0 %2516
    %v2518 = vsel %vm361, %v2257, -inf
    %2519 = vmax.xlane.f32.xlu0 %v2518
    %v2520 = vpop.xlane.xlu0 %2519
    %v2521 = vsel %vm361, %v2307, -inf
    %2522 = vmax.xlane.f32.xlu0 %v2521
    %v2523 = vpop.xlane.xlu0 %2522
    %v2524 = vsel %vm361, %v2357, -inf
    %2525 = vmax.xlane.f32.xlu0 %v2524
    %v2526 = vpop.xlane.xlu0 %2525
    %v2527 = vsel %vm361, %v2407, -inf
    %2528 = vmax.xlane.f32.xlu0 %v2527
    %v2529 = vpop.xlane.xlu0 %2528
    %v2530 = vsel %vm361, %v2457, -inf
    %2531 = vmax.xlane.f32.xlu0 %v2530
    %v2532 = vpop.xlane.xlu0 %2531
    %v2533 = vsel %vm361, %v2507, -inf
    %2534 = vmax.xlane.f32.xlu0 %v2533
    %v2535 = vpop.xlane.xlu0 %2534
    %v2536 = vsub.f32 %v2157, %v2514
    %v2537 = vsub.f32 %v2207, %v2517
    %v2538 = vsub.f32 %v2257, %v2520
    %v2539 = vsub.f32 %v2307, %v2523
    %v2540 = vsub.f32 %v2357, %v2526
    %v2541 = vsub.f32 %v2407, %v2529
    %v2542 = vsub.f32 %v2457, %v2532
    %v2543 = vsub.f32 %v2507, %v2535
    %v2544 = vmul.f32 %v2536, 1.442695
    %v2545 = vpow.pop %v2544
    %v2546 = vmul.f32 %v2537, 1.442695
    %v2547 = vpow.pop %v2546
    %v2548 = vmul.f32 %v2538, 1.442695
    %v2549 = vpow.pop %v2548
    %v2550 = vmul.f32 %v2539, 1.442695
    %v2551 = vpow.pop %v2550
    %v2552 = vmul.f32 %v2540, 1.442695
    %v2553 = vpow.pop %v2552
    %v2554 = vmul.f32 %v2541, 1.442695
    %v2555 = vpow.pop %v2554
    %v2556 = vmul.f32 %v2542, 1.442695
    %v2557 = vpow.pop %v2556
    %v2558 = vmul.f32 %v2543, 1.442695
    %v2559 = vpow.pop %v2558
    %v2560 = vsel %vm361, %v2545, 0.0
    %2561 = vadd.xlane.f32.xlu0 %v2560
    %v2562 = vpop.xlane.xlu0 %2561
    %v2563 = vsel %vm361, %v2547, 0.0
    %2564 = vadd.xlane.f32.xlu0 %v2563
    %v2565 = vpop.xlane.xlu0 %2564
    %v2566 = vsel %vm361, %v2549, 0.0
    %2567 = vadd.xlane.f32.xlu0 %v2566
    %v2568 = vpop.xlane.xlu0 %2567
    %v2569 = vsel %vm361, %v2551, 0.0
    %2570 = vadd.xlane.f32.xlu0 %v2569
    %v2571 = vpop.xlane.xlu0 %2570
    %v2572 = vsel %vm361, %v2553, 0.0
    %2573 = vadd.xlane.f32.xlu0 %v2572
    %v2574 = vpop.xlane.xlu0 %2573
    %v2575 = vsel %vm361, %v2555, 0.0
    %2576 = vadd.xlane.f32.xlu0 %v2575
    %v2577 = vpop.xlane.xlu0 %2576
    %v2578 = vsel %vm361, %v2557, 0.0
    %2579 = vadd.xlane.f32.xlu0 %v2578
    %v2580 = vpop.xlane.xlu0 %2579
    %v2581 = vsel %vm361, %v2559, 0.0
    %2582 = vadd.xlane.f32.xlu0 %v2581
    %v2583 = vpop.xlane.xlu0 %2582
    %v2584 = vrcp.pop %v2562
    %v2585 = vrcp.pop %v2565
    %v2586 = vrcp.pop %v2568
    %v2587 = vrcp.pop %v2571
    %v2588 = vrcp.pop %v2574
    %v2589 = vrcp.pop %v2577
    %v2590 = vrcp.pop %v2580
    %v2591 = vrcp.pop %v2583
    %v2592 = vmul.f32 %v2545, %v2584
    %v2593 = vmul.f32 %v2547, %v2585
    %v2594 = vmul.f32 %v2549, %v2586
    %v2595 = vmul.f32 %v2551, %v2587
    %v2596 = vmul.f32 %v2553, %v2588
    %v2597 = vmul.f32 %v2555, %v2589
    %v2598 = vmul.f32 %v2557, %v2590
    %v2599 = vmul.f32 %v2559, %v2591
    %v2600 = vpack.c.bf16 %v2592, %v2592
    %v2601 = vpack.c.bf16 %v2593, %v2593
    %v2602 = vpack.c.bf16 %v2594, %v2594
    %v2603 = vpack.c.bf16 %v2595, %v2595
    %v2604 = vpack.c.bf16 %v2596, %v2596
    %v2605 = vpack.c.bf16 %v2597, %v2597
    %v2606 = vpack.c.bf16 %v2598, %v2598
    %v2607 = vpack.c.bf16 %v2599, %v2599
    %2609 = vrot.lane.b32.xlu0 %v251, 16
    %v2610 = vpop.permute.xlu0 %2609
    %2611 = vrot.lane.b32.xlu0 %v252, 16
    %v2612 = vpop.permute.xlu0 %2611
    %vm2613 = vcmask 130048
    %v2614 = vsel %vm2613, %v2610, %v2612
    %v2616 = vsel %vm361, %v2600, 0
    %v2619 = vsel %vm1348, %v2614, 0
    %2621 = vmatprep.subr.bf16.mxu0 0
    %2622 = vmatpush1.bf16.msra.mxu0 %v2619
    %2623 = vmatprep.subr.bf16.mxu0 0
    %2624 = vmatpush1.bf16.msra.mxu0 0
    %2625 = vmatprep.subr.bf16.mxu0 0
    %2626 = vmatpush1.bf16.msra.mxu0 0
    %2627 = vmatprep.subr.bf16.mxu0 0
    %2628 = vmatpush1.bf16.msra.mxu0 0
    %2629 = vmatprep.subr.bf16.mxu0 0
    %2630 = vmatpush1.bf16.msra.mxu0 0
    %2631 = vmatprep.subr.bf16.mxu0 0
    %2632 = vmatpush1.bf16.msra.mxu0 0
    %2633 = vmatprep.subr.bf16.mxu0 0
    %2634 = vmatpush1.bf16.msra.mxu0 0
    %2635 = vmatprep.subr.bf16.mxu0 0
    %2636 = vmatpush1.bf16.msra.mxu0 0
    %2637 = vmatprep.subr.bf16.mxu0 0
    %2638 = vmatpush1.bf16.msra.mxu0 0
    %2639 = vmatprep.subr.bf16.mxu0 0
    %2640 = vmatpush1.bf16.msra.mxu0 0
    %2641 = vmatprep.subr.bf16.mxu0 0
    %2642 = vmatpush1.bf16.msra.mxu0 0
    %2643 = vmatprep.subr.bf16.mxu0 0
    %2644 = vmatpush1.bf16.msra.mxu0 0
    %2645 = vmatprep.subr.bf16.mxu0 0
    %2646 = vmatpush1.bf16.msra.mxu0 0
    %2647 = vmatprep.subr.bf16.mxu0 0
    %2648 = vmatpush1.bf16.msra.mxu0 0
    %2649 = vmatprep.subr.bf16.mxu0 0
    %2650 = vmatpush1.bf16.msra.mxu0 0
    %2651 = vmatprep.subr.bf16.mxu0 0
    %2652 = vmatpush1.bf16.msra.mxu0 0
    %2653 = vmatprep.mubr.bf16.mxu0 0
    %2654 = vmatmul.mubr.bf16.gmra.mrb[0].mxu0 %v2616
    %v2655 = vpop.f32.mrb[0].mxu0
    %v2656 = vadd.f32 0.0, %v2655
    %v2657 = vpop.f32.mrb[0].mxu0
    %v2658 = vpop.f32.mrb[0].mxu0
    %v2659 = vpop.f32.mrb[0].mxu0
    %2660 = vdwg.mxu0
    %2662 = vrot.lane.b32.xlu0 %v253, 16
    %v2663 = vpop.permute.xlu0 %2662
    %2664 = vrot.lane.b32.xlu0 %v254, 16
    %v2665 = vpop.permute.xlu0 %2664
    %v2666 = vsel %vm2613, %v2663, %v2665
    %v2668 = vsel %vm361, %v2601, 0
    %v2671 = vsel %vm1348, %v2666, 0
    %2673 = vmatprep.subr.bf16.mxu0 0
    %2674 = vmatpush1.bf16.msra.mxu0 %v2671
    %2675 = vmatprep.subr.bf16.mxu0 0
    %2676 = vmatpush1.bf16.msra.mxu0 0
    %2677 = vmatprep.subr.bf16.mxu0 0
    %2678 = vmatpush1.bf16.msra.mxu0 0
    %2679 = vmatprep.subr.bf16.mxu0 0
    %2680 = vmatpush1.bf16.msra.mxu0 0
    %2681 = vmatprep.subr.bf16.mxu0 0
    %2682 = vmatpush1.bf16.msra.mxu0 0
    %2683 = vmatprep.subr.bf16.mxu0 0
    %2684 = vmatpush1.bf16.msra.mxu0 0
    %2685 = vmatprep.subr.bf16.mxu0 0
    %2686 = vmatpush1.bf16.msra.mxu0 0
    %2687 = vmatprep.subr.bf16.mxu0 0
    %2688 = vmatpush1.bf16.msra.mxu0 0
    %2689 = vmatprep.subr.bf16.mxu0 0
    %2690 = vmatpush1.bf16.msra.mxu0 0
    %2691 = vmatprep.subr.bf16.mxu0 0
    %2692 = vmatpush1.bf16.msra.mxu0 0
    %2693 = vmatprep.subr.bf16.mxu0 0
    %2694 = vmatpush1.bf16.msra.mxu0 0
    %2695 = vmatprep.subr.bf16.mxu0 0
    %2696 = vmatpush1.bf16.msra.mxu0 0
    %2697 = vmatprep.subr.bf16.mxu0 0
    %2698 = vmatpush1.bf16.msra.mxu0 0
    %2699 = vmatprep.subr.bf16.mxu0 0
    %2700 = vmatpush1.bf16.msra.mxu0 0
    %2701 = vmatprep.subr.bf16.mxu0 0
    %2702 = vmatpush1.bf16.msra.mxu0 0
    %2703 = vmatprep.subr.bf16.mxu0 0
    %2704 = vmatpush1.bf16.msra.mxu0 0
    %2705 = vmatprep.mubr.bf16.mxu0 0
    %2706 = vmatmul.mubr.bf16.gmra.mrb[0].mxu0 %v2668
    %v2707 = vpop.f32.mrb[0].mxu0
    %v2708 = vadd.f32 0.0, %v2707
    %v2709 = vpop.f32.mrb[0].mxu0
    %v2710 = vpop.f32.mrb[0].mxu0
    %v2711 = vpop.f32.mrb[0].mxu0
    %2712 = vdwg.mxu0
    %2714 = vrot.lane.b32.xlu0 %v255, 16
    %v2715 = vpop.permute.xlu0 %2714
    %2716 = vrot.lane.b32.xlu0 %v256, 16
    %v2717 = vpop.permute.xlu0 %2716
    %v2718 = vsel %vm2613, %v2715, %v2717
    %v2720 = vsel %vm361, %v2602, 0
    %v2723 = vsel %vm1348, %v2718, 0
    %2725 = vmatprep.subr.bf16.mxu0 0
    %2726 = vmatpush1.bf16.msra.mxu0 %v2723
    %2727 = vmatprep.subr.bf16.mxu0 0
    %2728 = vmatpush1.bf16.msra.mxu0 0
    %2729 = vmatprep.subr.bf16.mxu0 0
    %2730 = vmatpush1.bf16.msra.mxu0 0
    %2731 = vmatprep.subr.bf16.mxu0 0
    %2732 = vmatpush1.bf16.msra.mxu0 0
    %2733 = vmatprep.subr.bf16.mxu0 0
    %2734 = vmatpush1.bf16.msra.mxu0 0
    %2735 = vmatprep.subr.bf16.mxu0 0
    %2736 = vmatpush1.bf16.msra.mxu0 0
    %2737 = vmatprep.subr.bf16.mxu0 0
    %2738 = vmatpush1.bf16.msra.mxu0 0
    %2739 = vmatprep.subr.bf16.mxu0 0
    %2740 = vmatpush1.bf16.msra.mxu0 0
    %2741 = vmatprep.subr.bf16.mxu0 0
    %2742 = vmatpush1.bf16.msra.mxu0 0
    %2743 = vmatprep.subr.bf16.mxu0 0
    %2744 = vmatpush1.bf16.msra.mxu0 0
    %2745 = vmatprep.subr.bf16.mxu0 0
    %2746 = vmatpush1.bf16.msra.mxu0 0
    %2747 = vmatprep.subr.bf16.mxu0 0
    %2748 = vmatpush1.bf16.msra.mxu0 0
    %2749 = vmatprep.subr.bf16.mxu0 0
    %2750 = vmatpush1.bf16.msra.mxu0 0
    %2751 = vmatprep.subr.bf16.mxu0 0
    %2752 = vmatpush1.bf16.msra.mxu0 0
    %2753 = vmatprep.subr.bf16.mxu0 0
    %2754 = vmatpush1.bf16.msra.mxu0 0
    %2755 = vmatprep.subr.bf16.mxu0 0
    %2756 = vmatpush1.bf16.msra.mxu0 0
    %2757 = vmatprep.mubr.bf16.mxu0 0
    %2758 = vmatmul.mubr.bf16.gmra.mrb[0].mxu0 %v2720
    %v2759 = vpop.f32.mrb[0].mxu0
    %v2760 = vadd.f32 0.0, %v2759
    %v2761 = vpop.f32.mrb[0].mxu0
    %v2762 = vpop.f32.mrb[0].mxu0
    %v2763 = vpop.f32.mrb[0].mxu0
    %2764 = vdwg.mxu0
    %2766 = vrot.lane.b32.xlu0 %v257, 16
    %v2767 = vpop.permute.xlu0 %2766
    %2768 = vrot.lane.b32.xlu0 %v258, 16
    %v2769 = vpop.permute.xlu0 %2768
    %v2770 = vsel %vm2613, %v2767, %v2769
    %v2772 = vsel %vm361, %v2603, 0
    %v2775 = vsel %vm1348, %v2770, 0
    %2777 = vmatprep.subr.bf16.mxu0 0
    %2778 = vmatpush1.bf16.msra.mxu0 %v2775
    %2779 = vmatprep.subr.bf16.mxu0 0
    %2780 = vmatpush1.bf16.msra.mxu0 0
    %2781 = vmatprep.subr.bf16.mxu0 0
    %2782 = vmatpush1.bf16.msra.mxu0 0
    %2783 = vmatprep.subr.bf16.mxu0 0
    %2784 = vmatpush1.bf16.msra.mxu0 0
    %2785 = vmatprep.subr.bf16.mxu0 0
    %2786 = vmatpush1.bf16.msra.mxu0 0
    %2787 = vmatprep.subr.bf16.mxu0 0
    %2788 = vmatpush1.bf16.msra.mxu0 0
    %2789 = vmatprep.subr.bf16.mxu0 0
    %2790 = vmatpush1.bf16.msra.mxu0 0
    %2791 = vmatprep.subr.bf16.mxu0 0
    %2792 = vmatpush1.bf16.msra.mxu0 0
    %2793 = vmatprep.subr.bf16.mxu0 0
    %2794 = vmatpush1.bf16.msra.mxu0 0
    %2795 = vmatprep.subr.bf16.mxu0 0
    %2796 = vmatpush1.bf16.msra.mxu0 0
    %2797 = vmatprep.subr.bf16.mxu0 0
    %2798 = vmatpush1.bf16.msra.mxu0 0
    %2799 = vmatprep.subr.bf16.mxu0 0
    %2800 = vmatpush1.bf16.msra.mxu0 0
    %2801 = vmatprep.subr.bf16.mxu0 0
    %2802 = vmatpush1.bf16.msra.mxu0 0
    %2803 = vmatprep.subr.bf16.mxu0 0
    %2804 = vmatpush1.bf16.msra.mxu0 0
    %2805 = vmatprep.subr.bf16.mxu0 0
    %2806 = vmatpush1.bf16.msra.mxu0 0
    %2807 = vmatprep.subr.bf16.mxu0 0
    %2808 = vmatpush1.bf16.msra.mxu0 0
    %2809 = vmatprep.mubr.bf16.mxu0 0
    %2810 = vmatmul.mubr.bf16.gmra.mrb[0].mxu0 %v2772
    %v2811 = vpop.f32.mrb[0].mxu0
    %v2812 = vadd.f32 0.0, %v2811
    %v2813 = vpop.f32.mrb[0].mxu0
    %v2814 = vpop.f32.mrb[0].mxu0
    %v2815 = vpop.f32.mrb[0].mxu0
    %2816 = vdwg.mxu0
    %2818 = vrot.lane.b32.xlu0 %v259, 16
    %v2819 = vpop.permute.xlu0 %2818
    %2820 = vrot.lane.b32.xlu0 %v260, 16
    %v2821 = vpop.permute.xlu0 %2820
    %v2822 = vsel %vm2613, %v2819, %v2821
    %v2824 = vsel %vm361, %v2604, 0
    %v2827 = vsel %vm1348, %v2822, 0
    %2829 = vmatprep.subr.bf16.mxu0 0
    %2830 = vmatpush1.bf16.msra.mxu0 %v2827
    %2831 = vmatprep.subr.bf16.mxu0 0
    %2832 = vmatpush1.bf16.msra.mxu0 0
    %2833 = vmatprep.subr.bf16.mxu0 0
    %2834 = vmatpush1.bf16.msra.mxu0 0
    %2835 = vmatprep.subr.bf16.mxu0 0
    %2836 = vmatpush1.bf16.msra.mxu0 0
    %2837 = vmatprep.subr.bf16.mxu0 0
    %2838 = vmatpush1.bf16.msra.mxu0 0
    %2839 = vmatprep.subr.bf16.mxu0 0
    %2840 = vmatpush1.bf16.msra.mxu0 0
    %2841 = vmatprep.subr.bf16.mxu0 0
    %2842 = vmatpush1.bf16.msra.mxu0 0
    %2843 = vmatprep.subr.bf16.mxu0 0
    %2844 = vmatpush1.bf16.msra.mxu0 0
    %2845 = vmatprep.subr.bf16.mxu0 0
    %2846 = vmatpush1.bf16.msra.mxu0 0
    %2847 = vmatprep.subr.bf16.mxu0 0
    %2848 = vmatpush1.bf16.msra.mxu0 0
    %2849 = vmatprep.subr.bf16.mxu0 0
    %2850 = vmatpush1.bf16.msra.mxu0 0
    %2851 = vmatprep.subr.bf16.mxu0 0
    %2852 = vmatpush1.bf16.msra.mxu0 0
    %2853 = vmatprep.subr.bf16.mxu0 0
    %2854 = vmatpush1.bf16.msra.mxu0 0
    %2855 = vmatprep.subr.bf16.mxu0 0
    %2856 = vmatpush1.bf16.msra.mxu0 0
    %2857 = vmatprep.subr.bf16.mxu0 0
    %2858 = vmatpush1.bf16.msra.mxu0 0
    %2859 = vmatprep.subr.bf16.mxu0 0
    %2860 = vmatpush1.bf16.msra.mxu0 0
    %2861 = vmatprep.mubr.bf16.mxu0 0
    %2862 = vmatmul.mubr.bf16.gmra.mrb[0].mxu0 %v2824
    %v2863 = vpop.f32.mrb[0].mxu0
    %v2864 = vadd.f32 0.0, %v2863
    %v2865 = vpop.f32.mrb[0].mxu0
    %v2866 = vpop.f32.mrb[0].mxu0
    %v2867 = vpop.f32.mrb[0].mxu0
    %2868 = vdwg.mxu0
    %2870 = vrot.lane.b32.xlu0 %v261, 16
    %v2871 = vpop.permute.xlu0 %2870
    %2872 = vrot.lane.b32.xlu0 %v262, 16
    %v2873 = vpop.permute.xlu0 %2872
    %v2874 = vsel %vm2613, %v2871, %v2873
    %v2876 = vsel %vm361, %v2605, 0
    %v2879 = vsel %vm1348, %v2874, 0
    %2881 = vmatprep.subr.bf16.mxu0 0
    %2882 = vmatpush1.bf16.msra.mxu0 %v2879
    %2883 = vmatprep.subr.bf16.mxu0 0
    %2884 = vmatpush1.bf16.msra.mxu0 0
    %2885 = vmatprep.subr.bf16.mxu0 0
    %2886 = vmatpush1.bf16.msra.mxu0 0
    %2887 = vmatprep.subr.bf16.mxu0 0
    %2888 = vmatpush1.bf16.msra.mxu0 0
    %2889 = vmatprep.subr.bf16.mxu0 0
    %2890 = vmatpush1.bf16.msra.mxu0 0
    %2891 = vmatprep.subr.bf16.mxu0 0
    %2892 = vmatpush1.bf16.msra.mxu0 0
    %2893 = vmatprep.subr.bf16.mxu0 0
    %2894 = vmatpush1.bf16.msra.mxu0 0
    %2895 = vmatprep.subr.bf16.mxu0 0
    %2896 = vmatpush1.bf16.msra.mxu0 0
    %2897 = vmatprep.subr.bf16.mxu0 0
    %2898 = vmatpush1.bf16.msra.mxu0 0
    %2899 = vmatprep.subr.bf16.mxu0 0
    %2900 = vmatpush1.bf16.msra.mxu0 0
    %2901 = vmatprep.subr.bf16.mxu0 0
    %2902 = vmatpush1.bf16.msra.mxu0 0
    %2903 = vmatprep.subr.bf16.mxu0 0
    %2904 = vmatpush1.bf16.msra.mxu0 0
    %2905 = vmatprep.subr.bf16.mxu0 0
    %2906 = vmatpush1.bf16.msra.mxu0 0
    %2907 = vmatprep.subr.bf16.mxu0 0
    %2908 = vmatpush1.bf16.msra.mxu0 0
    %2909 = vmatprep.subr.bf16.mxu0 0
    %2910 = vmatpush1.bf16.msra.mxu0 0
    %2911 = vmatprep.subr.bf16.mxu0 0
    %2912 = vmatpush1.bf16.msra.mxu0 0
    %2913 = vmatprep.mubr.bf16.mxu0 0
    %2914 = vmatmul.mubr.bf16.gmra.mrb[0].mxu0 %v2876
    %v2915 = vpop.f32.mrb[0].mxu0
    %v2916 = vadd.f32 0.0, %v2915
    %v2917 = vpop.f32.mrb[0].mxu0
    %v2918 = vpop.f32.mrb[0].mxu0
    %v2919 = vpop.f32.mrb[0].mxu0
    %2920 = vdwg.mxu0
    %2922 = vrot.lane.b32.xlu0 %v263, 16
    %v2923 = vpop.permute.xlu0 %2922
    %2924 = vrot.lane.b32.xlu0 %v264, 16
    %v2925 = vpop.permute.xlu0 %2924
    %v2926 = vsel %vm2613, %v2923, %v2925
    %v2928 = vsel %vm361, %v2606, 0
    %v2931 = vsel %vm1348, %v2926, 0
    %2933 = vmatprep.subr.bf16.mxu0 0
    %2934 = vmatpush1.bf16.msra.mxu0 %v2931
    %2935 = vmatprep.subr.bf16.mxu0 0
    %2936 = vmatpush1.bf16.msra.mxu0 0
    %2937 = vmatprep.subr.bf16.mxu0 0
    %2938 = vmatpush1.bf16.msra.mxu0 0
    %2939 = vmatprep.subr.bf16.mxu0 0
    %2940 = vmatpush1.bf16.msra.mxu0 0
    %2941 = vmatprep.subr.bf16.mxu0 0
    %2942 = vmatpush1.bf16.msra.mxu0 0
    %2943 = vmatprep.subr.bf16.mxu0 0
    %2944 = vmatpush1.bf16.msra.mxu0 0
    %2945 = vmatprep.subr.bf16.mxu0 0
    %2946 = vmatpush1.bf16.msra.mxu0 0
    %2947 = vmatprep.subr.bf16.mxu0 0
    %2948 = vmatpush1.bf16.msra.mxu0 0
    %2949 = vmatprep.subr.bf16.mxu0 0
    %2950 = vmatpush1.bf16.msra.mxu0 0
    %2951 = vmatprep.subr.bf16.mxu0 0
    %2952 = vmatpush1.bf16.msra.mxu0 0
    %2953 = vmatprep.subr.bf16.mxu0 0
    %2954 = vmatpush1.bf16.msra.mxu0 0
    %2955 = vmatprep.subr.bf16.mxu0 0
    %2956 = vmatpush1.bf16.msra.mxu0 0
    %2957 = vmatprep.subr.bf16.mxu0 0
    %2958 = vmatpush1.bf16.msra.mxu0 0
    %2959 = vmatprep.subr.bf16.mxu0 0
    %2960 = vmatpush1.bf16.msra.mxu0 0
    %2961 = vmatprep.subr.bf16.mxu0 0
    %2962 = vmatpush1.bf16.msra.mxu0 0
    %2963 = vmatprep.subr.bf16.mxu0 0
    %2964 = vmatpush1.bf16.msra.mxu0 0
    %2965 = vmatprep.mubr.bf16.mxu0 0
    %2966 = vmatmul.mubr.bf16.gmra.mrb[0].mxu0 %v2928
    %v2967 = vpop.f32.mrb[0].mxu0
    %v2968 = vadd.f32 0.0, %v2967
    %v2969 = vpop.f32.mrb[0].mxu0
    %v2970 = vpop.f32.mrb[0].mxu0
    %v2971 = vpop.f32.mrb[0].mxu0
    %2972 = vdwg.mxu0
    %2974 = vrot.lane.b32.xlu0 %v265, 16
    %v2975 = vpop.permute.xlu0 %2974
    %2976 = vrot.lane.b32.xlu0 %v266, 16
    %v2977 = vpop.permute.xlu0 %2976
    %v2978 = vsel %vm2613, %v2975, %v2977
    %v2980 = vsel %vm361, %v2607, 0
    %v2983 = vsel %vm1348, %v2978, 0
    %2985 = vmatprep.subr.bf16.mxu0 0
    %2986 = vmatpush1.bf16.msra.mxu0 %v2983
    %2987 = vmatprep.subr.bf16.mxu0 0
    %2988 = vmatpush1.bf16.msra.mxu0 0
    %2989 = vmatprep.subr.bf16.mxu0 0
    %2990 = vmatpush1.bf16.msra.mxu0 0
    %2991 = vmatprep.subr.bf16.mxu0 0
    %2992 = vmatpush1.bf16.msra.mxu0 0
    %2993 = vmatprep.subr.bf16.mxu0 0
    %2994 = vmatpush1.bf16.msra.mxu0 0
    %2995 = vmatprep.subr.bf16.mxu0 0
    %2996 = vmatpush1.bf16.msra.mxu0 0
    %2997 = vmatprep.subr.bf16.mxu0 0
    %2998 = vmatpush1.bf16.msra.mxu0 0
    %2999 = vmatprep.subr.bf16.mxu0 0
    %3000 = vmatpush1.bf16.msra.mxu0 0
    %3001 = vmatprep.subr.bf16.mxu0 0
    %3002 = vmatpush1.bf16.msra.mxu0 0
    %3003 = vmatprep.subr.bf16.mxu0 0
    %3004 = vmatpush1.bf16.msra.mxu0 0
    %3005 = vmatprep.subr.bf16.mxu0 0
    %3006 = vmatpush1.bf16.msra.mxu0 0
    %3007 = vmatprep.subr.bf16.mxu0 0
    %3008 = vmatpush1.bf16.msra.mxu0 0
    %3009 = vmatprep.subr.bf16.mxu0 0
    %3010 = vmatpush1.bf16.msra.mxu0 0
    %3011 = vmatprep.subr.bf16.mxu0 0
    %3012 = vmatpush1.bf16.msra.mxu0 0
    %3013 = vmatprep.subr.bf16.mxu0 0
    %3014 = vmatpush1.bf16.msra.mxu0 0
    %3015 = vmatprep.subr.bf16.mxu0 0
    %3016 = vmatpush1.bf16.msra.mxu0 0
    %3017 = vmatprep.mubr.bf16.mxu0 0
    %3018 = vmatmul.mubr.bf16.gmra.mrb[0].mxu0 %v2980
    %v3019 = vpop.f32.mrb[0].mxu0
    %v3020 = vadd.f32 0.0, %v3019
    %v3021 = vpop.f32.mrb[0].mxu0
    %v3022 = vpop.f32.mrb[0].mxu0
    %v3023 = vpop.f32.mrb[0].mxu0
    %3024 = vdwg.mxu0
    %v3025 = vadd.f32 %v1771, %v2656
    %v3026 = vadd.f32 %v1819, %v2708
    %v3027 = vadd.f32 %v1867, %v2760
    %v3028 = vadd.f32 %v1915, %v2812
    %v3029 = vadd.f32 %v1963, %v2864
    %v3030 = vadd.f32 %v2011, %v2916
    %v3031 = vadd.f32 %v2059, %v2968
    %v3032 = vadd.f32 %v2107, %v3020
    %3033 = vrot.lane.b32.xlu0 %v252, 112
    %v3034 = vpop.permute.xlu0 %3033
    %3035 = vrot.lane.b32.xlu0 %v252, 104
    %v3036 = vpop.permute.xlu0 %3035
    %v3038 = vsel %vm361, %v3034, 0
    %v3041 = vsel %vm361, %v3036, 0
    %3043 = vmatprep.subr.bf16.mxu0 0
    %3044 = vmatpush1.bf16.xpose.msra.mxu0 %v3041
    %3045 = vmatprep.subr.bf16.mxu0 0
    %3046 = vmatpush1.bf16.xpose.msra.mxu0 0
    %3047 = vmatprep.subr.bf16.mxu0 0
    %3048 = vmatpush1.bf16.xpose.msra.mxu0 0
    %3049 = vmatprep.subr.bf16.mxu0 0
    %3050 = vmatpush1.bf16.xpose.msra.mxu0 0
    %3051 = vmatprep.subr.bf16.mxu0 0
    %3052 = vmatpush1.bf16.xpose.msra.mxu0 0
    %3053 = vmatprep.subr.bf16.mxu0 0
    %3054 = vmatpush1.bf16.xpose.msra.mxu0 0
    %3055 = vmatprep.subr.bf16.mxu0 0
    %3056 = vmatpush1.bf16.xpose.msra.mxu0 0
    %3057 = vmatprep.subr.bf16.mxu0 0
    %3058 = vmatpush1.bf16.xpose.msra.mxu0 0
    %3059 = vmatprep.subr.bf16.mxu0 0
    %3060 = vmatpush1.bf16.xpose.msra.mxu0 0
    %3061 = vmatprep.subr.bf16.mxu0 0
    %3062 = vmatpush1.bf16.xpose.msra.mxu0 0
    %3063 = vmatprep.subr.bf16.mxu0 0
    %3064 = vmatpush1.bf16.xpose.msra.mxu0 0
    %3065 = vmatprep.subr.bf16.mxu0 0
    %3066 = vmatpush1.bf16.xpose.msra.mxu0 0
    %3067 = vmatprep.subr.bf16.mxu0 0
    %3068 = vmatpush1.bf16.xpose.msra.mxu0 0
    %3069 = vmatprep.subr.bf16.mxu0 0
    %3070 = vmatpush1.bf16.xpose.msra.mxu0 0
    %3071 = vmatprep.subr.bf16.mxu0 0
    %3072 = vmatpush1.bf16.xpose.msra.mxu0 0
    %3073 = vmatprep.subr.bf16.mxu0 0
    %3074 = vmatpush1.bf16.xpose.msra.mxu0 0
    %3075 = vmatprep.mubr.bf16.mxu0 0
    %3076 = vmatmul.mubr.bf16.gmra.mrb[0].mxu0 %v3038
    %v3077 = vpop.f32.mrb[0].mxu0
    %v3078 = vadd.f32 %v321, %v3077
    %v3079 = vpop.f32.mrb[0].mxu0
    %v3080 = vpop.f32.mrb[0].mxu0
    %v3081 = vpop.f32.mrb[0].mxu0
    %3082 = vdwg.mxu0
    %3083 = vrot.lane.b32.xlu0 %v254, 112
    %v3084 = vpop.permute.xlu0 %3083
    %3085 = vrot.lane.b32.xlu0 %v254, 104
    %v3086 = vpop.permute.xlu0 %3085
    %v3088 = vsel %vm361, %v3084, 0
    %v3091 = vsel %vm361, %v3086, 0
    %3093 = vmatprep.subr.bf16.mxu0 0
    %3094 = vmatpush1.bf16.xpose.msra.mxu0 %v3091
    %3095 = vmatprep.subr.bf16.mxu0 0
    %3096 = vmatpush1.bf16.xpose.msra.mxu0 0
    %3097 = vmatprep.subr.bf16.mxu0 0
    %3098 = vmatpush1.bf16.xpose.msra.mxu0 0
    %3099 = vmatprep.subr.bf16.mxu0 0
    %3100 = vmatpush1.bf16.xpose.msra.mxu0 0
    %3101 = vmatprep.subr.bf16.mxu0 0
    %3102 = vmatpush1.bf16.xpose.msra.mxu0 0
    %3103 = vmatprep.subr.bf16.mxu0 0
    %3104 = vmatpush1.bf16.xpose.msra.mxu0 0
    %3105 = vmatprep.subr.bf16.mxu0 0
    %3106 = vmatpush1.bf16.xpose.msra.mxu0 0
    %3107 = vmatprep.subr.bf16.mxu0 0
    %3108 = vmatpush1.bf16.xpose.msra.mxu0 0
    %3109 = vmatprep.subr.bf16.mxu0 0
    %3110 = vmatpush1.bf16.xpose.msra.mxu0 0
    %3111 = vmatprep.subr.bf16.mxu0 0
    %3112 = vmatpush1.bf16.xpose.msra.mxu0 0
    %3113 = vmatprep.subr.bf16.mxu0 0
    %3114 = vmatpush1.bf16.xpose.msra.mxu0 0
    %3115 = vmatprep.subr.bf16.mxu0 0
    %3116 = vmatpush1.bf16.xpose.msra.mxu0 0
    %3117 = vmatprep.subr.bf16.mxu0 0
    %3118 = vmatpush1.bf16.xpose.msra.mxu0 0
    %3119 = vmatprep.subr.bf16.mxu0 0
    %3120 = vmatpush1.bf16.xpose.msra.mxu0 0
    %3121 = vmatprep.subr.bf16.mxu0 0
    %3122 = vmatpush1.bf16.xpose.msra.mxu0 0
    %3123 = vmatprep.subr.bf16.mxu0 0
    %3124 = vmatpush1.bf16.xpose.msra.mxu0 0
    %3125 = vmatprep.mubr.bf16.mxu0 0
    %3126 = vmatmul.mubr.bf16.gmra.mrb[0].mxu0 %v3088
    %v3127 = vpop.f32.mrb[0].mxu0
    %v3128 = vadd.f32 %v325, %v3127
    %v3129 = vpop.f32.mrb[0].mxu0
    %v3130 = vpop.f32.mrb[0].mxu0
    %v3131 = vpop.f32.mrb[0].mxu0
    %3132 = vdwg.mxu0
    %3133 = vrot.lane.b32.xlu0 %v256, 112
    %v3134 = vpop.permute.xlu0 %3133
    %3135 = vrot.lane.b32.xlu0 %v256, 104
    %v3136 = vpop.permute.xlu0 %3135
    %v3138 = vsel %vm361, %v3134, 0
    %v3141 = vsel %vm361, %v3136, 0
    %3143 = vmatprep.subr.bf16.mxu0 0
    %3144 = vmatpush1.bf16.xpose.msra.mxu0 %v3141
    %3145 = vmatprep.subr.bf16.mxu0 0
    %3146 = vmatpush1.bf16.xpose.msra.mxu0 0
    %3147 = vmatprep.subr.bf16.mxu0 0
    %3148 = vmatpush1.bf16.xpose.msra.mxu0 0
    %3149 = vmatprep.subr.bf16.mxu0 0
    %3150 = vmatpush1.bf16.xpose.msra.mxu0 0
    %3151 = vmatprep.subr.bf16.mxu0 0
    %3152 = vmatpush1.bf16.xpose.msra.mxu0 0
    %3153 = vmatprep.subr.bf16.mxu0 0
    %3154 = vmatpush1.bf16.xpose.msra.mxu0 0
    %3155 = vmatprep.subr.bf16.mxu0 0
    %3156 = vmatpush1.bf16.xpose.msra.mxu0 0
    %3157 = vmatprep.subr.bf16.mxu0 0
    %3158 = vmatpush1.bf16.xpose.msra.mxu0 0
    %3159 = vmatprep.subr.bf16.mxu0 0
    %3160 = vmatpush1.bf16.xpose.msra.mxu0 0
    %3161 = vmatprep.subr.bf16.mxu0 0
    %3162 = vmatpush1.bf16.xpose.msra.mxu0 0
    %3163 = vmatprep.subr.bf16.mxu0 0
    %3164 = vmatpush1.bf16.xpose.msra.mxu0 0
    %3165 = vmatprep.subr.bf16.mxu0 0
    %3166 = vmatpush1.bf16.xpose.msra.mxu0 0
    %3167 = vmatprep.subr.bf16.mxu0 0
    %3168 = vmatpush1.bf16.xpose.msra.mxu0 0
    %3169 = vmatprep.subr.bf16.mxu0 0
    %3170 = vmatpush1.bf16.xpose.msra.mxu0 0
    %3171 = vmatprep.subr.bf16.mxu0 0
    %3172 = vmatpush1.bf16.xpose.msra.mxu0 0
    %3173 = vmatprep.subr.bf16.mxu0 0
    %3174 = vmatpush1.bf16.xpose.msra.mxu0 0
    %3175 = vmatprep.mubr.bf16.mxu0 0
    %3176 = vmatmul.mubr.bf16.gmra.mrb[0].mxu0 %v3138
    %v3177 = vpop.f32.mrb[0].mxu0
    %v3178 = vadd.f32 %v329, %v3177
    %v3179 = vpop.f32.mrb[0].mxu0
    %v3180 = vpop.f32.mrb[0].mxu0
    %v3181 = vpop.f32.mrb[0].mxu0
    %3182 = vdwg.mxu0
    %3183 = vrot.lane.b32.xlu0 %v258, 112
    %v3184 = vpop.permute.xlu0 %3183
    %3185 = vrot.lane.b32.xlu0 %v258, 104
    %v3186 = vpop.permute.xlu0 %3185
    %v3188 = vsel %vm361, %v3184, 0
    %v3191 = vsel %vm361, %v3186, 0
    %3193 = vmatprep.subr.bf16.mxu0 0
    %3194 = vmatpush1.bf16.xpose.msra.mxu0 %v3191
    %3195 = vmatprep.subr.bf16.mxu0 0
    %3196 = vmatpush1.bf16.xpose.msra.mxu0 0
    %3197 = vmatprep.subr.bf16.mxu0 0
    %3198 = vmatpush1.bf16.xpose.msra.mxu0 0
    %3199 = vmatprep.subr.bf16.mxu0 0
    %3200 = vmatpush1.bf16.xpose.msra.mxu0 0
    %3201 = vmatprep.subr.bf16.mxu0 0
    %3202 = vmatpush1.bf16.xpose.msra.mxu0 0
    %3203 = vmatprep.subr.bf16.mxu0 0
    %3204 = vmatpush1.bf16.xpose.msra.mxu0 0
    %3205 = vmatprep.subr.bf16.mxu0 0
    %3206 = vmatpush1.bf16.xpose.msra.mxu0 0
    %3207 = vmatprep.subr.bf16.mxu0 0
    %3208 = vmatpush1.bf16.xpose.msra.mxu0 0
    %3209 = vmatprep.subr.bf16.mxu0 0
    %3210 = vmatpush1.bf16.xpose.msra.mxu0 0
    %3211 = vmatprep.subr.bf16.mxu0 0
    %3212 = vmatpush1.bf16.xpose.msra.mxu0 0
    %3213 = vmatprep.subr.bf16.mxu0 0
    %3214 = vmatpush1.bf16.xpose.msra.mxu0 0
    %3215 = vmatprep.subr.bf16.mxu0 0
    %3216 = vmatpush1.bf16.xpose.msra.mxu0 0
    %3217 = vmatprep.subr.bf16.mxu0 0
    %3218 = vmatpush1.bf16.xpose.msra.mxu0 0
    %3219 = vmatprep.subr.bf16.mxu0 0
    %3220 = vmatpush1.bf16.xpose.msra.mxu0 0
    %3221 = vmatprep.subr.bf16.mxu0 0
    %3222 = vmatpush1.bf16.xpose.msra.mxu0 0
    %3223 = vmatprep.subr.bf16.mxu0 0
    %3224 = vmatpush1.bf16.xpose.msra.mxu0 0
    %3225 = vmatprep.mubr.bf16.mxu0 0
    %3226 = vmatmul.mubr.bf16.gmra.mrb[0].mxu0 %v3188
    %v3227 = vpop.f32.mrb[0].mxu0
    %v3228 = vadd.f32 %v333, %v3227
    %v3229 = vpop.f32.mrb[0].mxu0
    %v3230 = vpop.f32.mrb[0].mxu0
    %v3231 = vpop.f32.mrb[0].mxu0
    %3232 = vdwg.mxu0
    %3233 = vrot.lane.b32.xlu0 %v260, 112
    %v3234 = vpop.permute.xlu0 %3233
    %3235 = vrot.lane.b32.xlu0 %v260, 104
    %v3236 = vpop.permute.xlu0 %3235
    %v3238 = vsel %vm361, %v3234, 0
    %v3241 = vsel %vm361, %v3236, 0
    %3243 = vmatprep.subr.bf16.mxu0 0
    %3244 = vmatpush1.bf16.xpose.msra.mxu0 %v3241
    %3245 = vmatprep.subr.bf16.mxu0 0
    %3246 = vmatpush1.bf16.xpose.msra.mxu0 0
    %3247 = vmatprep.subr.bf16.mxu0 0
    %3248 = vmatpush1.bf16.xpose.msra.mxu0 0
    %3249 = vmatprep.subr.bf16.mxu0 0
    %3250 = vmatpush1.bf16.xpose.msra.mxu0 0
    %3251 = vmatprep.subr.bf16.mxu0 0
    %3252 = vmatpush1.bf16.xpose.msra.mxu0 0
    %3253 = vmatprep.subr.bf16.mxu0 0
    %3254 = vmatpush1.bf16.xpose.msra.mxu0 0
    %3255 = vmatprep.subr.bf16.mxu0 0
    %3256 = vmatpush1.bf16.xpose.msra.mxu0 0
    %3257 = vmatprep.subr.bf16.mxu0 0
    %3258 = vmatpush1.bf16.xpose.msra.mxu0 0
    %3259 = vmatprep.subr.bf16.mxu0 0
    %3260 = vmatpush1.bf16.xpose.msra.mxu0 0
    %3261 = vmatprep.subr.bf16.mxu0 0
    %3262 = vmatpush1.bf16.xpose.msra.mxu0 0
    %3263 = vmatprep.subr.bf16.mxu0 0
    %3264 = vmatpush1.bf16.xpose.msra.mxu0 0
    %3265 = vmatprep.subr.bf16.mxu0 0
    %3266 = vmatpush1.bf16.xpose.msra.mxu0 0
    %3267 = vmatprep.subr.bf16.mxu0 0
    %3268 = vmatpush1.bf16.xpose.msra.mxu0 0
    %3269 = vmatprep.subr.bf16.mxu0 0
    %3270 = vmatpush1.bf16.xpose.msra.mxu0 0
    %3271 = vmatprep.subr.bf16.mxu0 0
    %3272 = vmatpush1.bf16.xpose.msra.mxu0 0
    %3273 = vmatprep.subr.bf16.mxu0 0
    %3274 = vmatpush1.bf16.xpose.msra.mxu0 0
    %3275 = vmatprep.mubr.bf16.mxu0 0
    %3276 = vmatmul.mubr.bf16.gmra.mrb[0].mxu0 %v3238
    %v3277 = vpop.f32.mrb[0].mxu0
    %v3278 = vadd.f32 %v337, %v3277
    %v3279 = vpop.f32.mrb[0].mxu0
    %v3280 = vpop.f32.mrb[0].mxu0
    %v3281 = vpop.f32.mrb[0].mxu0
    %3282 = vdwg.mxu0
    %3283 = vrot.lane.b32.xlu0 %v262, 112
    %v3284 = vpop.permute.xlu0 %3283
    %3285 = vrot.lane.b32.xlu0 %v262, 104
    %v3286 = vpop.permute.xlu0 %3285
    %v3288 = vsel %vm361, %v3284, 0
    %v3291 = vsel %vm361, %v3286, 0
    %3293 = vmatprep.subr.bf16.mxu0 0
    %3294 = vmatpush1.bf16.xpose.msra.mxu0 %v3291
    %3295 = vmatprep.subr.bf16.mxu0 0
    %3296 = vmatpush1.bf16.xpose.msra.mxu0 0
    %3297 = vmatprep.subr.bf16.mxu0 0
    %3298 = vmatpush1.bf16.xpose.msra.mxu0 0
    %3299 = vmatprep.subr.bf16.mxu0 0
    %3300 = vmatpush1.bf16.xpose.msra.mxu0 0
    %3301 = vmatprep.subr.bf16.mxu0 0
    %3302 = vmatpush1.bf16.xpose.msra.mxu0 0
    %3303 = vmatprep.subr.bf16.mxu0 0
    %3304 = vmatpush1.bf16.xpose.msra.mxu0 0
    %3305 = vmatprep.subr.bf16.mxu0 0
    %3306 = vmatpush1.bf16.xpose.msra.mxu0 0
    %3307 = vmatprep.subr.bf16.mxu0 0
    %3308 = vmatpush1.bf16.xpose.msra.mxu0 0
    %3309 = vmatprep.subr.bf16.mxu0 0
    %3310 = vmatpush1.bf16.xpose.msra.mxu0 0
    %3311 = vmatprep.subr.bf16.mxu0 0
    %3312 = vmatpush1.bf16.xpose.msra.mxu0 0
    %3313 = vmatprep.subr.bf16.mxu0 0
    %3314 = vmatpush1.bf16.xpose.msra.mxu0 0
    %3315 = vmatprep.subr.bf16.mxu0 0
    %3316 = vmatpush1.bf16.xpose.msra.mxu0 0
    %3317 = vmatprep.subr.bf16.mxu0 0
    %3318 = vmatpush1.bf16.xpose.msra.mxu0 0
    %3319 = vmatprep.subr.bf16.mxu0 0
    %3320 = vmatpush1.bf16.xpose.msra.mxu0 0
    %3321 = vmatprep.subr.bf16.mxu0 0
    %3322 = vmatpush1.bf16.xpose.msra.mxu0 0
    %3323 = vmatprep.subr.bf16.mxu0 0
    %3324 = vmatpush1.bf16.xpose.msra.mxu0 0
    %3325 = vmatprep.mubr.bf16.mxu0 0
    %3326 = vmatmul.mubr.bf16.gmra.mrb[0].mxu0 %v3288
    %v3327 = vpop.f32.mrb[0].mxu0
    %v3328 = vadd.f32 %v341, %v3327
    %v3329 = vpop.f32.mrb[0].mxu0
    %v3330 = vpop.f32.mrb[0].mxu0
    %v3331 = vpop.f32.mrb[0].mxu0
    %3332 = vdwg.mxu0
    %3333 = vrot.lane.b32.xlu0 %v264, 112
    %v3334 = vpop.permute.xlu0 %3333
    %3335 = vrot.lane.b32.xlu0 %v264, 104
    %v3336 = vpop.permute.xlu0 %3335
    %v3338 = vsel %vm361, %v3334, 0
    %v3341 = vsel %vm361, %v3336, 0
    %3343 = vmatprep.subr.bf16.mxu0 0
    %3344 = vmatpush1.bf16.xpose.msra.mxu0 %v3341
    %3345 = vmatprep.subr.bf16.mxu0 0
    %3346 = vmatpush1.bf16.xpose.msra.mxu0 0
    %3347 = vmatprep.subr.bf16.mxu0 0
    %3348 = vmatpush1.bf16.xpose.msra.mxu0 0
    %3349 = vmatprep.subr.bf16.mxu0 0
    %3350 = vmatpush1.bf16.xpose.msra.mxu0 0
    %3351 = vmatprep.subr.bf16.mxu0 0
    %3352 = vmatpush1.bf16.xpose.msra.mxu0 0
    %3353 = vmatprep.subr.bf16.mxu0 0
    %3354 = vmatpush1.bf16.xpose.msra.mxu0 0
    %3355 = vmatprep.subr.bf16.mxu0 0
    %3356 = vmatpush1.bf16.xpose.msra.mxu0 0
    %3357 = vmatprep.subr.bf16.mxu0 0
    %3358 = vmatpush1.bf16.xpose.msra.mxu0 0
    %3359 = vmatprep.subr.bf16.mxu0 0
    %3360 = vmatpush1.bf16.xpose.msra.mxu0 0
    %3361 = vmatprep.subr.bf16.mxu0 0
    %3362 = vmatpush1.bf16.xpose.msra.mxu0 0
    %3363 = vmatprep.subr.bf16.mxu0 0
    %3364 = vmatpush1.bf16.xpose.msra.mxu0 0
    %3365 = vmatprep.subr.bf16.mxu0 0
    %3366 = vmatpush1.bf16.xpose.msra.mxu0 0
    %3367 = vmatprep.subr.bf16.mxu0 0
    %3368 = vmatpush1.bf16.xpose.msra.mxu0 0
    %3369 = vmatprep.subr.bf16.mxu0 0
    %3370 = vmatpush1.bf16.xpose.msra.mxu0 0
    %3371 = vmatprep.subr.bf16.mxu0 0
    %3372 = vmatpush1.bf16.xpose.msra.mxu0 0
    %3373 = vmatprep.subr.bf16.mxu0 0
    %3374 = vmatpush1.bf16.xpose.msra.mxu0 0
    %3375 = vmatprep.mubr.bf16.mxu0 0
    %3376 = vmatmul.mubr.bf16.gmra.mrb[0].mxu0 %v3338
    %v3377 = vpop.f32.mrb[0].mxu0
    %v3378 = vadd.f32 %v345, %v3377
    %v3379 = vpop.f32.mrb[0].mxu0
    %v3380 = vpop.f32.mrb[0].mxu0
    %v3381 = vpop.f32.mrb[0].mxu0
    %3382 = vdwg.mxu0
    %3383 = vrot.lane.b32.xlu0 %v266, 112
    %v3384 = vpop.permute.xlu0 %3383
    %3385 = vrot.lane.b32.xlu0 %v266, 104
    %v3386 = vpop.permute.xlu0 %3385
    %v3388 = vsel %vm361, %v3384, 0
    %v3391 = vsel %vm361, %v3386, 0
    %3393 = vmatprep.subr.bf16.mxu0 0
    %3394 = vmatpush1.bf16.xpose.msra.mxu0 %v3391
    %3395 = vmatprep.subr.bf16.mxu0 0
    %3396 = vmatpush1.bf16.xpose.msra.mxu0 0
    %3397 = vmatprep.subr.bf16.mxu0 0
    %3398 = vmatpush1.bf16.xpose.msra.mxu0 0
    %3399 = vmatprep.subr.bf16.mxu0 0
    %3400 = vmatpush1.bf16.xpose.msra.mxu0 0
    %3401 = vmatprep.subr.bf16.mxu0 0
    %3402 = vmatpush1.bf16.xpose.msra.mxu0 0
    %3403 = vmatprep.subr.bf16.mxu0 0
    %3404 = vmatpush1.bf16.xpose.msra.mxu0 0
    %3405 = vmatprep.subr.bf16.mxu0 0
    %3406 = vmatpush1.bf16.xpose.msra.mxu0 0
    %3407 = vmatprep.subr.bf16.mxu0 0
    %3408 = vmatpush1.bf16.xpose.msra.mxu0 0
    %3409 = vmatprep.subr.bf16.mxu0 0
    %3410 = vmatpush1.bf16.xpose.msra.mxu0 0
    %3411 = vmatprep.subr.bf16.mxu0 0
    %3412 = vmatpush1.bf16.xpose.msra.mxu0 0
    %3413 = vmatprep.subr.bf16.mxu0 0
    %3414 = vmatpush1.bf16.xpose.msra.mxu0 0
    %3415 = vmatprep.subr.bf16.mxu0 0
    %3416 = vmatpush1.bf16.xpose.msra.mxu0 0
    %3417 = vmatprep.subr.bf16.mxu0 0
    %3418 = vmatpush1.bf16.xpose.msra.mxu0 0
    %3419 = vmatprep.subr.bf16.mxu0 0
    %3420 = vmatpush1.bf16.xpose.msra.mxu0 0
    %3421 = vmatprep.subr.bf16.mxu0 0
    %3422 = vmatpush1.bf16.xpose.msra.mxu0 0
    %3423 = vmatprep.subr.bf16.mxu0 0
    %3424 = vmatpush1.bf16.xpose.msra.mxu0 0
    %3425 = vmatprep.mubr.bf16.mxu0 0
    %3426 = vmatmul.mubr.bf16.gmra.mrb[0].mxu0 %v3388
    %v3427 = vpop.f32.mrb[0].mxu0
    %v3428 = vadd.f32 %v349, %v3427
    %v3429 = vpop.f32.mrb[0].mxu0
    %v3430 = vpop.f32.mrb[0].mxu0
    %v3431 = vpop.f32.mrb[0].mxu0
    %3432 = vdwg.mxu0
    %v3433 = vsel %vm361, %v3078, -inf
    %3434 = vmax.xlane.f32.xlu0 %v3433
    %v3435 = vpop.xlane.xlu0 %3434
    %v3436 = vsel %vm361, %v3128, -inf
    %3437 = vmax.xlane.f32.xlu0 %v3436
    %v3438 = vpop.xlane.xlu0 %3437
    %v3439 = vsel %vm361, %v3178, -inf
    %3440 = vmax.xlane.f32.xlu0 %v3439
    %v3441 = vpop.xlane.xlu0 %3440
    %v3442 = vsel %vm361, %v3228, -inf
    %3443 = vmax.xlane.f32.xlu0 %v3442
    %v3444 = vpop.xlane.xlu0 %3443
    %v3445 = vsel %vm361, %v3278, -inf
    %3446 = vmax.xlane.f32.xlu0 %v3445
    %v3447 = vpop.xlane.xlu0 %3446
    %v3448 = vsel %vm361, %v3328, -inf
    %3449 = vmax.xlane.f32.xlu0 %v3448
    %v3450 = vpop.xlane.xlu0 %3449
    %v3451 = vsel %vm361, %v3378, -inf
    %3452 = vmax.xlane.f32.xlu0 %v3451
    %v3453 = vpop.xlane.xlu0 %3452
    %v3454 = vsel %vm361, %v3428, -inf
    %3455 = vmax.xlane.f32.xlu0 %v3454
    %v3456 = vpop.xlane.xlu0 %3455
    %v3457 = vsub.f32 %v3078, %v3435
    %v3458 = vsub.f32 %v3128, %v3438
    %v3459 = vsub.f32 %v3178, %v3441
    %v3460 = vsub.f32 %v3228, %v3444
    %v3461 = vsub.f32 %v3278, %v3447
    %v3462 = vsub.f32 %v3328, %v3450
    %v3463 = vsub.f32 %v3378, %v3453
    %v3464 = vsub.f32 %v3428, %v3456
    %v3465 = vmul.f32 %v3457, 1.442695
    %v3466 = vpow.pop %v3465
    %v3467 = vmul.f32 %v3458, 1.442695
    %v3468 = vpow.pop %v3467
    %v3469 = vmul.f32 %v3459, 1.442695
    %v3470 = vpow.pop %v3469
    %v3471 = vmul.f32 %v3460, 1.442695
    %v3472 = vpow.pop %v3471
    %v3473 = vmul.f32 %v3461, 1.442695
    %v3474 = vpow.pop %v3473
    %v3475 = vmul.f32 %v3462, 1.442695
    %v3476 = vpow.pop %v3475
    %v3477 = vmul.f32 %v3463, 1.442695
    %v3478 = vpow.pop %v3477
    %v3479 = vmul.f32 %v3464, 1.442695
    %v3480 = vpow.pop %v3479
    %v3481 = vsel %vm361, %v3466, 0.0
    %3482 = vadd.xlane.f32.xlu0 %v3481
    %v3483 = vpop.xlane.xlu0 %3482
    %v3484 = vsel %vm361, %v3468, 0.0
    %3485 = vadd.xlane.f32.xlu0 %v3484
    %v3486 = vpop.xlane.xlu0 %3485
    %v3487 = vsel %vm361, %v3470, 0.0
    %3488 = vadd.xlane.f32.xlu0 %v3487
    %v3489 = vpop.xlane.xlu0 %3488
    %v3490 = vsel %vm361, %v3472, 0.0
    %3491 = vadd.xlane.f32.xlu0 %v3490
    %v3492 = vpop.xlane.xlu0 %3491
    %v3493 = vsel %vm361, %v3474, 0.0
    %3494 = vadd.xlane.f32.xlu0 %v3493
    %v3495 = vpop.xlane.xlu0 %3494
    %v3496 = vsel %vm361, %v3476, 0.0
    %3497 = vadd.xlane.f32.xlu0 %v3496
    %v3498 = vpop.xlane.xlu0 %3497
    %v3499 = vsel %vm361, %v3478, 0.0
    %3500 = vadd.xlane.f32.xlu0 %v3499
    %v3501 = vpop.xlane.xlu0 %3500
    %v3502 = vsel %vm361, %v3480, 0.0
    %3503 = vadd.xlane.f32.xlu0 %v3502
    %v3504 = vpop.xlane.xlu0 %3503
    %v3505 = vrcp.pop %v3483
    %v3506 = vrcp.pop %v3486
    %v3507 = vrcp.pop %v3489
    %v3508 = vrcp.pop %v3492
    %v3509 = vrcp.pop %v3495
    %v3510 = vrcp.pop %v3498
    %v3511 = vrcp.pop %v3501
    %v3512 = vrcp.pop %v3504
    %v3513 = vmul.f32 %v3466, %v3505
    %v3514 = vmul.f32 %v3468, %v3506
    %v3515 = vmul.f32 %v3470, %v3507
    %v3516 = vmul.f32 %v3472, %v3508
    %v3517 = vmul.f32 %v3474, %v3509
    %v3518 = vmul.f32 %v3476, %v3510
    %v3519 = vmul.f32 %v3478, %v3511
    %v3520 = vmul.f32 %v3480, %v3512
    %v3521 = vpack.c.bf16 %v3513, %v3513
    %v3522 = vpack.c.bf16 %v3514, %v3514
    %v3523 = vpack.c.bf16 %v3515, %v3515
    %v3524 = vpack.c.bf16 %v3516, %v3516
    %v3525 = vpack.c.bf16 %v3517, %v3517
    %v3526 = vpack.c.bf16 %v3518, %v3518
    %v3527 = vpack.c.bf16 %v3519, %v3519
    %v3528 = vpack.c.bf16 %v3520, %v3520
    %3529 = vrot.lane.b32.xlu0 %v252, 96
    %v3530 = vpop.permute.xlu0 %3529
    %v3532 = vsel %vm361, %v3521, 0
    %v3535 = vsel %vm1348, %v3530, 0
    %3537 = vmatprep.subr.bf16.mxu0 0
    %3538 = vmatpush1.bf16.msra.mxu0 %v3535
    %3539 = vmatprep.subr.bf16.mxu0 0
    %3540 = vmatpush1.bf16.msra.mxu0 0
    %3541 = vmatprep.subr.bf16.mxu0 0
    %3542 = vmatpush1.bf16.msra.mxu0 0
    %3543 = vmatprep.subr.bf16.mxu0 0
    %3544 = vmatpush1.bf16.msra.mxu0 0
    %3545 = vmatprep.subr.bf16.mxu0 0
    %3546 = vmatpush1.bf16.msra.mxu0 0
    %3547 = vmatprep.subr.bf16.mxu0 0
    %3548 = vmatpush1.bf16.msra.mxu0 0
    %3549 = vmatprep.subr.bf16.mxu0 0
    %3550 = vmatpush1.bf16.msra.mxu0 0
    %3551 = vmatprep.subr.bf16.mxu0 0
    %3552 = vmatpush1.bf16.msra.mxu0 0
    %3553 = vmatprep.subr.bf16.mxu0 0
    %3554 = vmatpush1.bf16.msra.mxu0 0
    %3555 = vmatprep.subr.bf16.mxu0 0
    %3556 = vmatpush1.bf16.msra.mxu0 0
    %3557 = vmatprep.subr.bf16.mxu0 0
    %3558 = vmatpush1.bf16.msra.mxu0 0
    %3559 = vmatprep.subr.bf16.mxu0 0
    %3560 = vmatpush1.bf16.msra.mxu0 0
    %3561 = vmatprep.subr.bf16.mxu0 0
    %3562 = vmatpush1.bf16.msra.mxu0 0
    %3563 = vmatprep.subr.bf16.mxu0 0
    %3564 = vmatpush1.bf16.msra.mxu0 0
    %3565 = vmatprep.subr.bf16.mxu0 0
    %3566 = vmatpush1.bf16.msra.mxu0 0
    %3567 = vmatprep.subr.bf16.mxu0 0
    %3568 = vmatpush1.bf16.msra.mxu0 0
    %3569 = vmatprep.mubr.bf16.mxu0 0
    %3570 = vmatmul.mubr.bf16.gmra.mrb[0].mxu0 %v3532
    %v3571 = vpop.f32.mrb[0].mxu0
    %v3572 = vadd.f32 0.0, %v3571
    %v3573 = vpop.f32.mrb[0].mxu0
    %v3574 = vpop.f32.mrb[0].mxu0
    %v3575 = vpop.f32.mrb[0].mxu0
    %3576 = vdwg.mxu0
    %3577 = vrot.lane.b32.xlu0 %v254, 96
    %v3578 = vpop.permute.xlu0 %3577
    %v3580 = vsel %vm361, %v3522, 0
    %v3583 = vsel %vm1348, %v3578, 0
    %3585 = vmatprep.subr.bf16.mxu0 0
    %3586 = vmatpush1.bf16.msra.mxu0 %v3583
    %3587 = vmatprep.subr.bf16.mxu0 0
    %3588 = vmatpush1.bf16.msra.mxu0 0
    %3589 = vmatprep.subr.bf16.mxu0 0
    %3590 = vmatpush1.bf16.msra.mxu0 0
    %3591 = vmatprep.subr.bf16.mxu0 0
    %3592 = vmatpush1.bf16.msra.mxu0 0
    %3593 = vmatprep.subr.bf16.mxu0 0
    %3594 = vmatpush1.bf16.msra.mxu0 0
    %3595 = vmatprep.subr.bf16.mxu0 0
    %3596 = vmatpush1.bf16.msra.mxu0 0
    %3597 = vmatprep.subr.bf16.mxu0 0
    %3598 = vmatpush1.bf16.msra.mxu0 0
    %3599 = vmatprep.subr.bf16.mxu0 0
    %3600 = vmatpush1.bf16.msra.mxu0 0
    %3601 = vmatprep.subr.bf16.mxu0 0
    %3602 = vmatpush1.bf16.msra.mxu0 0
    %3603 = vmatprep.subr.bf16.mxu0 0
    %3604 = vmatpush1.bf16.msra.mxu0 0
    %3605 = vmatprep.subr.bf16.mxu0 0
    %3606 = vmatpush1.bf16.msra.mxu0 0
    %3607 = vmatprep.subr.bf16.mxu0 0
    %3608 = vmatpush1.bf16.msra.mxu0 0
    %3609 = vmatprep.subr.bf16.mxu0 0
    %3610 = vmatpush1.bf16.msra.mxu0 0
    %3611 = vmatprep.subr.bf16.mxu0 0
    %3612 = vmatpush1.bf16.msra.mxu0 0
    %3613 = vmatprep.subr.bf16.mxu0 0
    %3614 = vmatpush1.bf16.msra.mxu0 0
    %3615 = vmatprep.subr.bf16.mxu0 0
    %3616 = vmatpush1.bf16.msra.mxu0 0
    %3617 = vmatprep.mubr.bf16.mxu0 0
    %3618 = vmatmul.mubr.bf16.gmra.mrb[0].mxu0 %v3580
    %v3619 = vpop.f32.mrb[0].mxu0
    %v3620 = vadd.f32 0.0, %v3619
    %v3621 = vpop.f32.mrb[0].mxu0
    %v3622 = vpop.f32.mrb[0].mxu0
    %v3623 = vpop.f32.mrb[0].mxu0
    %3624 = vdwg.mxu0
    %3625 = vrot.lane.b32.xlu0 %v256, 96
    %v3626 = vpop.permute.xlu0 %3625
    %v3628 = vsel %vm361, %v3523, 0
    %v3631 = vsel %vm1348, %v3626, 0
    %3633 = vmatprep.subr.bf16.mxu0 0
    %3634 = vmatpush1.bf16.msra.mxu0 %v3631
    %3635 = vmatprep.subr.bf16.mxu0 0
    %3636 = vmatpush1.bf16.msra.mxu0 0
    %3637 = vmatprep.subr.bf16.mxu0 0
    %3638 = vmatpush1.bf16.msra.mxu0 0
    %3639 = vmatprep.subr.bf16.mxu0 0
    %3640 = vmatpush1.bf16.msra.mxu0 0
    %3641 = vmatprep.subr.bf16.mxu0 0
    %3642 = vmatpush1.bf16.msra.mxu0 0
    %3643 = vmatprep.subr.bf16.mxu0 0
    %3644 = vmatpush1.bf16.msra.mxu0 0
    %3645 = vmatprep.subr.bf16.mxu0 0
    %3646 = vmatpush1.bf16.msra.mxu0 0
    %3647 = vmatprep.subr.bf16.mxu0 0
    %3648 = vmatpush1.bf16.msra.mxu0 0
    %3649 = vmatprep.subr.bf16.mxu0 0
    %3650 = vmatpush1.bf16.msra.mxu0 0
    %3651 = vmatprep.subr.bf16.mxu0 0
    %3652 = vmatpush1.bf16.msra.mxu0 0
    %3653 = vmatprep.subr.bf16.mxu0 0
    %3654 = vmatpush1.bf16.msra.mxu0 0
    %3655 = vmatprep.subr.bf16.mxu0 0
    %3656 = vmatpush1.bf16.msra.mxu0 0
    %3657 = vmatprep.subr.bf16.mxu0 0
    %3658 = vmatpush1.bf16.msra.mxu0 0
    %3659 = vmatprep.subr.bf16.mxu0 0
    %3660 = vmatpush1.bf16.msra.mxu0 0
    %3661 = vmatprep.subr.bf16.mxu0 0
    %3662 = vmatpush1.bf16.msra.mxu0 0
    %3663 = vmatprep.subr.bf16.mxu0 0
    %3664 = vmatpush1.bf16.msra.mxu0 0
    %3665 = vmatprep.mubr.bf16.mxu0 0
    %3666 = vmatmul.mubr.bf16.gmra.mrb[0].mxu0 %v3628
    %v3667 = vpop.f32.mrb[0].mxu0
    %v3668 = vadd.f32 0.0, %v3667
    %v3669 = vpop.f32.mrb[0].mxu0
    %v3670 = vpop.f32.mrb[0].mxu0
    %v3671 = vpop.f32.mrb[0].mxu0
    %3672 = vdwg.mxu0
    %3673 = vrot.lane.b32.xlu0 %v258, 96
    %v3674 = vpop.permute.xlu0 %3673
    %v3676 = vsel %vm361, %v3524, 0
    %v3679 = vsel %vm1348, %v3674, 0
    %3681 = vmatprep.subr.bf16.mxu0 0
    %3682 = vmatpush1.bf16.msra.mxu0 %v3679
    %3683 = vmatprep.subr.bf16.mxu0 0
    %3684 = vmatpush1.bf16.msra.mxu0 0
    %3685 = vmatprep.subr.bf16.mxu0 0
    %3686 = vmatpush1.bf16.msra.mxu0 0
    %3687 = vmatprep.subr.bf16.mxu0 0
    %3688 = vmatpush1.bf16.msra.mxu0 0
    %3689 = vmatprep.subr.bf16.mxu0 0
    %3690 = vmatpush1.bf16.msra.mxu0 0
    %3691 = vmatprep.subr.bf16.mxu0 0
    %3692 = vmatpush1.bf16.msra.mxu0 0
    %3693 = vmatprep.subr.bf16.mxu0 0
    %3694 = vmatpush1.bf16.msra.mxu0 0
    %3695 = vmatprep.subr.bf16.mxu0 0
    %3696 = vmatpush1.bf16.msra.mxu0 0
    %3697 = vmatprep.subr.bf16.mxu0 0
    %3698 = vmatpush1.bf16.msra.mxu0 0
    %3699 = vmatprep.subr.bf16.mxu0 0
    %3700 = vmatpush1.bf16.msra.mxu0 0
    %3701 = vmatprep.subr.bf16.mxu0 0
    %3702 = vmatpush1.bf16.msra.mxu0 0
    %3703 = vmatprep.subr.bf16.mxu0 0
    %3704 = vmatpush1.bf16.msra.mxu0 0
    %3705 = vmatprep.subr.bf16.mxu0 0
    %3706 = vmatpush1.bf16.msra.mxu0 0
    %3707 = vmatprep.subr.bf16.mxu0 0
    %3708 = vmatpush1.bf16.msra.mxu0 0
    %3709 = vmatprep.subr.bf16.mxu0 0
    %3710 = vmatpush1.bf16.msra.mxu0 0
    %3711 = vmatprep.subr.bf16.mxu0 0
    %3712 = vmatpush1.bf16.msra.mxu0 0
    %3713 = vmatprep.mubr.bf16.mxu0 0
    %3714 = vmatmul.mubr.bf16.gmra.mrb[0].mxu0 %v3676
    %v3715 = vpop.f32.mrb[0].mxu0
    %v3716 = vadd.f32 0.0, %v3715
    %v3717 = vpop.f32.mrb[0].mxu0
    %v3718 = vpop.f32.mrb[0].mxu0
    %v3719 = vpop.f32.mrb[0].mxu0
    %3720 = vdwg.mxu0
    %3721 = vrot.lane.b32.xlu0 %v260, 96
    %v3722 = vpop.permute.xlu0 %3721
    %v3724 = vsel %vm361, %v3525, 0
    %v3727 = vsel %vm1348, %v3722, 0
    %3729 = vmatprep.subr.bf16.mxu0 0
    %3730 = vmatpush1.bf16.msra.mxu0 %v3727
    %3731 = vmatprep.subr.bf16.mxu0 0
    %3732 = vmatpush1.bf16.msra.mxu0 0
    %3733 = vmatprep.subr.bf16.mxu0 0
    %3734 = vmatpush1.bf16.msra.mxu0 0
    %3735 = vmatprep.subr.bf16.mxu0 0
    %3736 = vmatpush1.bf16.msra.mxu0 0
    %3737 = vmatprep.subr.bf16.mxu0 0
    %3738 = vmatpush1.bf16.msra.mxu0 0
    %3739 = vmatprep.subr.bf16.mxu0 0
    %3740 = vmatpush1.bf16.msra.mxu0 0
    %3741 = vmatprep.subr.bf16.mxu0 0
    %3742 = vmatpush1.bf16.msra.mxu0 0
    %3743 = vmatprep.subr.bf16.mxu0 0
    %3744 = vmatpush1.bf16.msra.mxu0 0
    %3745 = vmatprep.subr.bf16.mxu0 0
    %3746 = vmatpush1.bf16.msra.mxu0 0
    %3747 = vmatprep.subr.bf16.mxu0 0
    %3748 = vmatpush1.bf16.msra.mxu0 0
    %3749 = vmatprep.subr.bf16.mxu0 0
    %3750 = vmatpush1.bf16.msra.mxu0 0
    %3751 = vmatprep.subr.bf16.mxu0 0
    %3752 = vmatpush1.bf16.msra.mxu0 0
    %3753 = vmatprep.subr.bf16.mxu0 0
    %3754 = vmatpush1.bf16.msra.mxu0 0
    %3755 = vmatprep.subr.bf16.mxu0 0
    %3756 = vmatpush1.bf16.msra.mxu0 0
    %3757 = vmatprep.subr.bf16.mxu0 0
    %3758 = vmatpush1.bf16.msra.mxu0 0
    %3759 = vmatprep.subr.bf16.mxu0 0
    %3760 = vmatpush1.bf16.msra.mxu0 0
    %3761 = vmatprep.mubr.bf16.mxu0 0
    %3762 = vmatmul.mubr.bf16.gmra.mrb[0].mxu0 %v3724
    %v3763 = vpop.f32.mrb[0].mxu0
    %v3764 = vadd.f32 0.0, %v3763
    %v3765 = vpop.f32.mrb[0].mxu0
    %v3766 = vpop.f32.mrb[0].mxu0
    %v3767 = vpop.f32.mrb[0].mxu0
    %3768 = vdwg.mxu0
    %3769 = vrot.lane.b32.xlu0 %v262, 96
    %v3770 = vpop.permute.xlu0 %3769
    %v3772 = vsel %vm361, %v3526, 0
    %v3775 = vsel %vm1348, %v3770, 0
    %3777 = vmatprep.subr.bf16.mxu0 0
    %3778 = vmatpush1.bf16.msra.mxu0 %v3775
    %3779 = vmatprep.subr.bf16.mxu0 0
    %3780 = vmatpush1.bf16.msra.mxu0 0
    %3781 = vmatprep.subr.bf16.mxu0 0
    %3782 = vmatpush1.bf16.msra.mxu0 0
    %3783 = vmatprep.subr.bf16.mxu0 0
    %3784 = vmatpush1.bf16.msra.mxu0 0
    %3785 = vmatprep.subr.bf16.mxu0 0
    %3786 = vmatpush1.bf16.msra.mxu0 0
    %3787 = vmatprep.subr.bf16.mxu0 0
    %3788 = vmatpush1.bf16.msra.mxu0 0
    %3789 = vmatprep.subr.bf16.mxu0 0
    %3790 = vmatpush1.bf16.msra.mxu0 0
    %3791 = vmatprep.subr.bf16.mxu0 0
    %3792 = vmatpush1.bf16.msra.mxu0 0
    %3793 = vmatprep.subr.bf16.mxu0 0
    %3794 = vmatpush1.bf16.msra.mxu0 0
    %3795 = vmatprep.subr.bf16.mxu0 0
    %3796 = vmatpush1.bf16.msra.mxu0 0
    %3797 = vmatprep.subr.bf16.mxu0 0
    %3798 = vmatpush1.bf16.msra.mxu0 0
    %3799 = vmatprep.subr.bf16.mxu0 0
    %3800 = vmatpush1.bf16.msra.mxu0 0
    %3801 = vmatprep.subr.bf16.mxu0 0
    %3802 = vmatpush1.bf16.msra.mxu0 0
    %3803 = vmatprep.subr.bf16.mxu0 0
    %3804 = vmatpush1.bf16.msra.mxu0 0
    %3805 = vmatprep.subr.bf16.mxu0 0
    %3806 = vmatpush1.bf16.msra.mxu0 0
    %3807 = vmatprep.subr.bf16.mxu0 0
    %3808 = vmatpush1.bf16.msra.mxu0 0
    %3809 = vmatprep.mubr.bf16.mxu0 0
    %3810 = vmatmul.mubr.bf16.gmra.mrb[0].mxu0 %v3772
    %v3811 = vpop.f32.mrb[0].mxu0
    %v3812 = vadd.f32 0.0, %v3811
    %v3813 = vpop.f32.mrb[0].mxu0
    %v3814 = vpop.f32.mrb[0].mxu0
    %v3815 = vpop.f32.mrb[0].mxu0
    %3816 = vdwg.mxu0
    %3817 = vrot.lane.b32.xlu0 %v264, 96
    %v3818 = vpop.permute.xlu0 %3817
    %v3820 = vsel %vm361, %v3527, 0
    %v3823 = vsel %vm1348, %v3818, 0
    %3825 = vmatprep.subr.bf16.mxu0 0
    %3826 = vmatpush1.bf16.msra.mxu0 %v3823
    %3827 = vmatprep.subr.bf16.mxu0 0
    %3828 = vmatpush1.bf16.msra.mxu0 0
    %3829 = vmatprep.subr.bf16.mxu0 0
    %3830 = vmatpush1.bf16.msra.mxu0 0
    %3831 = vmatprep.subr.bf16.mxu0 0
    %3832 = vmatpush1.bf16.msra.mxu0 0
    %3833 = vmatprep.subr.bf16.mxu0 0
    %3834 = vmatpush1.bf16.msra.mxu0 0
    %3835 = vmatprep.subr.bf16.mxu0 0
    %3836 = vmatpush1.bf16.msra.mxu0 0
    %3837 = vmatprep.subr.bf16.mxu0 0
    %3838 = vmatpush1.bf16.msra.mxu0 0
    %3839 = vmatprep.subr.bf16.mxu0 0
    %3840 = vmatpush1.bf16.msra.mxu0 0
    %3841 = vmatprep.subr.bf16.mxu0 0
    %3842 = vmatpush1.bf16.msra.mxu0 0
    %3843 = vmatprep.subr.bf16.mxu0 0
    %3844 = vmatpush1.bf16.msra.mxu0 0
    %3845 = vmatprep.subr.bf16.mxu0 0
    %3846 = vmatpush1.bf16.msra.mxu0 0
    %3847 = vmatprep.subr.bf16.mxu0 0
    %3848 = vmatpush1.bf16.msra.mxu0 0
    %3849 = vmatprep.subr.bf16.mxu0 0
    %3850 = vmatpush1.bf16.msra.mxu0 0
    %3851 = vmatprep.subr.bf16.mxu0 0
    %3852 = vmatpush1.bf16.msra.mxu0 0
    %3853 = vmatprep.subr.bf16.mxu0 0
    %3854 = vmatpush1.bf16.msra.mxu0 0
    %3855 = vmatprep.subr.bf16.mxu0 0
    %3856 = vmatpush1.bf16.msra.mxu0 0
    %3857 = vmatprep.mubr.bf16.mxu0 0
    %3858 = vmatmul.mubr.bf16.gmra.mrb[0].mxu0 %v3820
    %v3859 = vpop.f32.mrb[0].mxu0
    %v3860 = vadd.f32 0.0, %v3859
    %v3861 = vpop.f32.mrb[0].mxu0
    %v3862 = vpop.f32.mrb[0].mxu0
    %v3863 = vpop.f32.mrb[0].mxu0
    %3864 = vdwg.mxu0
    %3865 = vrot.lane.b32.xlu0 %v266, 96
    %v3866 = vpop.permute.xlu0 %3865
    %v3868 = vsel %vm361, %v3528, 0
    %v3871 = vsel %vm1348, %v3866, 0
    %3873 = vmatprep.subr.bf16.mxu0 0
    %3874 = vmatpush1.bf16.msra.mxu0 %v3871
    %3875 = vmatprep.subr.bf16.mxu0 0
    %3876 = vmatpush1.bf16.msra.mxu0 0
    %3877 = vmatprep.subr.bf16.mxu0 0
    %3878 = vmatpush1.bf16.msra.mxu0 0
    %3879 = vmatprep.subr.bf16.mxu0 0
    %3880 = vmatpush1.bf16.msra.mxu0 0
    %3881 = vmatprep.subr.bf16.mxu0 0
    %3882 = vmatpush1.bf16.msra.mxu0 0
    %3883 = vmatprep.subr.bf16.mxu0 0
    %3884 = vmatpush1.bf16.msra.mxu0 0
    %3885 = vmatprep.subr.bf16.mxu0 0
    %3886 = vmatpush1.bf16.msra.mxu0 0
    %3887 = vmatprep.subr.bf16.mxu0 0
    %3888 = vmatpush1.bf16.msra.mxu0 0
    %3889 = vmatprep.subr.bf16.mxu0 0
    %3890 = vmatpush1.bf16.msra.mxu0 0
    %3891 = vmatprep.subr.bf16.mxu0 0
    %3892 = vmatpush1.bf16.msra.mxu0 0
    %3893 = vmatprep.subr.bf16.mxu0 0
    %3894 = vmatpush1.bf16.msra.mxu0 0
    %3895 = vmatprep.subr.bf16.mxu0 0
    %3896 = vmatpush1.bf16.msra.mxu0 0
    %3897 = vmatprep.subr.bf16.mxu0 0
    %3898 = vmatpush1.bf16.msra.mxu0 0
    %3899 = vmatprep.subr.bf16.mxu0 0
    %3900 = vmatpush1.bf16.msra.mxu0 0
    %3901 = vmatprep.subr.bf16.mxu0 0
    %3902 = vmatpush1.bf16.msra.mxu0 0
    %3903 = vmatprep.subr.bf16.mxu0 0
    %3904 = vmatpush1.bf16.msra.mxu0 0
    %3905 = vmatprep.mubr.bf16.mxu0 0
    %3906 = vmatmul.mubr.bf16.gmra.mrb[0].mxu0 %v3868
    %v3907 = vpop.f32.mrb[0].mxu0
    %v3908 = vadd.f32 0.0, %v3907
    %v3909 = vpop.f32.mrb[0].mxu0
    %v3910 = vpop.f32.mrb[0].mxu0
    %v3911 = vpop.f32.mrb[0].mxu0
    %3912 = vdwg.mxu0
    %v3913 = vadd.f32 %v3025, %v3572
    %v3914 = vadd.f32 %v3026, %v3620
    %v3915 = vadd.f32 %v3027, %v3668
    %v3916 = vadd.f32 %v3028, %v3716
    %v3917 = vadd.f32 %v3029, %v3764
    %v3918 = vadd.f32 %v3030, %v3812
    %v3919 = vadd.f32 %v3031, %v3860
    %v3920 = vadd.f32 %v3032, %v3908
    %vm3921 = vcmp.ne.s32.totalorder %v69, 0
    %vm3922 = vcmp.ne.s32.totalorder %v70, 0
    %vm3923 = vcmp.ne.s32.totalorder %v71, 0
    %vm3924 = vcmp.ne.s32.totalorder %v72, 0
    %vm3925 = vcmp.ne.s32.totalorder %v73, 0
    %vm3926 = vcmp.ne.s32.totalorder %v74, 0
    %vm3927 = vcmp.ne.s32.totalorder %v75, 0
    %vm3928 = vcmp.ne.s32.totalorder %v76, 0
    %v3929 = vsel %vm3921, 1.0, 0.0
    %v3930 = vsel %vm3922, 1.0, 0.0
    %v3931 = vsel %vm3923, 1.0, 0.0
    %v3932 = vsel %vm3924, 1.0, 0.0
    %v3933 = vsel %vm3925, 1.0, 0.0
    %v3934 = vsel %vm3926, 1.0, 0.0
    %v3935 = vsel %vm3927, 1.0, 0.0
    %v3936 = vsel %vm3928, 1.0, 0.0
    %vm3937 = vcmask 7168
    %v3938 = vsel %vm3937, %v3929, 0.0
    %v3939 = vrot.slane %v3938, 4
    %v3940 = vadd.f32 %v3938, %v3939
    %v3941 = vrot.slane %v3940, 2
    %v3942 = vadd.f32 %v3940, %v3941
    %v3943 = vrot.slane %v3942, 1
    %v3944 = vadd.f32 %v3942, %v3943
    %v3945 = vsel %vm3937, %v3930, 0.0
    %v3946 = vrot.slane %v3945, 4
    %v3947 = vadd.f32 %v3945, %v3946
    %v3948 = vrot.slane %v3947, 2
    %v3949 = vadd.f32 %v3947, %v3948
    %v3950 = vrot.slane %v3949, 1
    %v3951 = vadd.f32 %v3949, %v3950
    %v3952 = vsel %vm3937, %v3931, 0.0
    %v3953 = vrot.slane %v3952, 4
    %v3954 = vadd.f32 %v3952, %v3953
    %v3955 = vrot.slane %v3954, 2
    %v3956 = vadd.f32 %v3954, %v3955
    %v3957 = vrot.slane %v3956, 1
    %v3958 = vadd.f32 %v3956, %v3957
    %v3959 = vsel %vm3937, %v3932, 0.0
    %v3960 = vrot.slane %v3959, 4
    %v3961 = vadd.f32 %v3959, %v3960
    %v3962 = vrot.slane %v3961, 2
    %v3963 = vadd.f32 %v3961, %v3962
    %v3964 = vrot.slane %v3963, 1
    %v3965 = vadd.f32 %v3963, %v3964
    %v3966 = vsel %vm3937, %v3933, 0.0
    %v3967 = vrot.slane %v3966, 4
    %v3968 = vadd.f32 %v3966, %v3967
    %v3969 = vrot.slane %v3968, 2
    %v3970 = vadd.f32 %v3968, %v3969
    %v3971 = vrot.slane %v3970, 1
    %v3972 = vadd.f32 %v3970, %v3971
    %v3973 = vsel %vm3937, %v3934, 0.0
    %v3974 = vrot.slane %v3973, 4
    %v3975 = vadd.f32 %v3973, %v3974
    %v3976 = vrot.slane %v3975, 2
    %v3977 = vadd.f32 %v3975, %v3976
    %v3978 = vrot.slane %v3977, 1
    %v3979 = vadd.f32 %v3977, %v3978
    %v3980 = vsel %vm3937, %v3935, 0.0
    %v3981 = vrot.slane %v3980, 4
    %v3982 = vadd.f32 %v3980, %v3981
    %v3983 = vrot.slane %v3982, 2
    %v3984 = vadd.f32 %v3982, %v3983
    %v3985 = vrot.slane %v3984, 1
    %v3986 = vadd.f32 %v3984, %v3985
    %v3987 = vsel %vm3937, %v3936, 0.0
    %v3988 = vrot.slane %v3987, 4
    %v3989 = vadd.f32 %v3987, %v3988
    %v3990 = vrot.slane %v3989, 2
    %v3991 = vadd.f32 %v3989, %v3990
    %v3992 = vrot.slane %v3991, 1
    %v3993 = vadd.f32 %v3991, %v3992
    %v3994 = vmax.f32 %v3944, 1.0
    %v3995 = vmax.f32 %v3951, 1.0
    %v3996 = vmax.f32 %v3958, 1.0
    %v3997 = vmax.f32 %v3965, 1.0
    %v3998 = vmax.f32 %v3972, 1.0
    %v3999 = vmax.f32 %v3979, 1.0
    %v4000 = vmax.f32 %v3986, 1.0
    %v4001 = vmax.f32 %v3993, 1.0
    %4003 = vset.pattern.permute.xlu0 0
    %4004 = vperm.xlu0 %4003, %v3929
    %v4005 = vpop.permute.xlu0 %4004
    %4008 = vset.pattern.permute.xlu0 0
    %4009 = vperm.xlu0 %4008, %v3930
    %v4010 = vpop.permute.xlu0 %4009
    %4013 = vset.pattern.permute.xlu0 0
    %4014 = vperm.xlu0 %4013, %v3931
    %v4015 = vpop.permute.xlu0 %4014
    %4018 = vset.pattern.permute.xlu0 0
    %4019 = vperm.xlu0 %4018, %v3932
    %v4020 = vpop.permute.xlu0 %4019
    %4023 = vset.pattern.permute.xlu0 0
    %4024 = vperm.xlu0 %4023, %v3933
    %v4025 = vpop.permute.xlu0 %4024
    %4028 = vset.pattern.permute.xlu0 0
    %4029 = vperm.xlu0 %4028, %v3934
    %v4030 = vpop.permute.xlu0 %4029
    %4033 = vset.pattern.permute.xlu0 0
    %4034 = vperm.xlu0 %4033, %v3935
    %v4035 = vpop.permute.xlu0 %4034
    %4038 = vset.pattern.permute.xlu0 0
    %4039 = vperm.xlu0 %4038, %v3936
    %v4040 = vpop.permute.xlu0 %4039
    %v4042 = vmul.f32 %v3913, %v4005
    %v4043 = vmul.f32 %v3914, %v4010
    %v4044 = vmul.f32 %v3915, %v4015
    %v4045 = vmul.f32 %v3916, %v4020
    %v4046 = vmul.f32 %v3917, %v4025
    %v4047 = vmul.f32 %v3918, %v4030
    %v4048 = vmul.f32 %v3919, %v4035
    %v4049 = vmul.f32 %v3920, %v4040
    %v4050 = vsel %vm147, %v4042, 0.0
    %v4051 = vrot.slane %v4050, 4
    %v4052 = vadd.f32 %v4050, %v4051
    %v4053 = vrot.slane %v4052, 2
    %v4054 = vadd.f32 %v4052, %v4053
    %v4055 = vrot.slane %v4054, 1
    %v4056 = vadd.f32 %v4054, %v4055
    %v4057 = vsel %vm147, %v4043, 0.0
    %v4058 = vrot.slane %v4057, 4
    %v4059 = vadd.f32 %v4057, %v4058
    %v4060 = vrot.slane %v4059, 2
    %v4061 = vadd.f32 %v4059, %v4060
    %v4062 = vrot.slane %v4061, 1
    %v4063 = vadd.f32 %v4061, %v4062
    %v4064 = vsel %vm147, %v4044, 0.0
    %v4065 = vrot.slane %v4064, 4
    %v4066 = vadd.f32 %v4064, %v4065
    %v4067 = vrot.slane %v4066, 2
    %v4068 = vadd.f32 %v4066, %v4067
    %v4069 = vrot.slane %v4068, 1
    %v4070 = vadd.f32 %v4068, %v4069
    %v4071 = vsel %vm147, %v4045, 0.0
    %v4072 = vrot.slane %v4071, 4
    %v4073 = vadd.f32 %v4071, %v4072
    %v4074 = vrot.slane %v4073, 2
    %v4075 = vadd.f32 %v4073, %v4074
    %v4076 = vrot.slane %v4075, 1
    %v4077 = vadd.f32 %v4075, %v4076
    %v4078 = vsel %vm147, %v4046, 0.0
    %v4079 = vrot.slane %v4078, 4
    %v4080 = vadd.f32 %v4078, %v4079
    %v4081 = vrot.slane %v4080, 2
    %v4082 = vadd.f32 %v4080, %v4081
    %v4083 = vrot.slane %v4082, 1
    %v4084 = vadd.f32 %v4082, %v4083
    %v4085 = vsel %vm147, %v4047, 0.0
    %v4086 = vrot.slane %v4085, 4
    %v4087 = vadd.f32 %v4085, %v4086
    %v4088 = vrot.slane %v4087, 2
    %v4089 = vadd.f32 %v4087, %v4088
    %v4090 = vrot.slane %v4089, 1
    %v4091 = vadd.f32 %v4089, %v4090
    %v4092 = vsel %vm147, %v4048, 0.0
    %v4093 = vrot.slane %v4092, 4
    %v4094 = vadd.f32 %v4092, %v4093
    %v4095 = vrot.slane %v4094, 2
    %v4096 = vadd.f32 %v4094, %v4095
    %v4097 = vrot.slane %v4096, 1
    %v4098 = vadd.f32 %v4096, %v4097
    %v4099 = vsel %vm147, %v4049, 0.0
    %v4100 = vrot.slane %v4099, 4
    %v4101 = vadd.f32 %v4099, %v4100
    %v4102 = vrot.slane %v4101, 2
    %v4103 = vadd.f32 %v4101, %v4102
    %v4104 = vrot.slane %v4103, 1
    %v4105 = vadd.f32 %v4103, %v4104
    %4107 = vset.pattern.permute.xlu0 0
    %4108 = vperm.xlu0 %4107, %v3994
    %v4109 = vpop.permute.xlu0 %4108
    %4112 = vset.pattern.permute.xlu0 0
    %4113 = vperm.xlu0 %4112, %v3995
    %v4114 = vpop.permute.xlu0 %4113
    %4117 = vset.pattern.permute.xlu0 0
    %4118 = vperm.xlu0 %4117, %v3996
    %v4119 = vpop.permute.xlu0 %4118
    %4122 = vset.pattern.permute.xlu0 0
    %4123 = vperm.xlu0 %4122, %v3997
    %v4124 = vpop.permute.xlu0 %4123
    %4127 = vset.pattern.permute.xlu0 0
    %4128 = vperm.xlu0 %4127, %v3998
    %v4129 = vpop.permute.xlu0 %4128
    %4132 = vset.pattern.permute.xlu0 0
    %4133 = vperm.xlu0 %4132, %v3999
    %v4134 = vpop.permute.xlu0 %4133
    %4137 = vset.pattern.permute.xlu0 0
    %4138 = vperm.xlu0 %4137, %v4000
    %v4139 = vpop.permute.xlu0 %4138
    %4142 = vset.pattern.permute.xlu0 0
    %4143 = vperm.xlu0 %4142, %v4001
    %v4144 = vpop.permute.xlu0 %4143
    %v4146 = vrcp.pop %v4109
    %v4147 = vmul.f32 %v4056, %v4146
    %v4148 = vrcp.pop %v4114
    %v4149 = vmul.f32 %v4063, %v4148
    %v4150 = vrcp.pop %v4119
    %v4151 = vmul.f32 %v4070, %v4150
    %v4152 = vrcp.pop %v4124
    %v4153 = vmul.f32 %v4077, %v4152
    %v4154 = vrcp.pop %v4129
    %v4155 = vmul.f32 %v4084, %v4154
    %v4156 = vrcp.pop %v4134
    %v4157 = vmul.f32 %v4091, %v4156
    %v4158 = vrcp.pop %v4139
    %v4159 = vmul.f32 %v4098, %v4158
    %v4160 = vrcp.pop %v4144
    %v4161 = vmul.f32 %v4105, %v4160
    %v4162 = vld [vmem:[#allocation7] sm:$0x1]
    %v4164 = vlaneseq
    %v4165 = vshrl.u32 %v4164, 7
    %v4166 = vsub.s32 0, %v4165
    %v4167 = vrot.slane %v4162, %v4166
    %v4169 = vadd.f32 %v4147, %v4167
    %v4170 = vadd.f32 %v4149, %v4167
    %v4171 = vadd.f32 %v4151, %v4167
    %v4172 = vadd.f32 %v4153, %v4167
    %v4173 = vadd.f32 %v4155, %v4167
    %v4174 = vadd.f32 %v4157, %v4167
    %v4175 = vadd.f32 %v4159, %v4167
    %v4176 = vadd.f32 %v4161, %v4167
    %v4177 = vpack.c.bf16 %v4169, %v4169
    %v4178 = vpack.c.bf16 %v4170, %v4170
    %v4179 = vpack.c.bf16 %v4171, %v4171
    %v4180 = vpack.c.bf16 %v4172, %v4172
    %v4181 = vpack.c.bf16 %v4173, %v4173
    %v4182 = vpack.c.bf16 %v4174, %v4174
    %v4183 = vpack.c.bf16 %v4175, %v4175
    %v4184 = vpack.c.bf16 %v4176, %v4176
    %v4185 = vld [vmem:[%s5] sm:$0xf]
    %v4186 = vld [vmem:[%s5 + $0x4] sm:$0xf]
    %v4187 = vld [vmem:[%s5 + $0x8] sm:$0xf]
    %v4188 = vld [vmem:[%s5 + $0xc] sm:$0xf]
    %v4189 = vld [vmem:[%s6] sm:$0x1]
    %v4191 = vlaneseq
    %v4192 = vshrl.u32 %v4191, 7
    %v4193 = vsub.s32 0, %v4192
    %v4194 = vrot.slane %v4189, %v4193
    %v4204 = vunpack.c.l.b16 %v4177
    %v4205 = vunpack.c.l.b16 %v4178
    %v4206 = vunpack.c.l.b16 %v4179
    %v4207 = vunpack.c.l.b16 %v4180
    %v4208 = vunpack.c.l.b16 %v4181
    %v4209 = vunpack.c.l.b16 %v4182
    %v4210 = vunpack.c.l.b16 %v4183
    %v4211 = vunpack.c.l.b16 %v4184
    %v4212 = vrot.slane %v4205, 7
    %vm4213 = vcmask 1041409
    %v4214 = vsel %vm4213, %v4212, %v4204
    %v4215 = vrot.slane %v4206, 6
    %vm4216 = vcmask 1042434
    %v4217 = vsel %vm4216, %v4215, %v4214
    %v4218 = vrot.slane %v4207, 5
    %vm4219 = vcmask 1043459
    %v4220 = vsel %vm4219, %v4218, %v4217
    %v4221 = vrot.slane %v4208, 4
    %vm4222 = vcmask 1044484
    %v4223 = vsel %vm4222, %v4221, %v4220
    %v4224 = vrot.slane %v4209, 3
    %vm4225 = vcmask 1045509
    %v4226 = vsel %vm4225, %v4224, %v4223
    %v4227 = vrot.slane %v4210, 2
    %vm4228 = vcmask 1046534
    %v4229 = vsel %vm4228, %v4227, %v4226
    %v4230 = vrot.slane %v4211, 1
    %vm4231 = vcmask 1047559
    %v4232 = vsel %vm4231, %v4230, %v4229
    %v4233 = vpack.c.b16 %v4232, %v4232
    %v4238 = vunpack.c.l.b16 %v4185
    %v4239 = vunpack.c.l.b16 %v4186
    %v4240 = vunpack.c.l.b16 %v4187
    %v4241 = vunpack.c.l.b16 %v4188
    %v4242 = vpack.c.b16 %v4239, %v4238
    %v4243 = vpack.c.b16 %v4241, %v4240
    %v4247 = vsel %vm147, %v4233, 0
    %4249 = vmatprep.subr.bf16.mxu0 0
    %4250 = vmatpush1.bf16.msra.mxu0 %v4242
    %4251 = vmatprep.subr.bf16.mxu0 0
    %4252 = vmatpush1.bf16.msra.mxu0 %v4243
    %4253 = vmatprep.subr.bf16.mxu0 0
    %4254 = vmatpush1.bf16.msra.mxu0 0
    %4255 = vmatprep.subr.bf16.mxu0 0
    %4256 = vmatpush1.bf16.msra.mxu0 0
    %4257 = vmatprep.subr.bf16.mxu0 0
    %4258 = vmatpush1.bf16.msra.mxu0 0
    %4259 = vmatprep.subr.bf16.mxu0 0
    %4260 = vmatpush1.bf16.msra.mxu0 0
    %4261 = vmatprep.subr.bf16.mxu0 0
    %4262 = vmatpush1.bf16.msra.mxu0 0
    %4263 = vmatprep.subr.bf16.mxu0 0
    %4264 = vmatpush1.bf16.msra.mxu0 0
    %4265 = vmatprep.subr.bf16.mxu0 0
    %4266 = vmatpush1.bf16.msra.mxu0 0
    %4267 = vmatprep.subr.bf16.mxu0 0
    %4268 = vmatpush1.bf16.msra.mxu0 0
    %4269 = vmatprep.subr.bf16.mxu0 0
    %4270 = vmatpush1.bf16.msra.mxu0 0
    %4271 = vmatprep.subr.bf16.mxu0 0
    %4272 = vmatpush1.bf16.msra.mxu0 0
    %4273 = vmatprep.subr.bf16.mxu0 0
    %4274 = vmatpush1.bf16.msra.mxu0 0
    %4275 = vmatprep.subr.bf16.mxu0 0
    %4276 = vmatpush1.bf16.msra.mxu0 0
    %4277 = vmatprep.subr.bf16.mxu0 0
    %4278 = vmatpush1.bf16.msra.mxu0 0
    %4279 = vmatprep.subr.bf16.mxu0 0
    %4280 = vmatpush1.bf16.msra.mxu0 0
    %4281 = vmatprep.mubr.bf16.mxu0 0
    %4282 = vmatmul.mubr.bf16.gmra.mrb[0].mxu0 %v4247
    %v4283 = vpop.f32.mrb[0].mxu0
    %v4284 = vadd.f32 %v4194, %v4283
    %v4285 = vpop.f32.mrb[0].mxu0
    %v4286 = vpop.f32.mrb[0].mxu0
    %v4287 = vpop.f32.mrb[0].mxu0
    %4288 = vdwg.mxu0
    %v4289 = vmax.f32 %v4284, 0.0
    %v4290 = vpack.c.bf16 %v4289, %v4289
    %v4291 = vld [vmem:[%s7] sm:$0xf]
    %v4292 = vld [vmem:[%s7 + $0x4] sm:$0xf]
    %v4293 = vld [vmem:[%s7 + $0x8] sm:$0xf]
    %v4294 = vld [vmem:[%s7 + $0xc] sm:$0xf]
    %v4295 = vld [vmem:[%s7 + $0x10] sm:$0xf]
    %v4296 = vld [vmem:[%s7 + $0x14] sm:$0xf]
    %v4297 = vld [vmem:[%s7 + $0x18] sm:$0xf]
    %v4298 = vld [vmem:[%s7 + $0x1c] sm:$0xf]
    %v4299 = vld [vmem:[%s8] sm:$0x1]
    %v4301 = vlaneseq
    %v4302 = vshrl.u32 %v4301, 7
    %v4303 = vsub.s32 0, %v4302
    %v4304 = vrot.slane %v4299, %v4303
    %v4314 = vunpack.c.l.b16 %v4291
    %v4315 = vunpack.c.l.b16 %v4292
    %v4316 = vunpack.c.l.b16 %v4293
    %v4317 = vunpack.c.l.b16 %v4294
    %v4318 = vunpack.c.l.b16 %v4295
    %v4319 = vunpack.c.l.b16 %v4296
    %v4320 = vunpack.c.l.b16 %v4297
    %v4321 = vunpack.c.l.b16 %v4298
    %v4322 = vpack.c.b16 %v4315, %v4314
    %v4323 = vpack.c.b16 %v4317, %v4316
    %v4324 = vpack.c.b16 %v4319, %v4318
    %v4325 = vpack.c.b16 %v4321, %v4320
    %vm4330 = vcmask 523264
    %v4332 = vsel %vm4330, %v4290, 0
    %4334 = vmatprep.subr.bf16.mxu0 0
    %4335 = vmatpush1.bf16.msra.mxu0 %v4322
    %4336 = vmatprep.subr.bf16.mxu0 0
    %4337 = vmatpush1.bf16.msra.mxu0 %v4323
    %4338 = vmatprep.subr.bf16.mxu0 0
    %4339 = vmatpush1.bf16.msra.mxu0 %v4324
    %4340 = vmatprep.subr.bf16.mxu0 0
    %4341 = vmatpush1.bf16.msra.mxu0 %v4325
    %4342 = vmatprep.subr.bf16.mxu0 0
    %4343 = vmatpush1.bf16.msra.mxu0 0
    %4344 = vmatprep.subr.bf16.mxu0 0
    %4345 = vmatpush1.bf16.msra.mxu0 0
    %4346 = vmatprep.subr.bf16.mxu0 0
    %4347 = vmatpush1.bf16.msra.mxu0 0
    %4348 = vmatprep.subr.bf16.mxu0 0
    %4349 = vmatpush1.bf16.msra.mxu0 0
    %4350 = vmatprep.subr.bf16.mxu0 0
    %4351 = vmatpush1.bf16.msra.mxu0 0
    %4352 = vmatprep.subr.bf16.mxu0 0
    %4353 = vmatpush1.bf16.msra.mxu0 0
    %4354 = vmatprep.subr.bf16.mxu0 0
    %4355 = vmatpush1.bf16.msra.mxu0 0
    %4356 = vmatprep.subr.bf16.mxu0 0
    %4357 = vmatpush1.bf16.msra.mxu0 0
    %4358 = vmatprep.subr.bf16.mxu0 0
    %4359 = vmatpush1.bf16.msra.mxu0 0
    %4360 = vmatprep.subr.bf16.mxu0 0
    %4361 = vmatpush1.bf16.msra.mxu0 0
    %4362 = vmatprep.subr.bf16.mxu0 0
    %4363 = vmatpush1.bf16.msra.mxu0 0
    %4364 = vmatprep.subr.bf16.mxu0 0
    %4365 = vmatpush1.bf16.msra.mxu0 0
    %4366 = vmatprep.mubr.bf16.mxu0 0
    %4367 = vmatmul.mubr.bf16.gmra.mrb[0].mxu0 %v4332
    %v4368 = vpop.f32.mrb[0].mxu0
    %v4369 = vadd.f32 %v4304, %v4368
    %v4370 = vpop.f32.mrb[0].mxu0
    %v4371 = vpop.f32.mrb[0].mxu0
    %v4372 = vpop.f32.mrb[0].mxu0
    %4373 = vdwg.mxu0
    %4374 = vst [vmem:[#allocation8] sm:$0xff] %v4369
    // Predicated region
    $region50: #{tpu_custom_call.1} parent=1 // pred_check
      _
    $region51: #{tpu_custom_call.1} parent=1 // pred_check_branch
      %4376 = sbr.rel (0) target = $region53
    $region52: #{tpu_custom_call.1} parent=1 // pred_region
      %s4378 = ssub.s32 128, 128
      %4379 = vsyncadd [#allocation4], %s4378
      %s4381 = sshll.u32 [#allocation8], 4
      %s4382 = int_to_ptr.vmem [resolvable:$true] %s4381
      %4384 = dma.vmem_to_hbm [thread:$0]  %s4382, 128, %s9, [#allocation4]
    $region53: #{tpu_custom_call.1} parent=1 // pred_fallthru
      _
    // Predicated region
    $region54: #{tpu_custom_call.1} parent=1 // pred_check
      _
    $region55: #{tpu_custom_call.1} parent=1 // pred_check_branch
      %4386 = sbr.rel (0) target = $region57
    $region56: #{tpu_custom_call.1} parent=1 // pred_region
      %4387 = dma.done [#allocation4], 128
    $region57: #{tpu_custom_call.1} parent=1 // pred_fallthru
      _
    %4388 = vsyncpa [#allocation3], 1
    %4389 = vsyncpa [#allocation6], 1
    %4390 = vsyncpa [#allocation4], 1

</llo_original>
